<compile_context>
chip_gen: v6e
topology: v6e:2x2x1
jax: 0.10.0
libtpu: 0.0.40
codegen_flags: <defaults>
</compile_context>

<pallas_src>
import jax
import jax.numpy as jnp
import numpy as np
from jax.experimental import pallas as pl
from jax.experimental.pallas import tpu as pltpu

# ----------------------------- configuration --------------------------------
BATCH = 256      # bsde_nb_states for the demo; multiple of 128 -> lane-dense
DIM = 4          # deriv_map.shape[1]
NEURONS = 32     # 'neurons'
LAYERS = 3       # 'layers' (number of hidden neurons->neurons linears)
OUT_DIM = 1      # 'y' head outputs a scalar per sample
BN_EPS = 1e-5

# ------------------------- packed parameter layout ---------------------------
# ONE dense f32 buffer of shape (NEURONS, 128) = 16 KiB.  Matrices keep the
# PyTorch (out_features, in_features) layout with sublane = out_feature and
# lane = in_feature; per-feature vectors are single lane columns.
P_LANES = 128
LANE_WH = 0                               # lanes [0, 96): Wh[l] at [32l, 32l+32)
LANE_W0 = LAYERS * NEURONS                # lanes [96, 100): W0 (NEURONS, DIM)
LANE_B0 = LANE_W0 + DIM                   # lane 100: b0
LANE_BH = LANE_B0 + 1                     # lanes [101, 104): bh[0..L-1]
LANE_GH = LANE_BH + LAYERS                # lanes [104, 108): gh[0..L]
LANE_BEH = LANE_GH + LAYERS + 1           # lanes [108, 112): beh[0..L]
LANE_WOUT = LANE_BEH + LAYERS + 1         # lane 112: w_out column (NEURONS,)
LANE_BOUT = LANE_WOUT + 1                 # lane 113, row 0: b_out
LANE_G0 = LANE_BOUT + 1                   # lane 114, rows [0, DIM): g0
LANE_BE0 = LANE_G0 + 1                    # lane 115, rows [0, DIM): be0
P_ROWS = NEURONS                          # 32 rows (multiple of 8)
assert LANE_BE0 < P_LANES

_HP = jax.lax.Precision.HIGHEST           # Mosaic supports DEFAULT/HIGHEST only


# ------------------------------ Pallas kernel --------------------------------
def bsde_forward_kernel(x_ref, p_ref, o_ref):
    """x_ref: (DIM, B), p_ref: (P_ROWS, 128), o_ref: (1, B).  Batch on lanes."""
    B = x_ref.shape[-1]
    inv_b = 1.0 / B

    def bn(v, gamma, beta):
        """Training-mode BatchNorm1d over the batch (lane) axis.

        Exact f32 cross-lane (XLU) sums + two-pass biased variance; this runs
        on the otherwise idle XLU slot instead of the MXU and avoids the
        E[x^2]-mu^2 cancellation issue.
        """
        mu = jnp.sum(v, axis=-1, keepdims=True) * inv_b
        d = v - mu
        var = jnp.sum(d * d, axis=-1, keepdims=True) * inv_b
        return gamma * d * jax.lax.rsqrt(var + BN_EPS) + beta

    # BN_0 on the raw input.
    x = bn(x_ref[...],
           p_ref[:DIM, LANE_G0:LANE_G0 + 1],
           p_ref[:DIM, LANE_BE0:LANE_BE0 + 1])

    # Block 0: dim -> neurons, no residual.
    w0 = p_ref[:, LANE_W0:LANE_W0 + DIM]                     # (NEURONS, DIM)
    h = jnp.tanh(
        jnp.dot(w0, x, precision=_HP, preferred_element_type=jnp.float32)
        + p_ref[:, LANE_B0:LANE_B0 + 1])
    h = bn(h, p_ref[:, LANE_GH:LANE_GH + 1], p_ref[:, LANE_BEH:LANE_BEH + 1])

    # Blocks 1..LAYERS: neurons -> neurons with residual (statically unrolled).
    for l in range(LAYERS):
        wl = p_ref[:, LANE_WH + l * NEURONS:LANE_WH + (l + 1) * NEURONS]
        t = jnp.tanh(
            jnp.dot(wl, h, precision=_HP, preferred_element_type=jnp.float32)
            + p_ref[:, LANE_BH + l:LANE_BH + l + 1])
        t = bn(t,
               p_ref[:, LANE_GH + 1 + l:LANE_GH + 2 + l],
               p_ref[:, LANE_BEH + 1 + l:LANE_BEH + 2 + l])
        h = t + h

    # Head: neurons -> 1 as VPU multiply + cross-sublane sum (no padded MXU
    # matmul); store stays a lane-dense (1, B) row.
    wout = p_ref[:, LANE_WOUT:LANE_WOUT + 1]                 # (NEURONS, 1)
    bout = p_ref[0:1, LANE_BOUT:LANE_BOUT + 1]               # (1, 1)
    o_ref[...] = jnp.sum(wout * h, axis=0, keepdims=True) + bout


def _pallas_forward(x_t, packed):
    B = x_t.shape[-1]
    vmem = pl.BlockSpec(memory_space=pltpu.MemorySpace.VMEM)
    flops = (2 * NEURONS * DIM * B                # block 0 matmul
             + LAYERS * 2 * NEURONS * NEURONS * B  # hidden matmuls
             + 2 * NEURONS * B                     # head
             + (LAYERS + 2) * 8 * NEURONS * B)     # BN / residual elementwise
    return pl.pallas_call(
        bsde_forward_kernel,
        out_shape=jax.ShapeDtypeStruct((1, B), jnp.float32),
        in_specs=[vmem, vmem],
        out_specs=vmem,
        cost_estimate=pl.CostEstimate(
            flops=int(flops),
            transcendentals=int((LAYERS + 1) * NEURONS * B),
            bytes_accessed=int(x_t.size * 4 + packed.size * 4 + B * 4)),
    )(x_t, packed)


@jax.jit
def bsde_forward(x, packed):
    """x: (B, DIM) as in the PyTorch module; returns (B, 1)."""
    out_t = _pallas_forward(x.T, packed)          # kernel works in (F, B)
    return out_t.T


# ----------------------------- host-side packing ------------------------------
def pack_params(g0, be0, w0, b0, wh, bh, gh, beh, wout, bout):
    buf = np.zeros((P_ROWS, P_LANES), np.float32)
    for l in range(LAYERS):
        buf[:, LANE_WH + l * NEURONS:LANE_WH + (l + 1) * NEURONS] = np.asarray(wh[l])
    buf[:, LANE_W0:LANE_W0 + DIM] = np.asarray(w0)
    buf[:, LANE_B0] = np.asarray(b0)
    buf[:, LANE_BH:LANE_BH + LAYERS] = np.asarray(bh).T
    buf[:, LANE_GH:LANE_GH + LAYERS + 1] = np.asarray(gh).T
    buf[:, LANE_BEH:LANE_BEH + LAYERS + 1] = np.asarray(beh).T
    buf[:, LANE_WOUT] = np.asarray(wout)[0]
    buf[0, LANE_BOUT] = float(np.asarray(bout)[0])
    buf[:DIM, LANE_G0] = np.asarray(g0)
    buf[:DIM, LANE_BE0] = np.asarray(be0)
    return jnp.asarray(buf)


# ----------------------------- reference (JAX) --------------------------------
def bsde_forward_ref(x, params):
    (g0, be0, w0, b0, wh, bh, gh, beh, wout, bout) = params

    def bn(v, gamma, beta):
        mu = jnp.mean(v, axis=0, keepdims=True)
        var = jnp.mean((v - mu) ** 2, axis=0, keepdims=True)
        return gamma[None, :] * (v - mu) * jax.lax.rsqrt(var + BN_EPS) + beta[None, :]

    def lin(v, w, b):
        return jnp.dot(v, w.T, precision=_HP) + b[None, :]

    h = bn(x, g0, be0)
    t = jnp.tanh(lin(h, w0, b0))
    h = bn(t, gh[0], beh[0])
    for l in range(LAYERS):
        t = jnp.tanh(lin(h, wh[l], bh[l]))
        t = bn(t, gh[l + 1], beh[l + 1])
        h = t + h
    return lin(h, wout, bout)


# ---------------------------- deterministic init ------------------------------
def init_params(key):
    ks = jax.random.split(key, 3)

    def linear_init(k, fan_in, fan_out):
        bound = 1.0 / np.sqrt(fan_in)
        kw, kb = jax.random.split(k)
        w = jax.random.uniform(kw, (fan_out, fan_in), jnp.float32, -bound, bound)
        b = jax.random.uniform(kb, (fan_out,), jnp.float32, -bound, bound)
        return w, b

    w0, b0 = linear_init(ks[0], DIM, NEURONS)
    kh = jax.random.split(ks[1], LAYERS)
    whs, bhs = [], []
    for l in range(LAYERS):
        w, b = linear_init(kh[l], NEURONS, NEURONS)
        whs.append(w)
        bhs.append(b)
    wh = jnp.stack(whs)                       # (LAYERS, NEURONS, NEURONS)
    bh = jnp.stack(bhs)                       # (LAYERS, NEURONS)
    wout, bout = linear_init(ks[2], NEURONS, OUT_DIM)   # (1, NEURONS), (1,)

    # BatchNorm affine params (PyTorch default init: weight=1, bias=0).
    g0 = jnp.ones((DIM,), jnp.float32)
    be0 = jnp.zeros((DIM,), jnp.float32)
    gh = jnp.ones((LAYERS + 1, NEURONS), jnp.float32)
    beh = jnp.zeros((LAYERS + 1, NEURONS), jnp.float32)
    # bn_net[-1] (BatchNorm1d(1)) exists in the module but is never used in
    # forward (bn_net[1:-1] slicing), so it is intentionally omitted here.
    return (g0, be0, w0, b0, wh, bh, gh, beh, wout, bout)


# ----------------------------------- main -------------------------------------
if __name__ == "__main__":
    key = jax.random.PRNGKey(0)
    kx, kp = jax.random.split(key)

    # x corresponds to x[:, :, 0] in train_and_eval: shape (nb_states, dim).
    x = jax.random.uniform(kx, (BATCH, DIM), jnp.float32, -10.0, 10.0)
    params = init_params(kp)
    packed = pack_params(*params)

    out = jax.block_until_ready(bsde_forward(x, packed))

    ref = bsde_forward_ref(x, params)
    np.testing.assert_allclose(np.asarray(out), np.asarray(ref), rtol=1e-4, atol=1e-4)

    print("KERNEL_OK")
</pallas_src>

<mosaic_0001>
module attributes {stable_mosaic.version = 11 : i64} {
  func.func @bsde_forward_kernel(%arg0: memref<4x256xf32, #tpu.memory_space<vmem>>, %arg1: memref<32x128xf32, #tpu.memory_space<vmem>>, %arg2: memref<1x256xf32, #tpu.memory_space<vmem>>) attributes {dimension_semantics = [], scalar_prefetch = 0 : i64, scratch_operands = 0 : i64, tpu.core_type = #tpu.core_type<tc>} {
    %c0 = arith.constant 0 : index
    %c0_0 = arith.constant 0 : index
    %0 = vector.load %arg0[%c0, %c0_0] : memref<4x256xf32, #tpu.memory_space<vmem>>, vector<4x256xf32>
    %c0_1 = arith.constant 0 : index
    %c114 = arith.constant 114 : index
    %1 = vector.load %arg1[%c0_1, %c114] : memref<32x128xf32, #tpu.memory_space<vmem>>, vector<4x1xf32>
    %c0_2 = arith.constant 0 : index
    %c115 = arith.constant 115 : index
    %2 = vector.load %arg1[%c0_2, %c115] : memref<32x128xf32, #tpu.memory_space<vmem>>, vector<4x1xf32>
    %cst = arith.constant dense<0.000000e+00> : vector<4xf32>
    %3 = vector.multi_reduction <add>, %0, %cst [1] : vector<4x256xf32> to vector<4xf32>
    %4 = vector.shape_cast %3 : vector<4xf32> to vector<4x1xf32>
    %cst_3 = arith.constant 3.906250e-03 : f32
    %5 = vector.broadcast %cst_3 : f32 to vector<4x1xf32>
    %6 = arith.mulf %4, %5 : vector<4x1xf32>
    %7 = vector.broadcast %6 : vector<4x1xf32> to vector<4x256xf32>
    %8 = arith.subf %0, %7 : vector<4x256xf32>
    %9 = arith.mulf %8, %8 : vector<4x256xf32>
    %cst_4 = arith.constant dense<0.000000e+00> : vector<4xf32>
    %10 = vector.multi_reduction <add>, %9, %cst_4 [1] : vector<4x256xf32> to vector<4xf32>
    %11 = vector.shape_cast %10 : vector<4xf32> to vector<4x1xf32>
    %cst_5 = arith.constant 3.906250e-03 : f32
    %12 = vector.broadcast %cst_5 : f32 to vector<4x1xf32>
    %13 = arith.mulf %11, %12 : vector<4x1xf32>
    %14 = vector.broadcast %1 : vector<4x1xf32> to vector<4x256xf32>
    %15 = arith.mulf %14, %8 : vector<4x256xf32>
    %cst_6 = arith.constant 9.99999974E-6 : f32
    %16 = vector.broadcast %cst_6 : f32 to vector<4x1xf32>
    %17 = arith.addf %13, %16 : vector<4x1xf32>
    %18 = math.rsqrt %17 : vector<4x1xf32>
    %19 = vector.broadcast %18 : vector<4x1xf32> to vector<4x256xf32>
    %20 = arith.mulf %15, %19 : vector<4x256xf32>
    %21 = vector.broadcast %2 : vector<4x1xf32> to vector<4x256xf32>
    %22 = arith.addf %20, %21 : vector<4x256xf32>
    %c0_7 = arith.constant 0 : index
    %c96 = arith.constant 96 : index
    %23 = vector.load %arg1[%c0_7, %c96] : memref<32x128xf32, #tpu.memory_space<vmem>>, vector<32x4xf32>
    %cst_8 = arith.constant dense<0.000000e+00> : vector<32x256xf32>
    %24 = tpu.matmul %23, %22, %cst_8 {dimension_numbers = #tpu.dot_dimension_numbers<[1], [0], [0], [1], [0, 0, 1, 1], [], []>, precision = #tpu.contract_precision<fp32>} : vector<32x4xf32>, vector<4x256xf32>, vector<32x256xf32> -> vector<32x256xf32>
    %c0_9 = arith.constant 0 : index
    %c100 = arith.constant 100 : index
    %25 = vector.load %arg1[%c0_9, %c100] : memref<32x128xf32, #tpu.memory_space<vmem>>, vector<32x1xf32>
    %26 = vector.broadcast %25 : vector<32x1xf32> to vector<32x256xf32>
    %27 = arith.addf %24, %26 : vector<32x256xf32>
    %28 = math.tanh %27 : vector<32x256xf32>
    %c0_10 = arith.constant 0 : index
    %c104 = arith.constant 104 : index
    %29 = vector.load %arg1[%c0_10, %c104] : memref<32x128xf32, #tpu.memory_space<vmem>>, vector<32x1xf32>
    %c0_11 = arith.constant 0 : index
    %c108 = arith.constant 108 : index
    %30 = vector.load %arg1[%c0_11, %c108] : memref<32x128xf32, #tpu.memory_space<vmem>>, vector<32x1xf32>
    %cst_12 = arith.constant dense<0.000000e+00> : vector<32xf32>
    %31 = vector.multi_reduction <add>, %28, %cst_12 [1] : vector<32x256xf32> to vector<32xf32>
    %32 = vector.shape_cast %31 : vector<32xf32> to vector<32x1xf32>
    %cst_13 = arith.constant 3.906250e-03 : f32
    %33 = vector.broadcast %cst_13 : f32 to vector<32x1xf32>
    %34 = arith.mulf %32, %33 : vector<32x1xf32>
    %35 = vector.broadcast %34 : vector<32x1xf32> to vector<32x256xf32>
    %36 = arith.subf %28, %35 : vector<32x256xf32>
    %37 = arith.mulf %36, %36 : vector<32x256xf32>
    %cst_14 = arith.constant dense<0.000000e+00> : vector<32xf32>
    %38 = vector.multi_reduction <add>, %37, %cst_14 [1] : vector<32x256xf32> to vector<32xf32>
    %39 = vector.shape_cast %38 : vector<32xf32> to vector<32x1xf32>
    %cst_15 = arith.constant 3.906250e-03 : f32
    %40 = vector.broadcast %cst_15 : f32 to vector<32x1xf32>
    %41 = arith.mulf %39, %40 : vector<32x1xf32>
    %42 = vector.broadcast %29 : vector<32x1xf32> to vector<32x256xf32>
    %43 = arith.mulf %42, %36 : vector<32x256xf32>
    %cst_16 = arith.constant 9.99999974E-6 : f32
    %44 = vector.broadcast %cst_16 : f32 to vector<32x1xf32>
    %45 = arith.addf %41, %44 : vector<32x1xf32>
    %46 = math.rsqrt %45 : vector<32x1xf32>
    %47 = vector.broadcast %46 : vector<32x1xf32> to vector<32x256xf32>
    %48 = arith.mulf %43, %47 : vector<32x256xf32>
    %49 = vector.broadcast %30 : vector<32x1xf32> to vector<32x256xf32>
    %50 = arith.addf %48, %49 : vector<32x256xf32>
    %c0_17 = arith.constant 0 : index
    %c0_18 = arith.constant 0 : index
    %51 = vector.load %arg1[%c0_17, %c0_18] : memref<32x128xf32, #tpu.memory_space<vmem>>, vector<32x32xf32>
    %cst_19 = arith.constant dense<0.000000e+00> : vector<32x256xf32>
    %52 = tpu.matmul %51, %50, %cst_19 {dimension_numbers = #tpu.dot_dimension_numbers<[1], [0], [0], [1], [0, 0, 1, 1], [], []>, precision = #tpu.contract_precision<fp32>} : vector<32x32xf32>, vector<32x256xf32>, vector<32x256xf32> -> vector<32x256xf32>
    %c0_20 = arith.constant 0 : index
    %c101 = arith.constant 101 : index
    %53 = vector.load %arg1[%c0_20, %c101] : memref<32x128xf32, #tpu.memory_space<vmem>>, vector<32x1xf32>
    %54 = vector.broadcast %53 : vector<32x1xf32> to vector<32x256xf32>
    %55 = arith.addf %52, %54 : vector<32x256xf32>
    %56 = math.tanh %55 : vector<32x256xf32>
    %c0_21 = arith.constant 0 : index
    %c105 = arith.constant 105 : index
    %57 = vector.load %arg1[%c0_21, %c105] : memref<32x128xf32, #tpu.memory_space<vmem>>, vector<32x1xf32>
    %c0_22 = arith.constant 0 : index
    %c109 = arith.constant 109 : index
    %58 = vector.load %arg1[%c0_22, %c109] : memref<32x128xf32, #tpu.memory_space<vmem>>, vector<32x1xf32>
    %cst_23 = arith.constant dense<0.000000e+00> : vector<32xf32>
    %59 = vector.multi_reduction <add>, %56, %cst_23 [1] : vector<32x256xf32> to vector<32xf32>
    %60 = vector.shape_cast %59 : vector<32xf32> to vector<32x1xf32>
    %cst_24 = arith.constant 3.906250e-03 : f32
    %61 = vector.broadcast %cst_24 : f32 to vector<32x1xf32>
    %62 = arith.mulf %60, %61 : vector<32x1xf32>
    %63 = vector.broadcast %62 : vector<32x1xf32> to vector<32x256xf32>
    %64 = arith.subf %56, %63 : vector<32x256xf32>
    %65 = arith.mulf %64, %64 : vector<32x256xf32>
    %cst_25 = arith.constant dense<0.000000e+00> : vector<32xf32>
    %66 = vector.multi_reduction <add>, %65, %cst_25 [1] : vector<32x256xf32> to vector<32xf32>
    %67 = vector.shape_cast %66 : vector<32xf32> to vector<32x1xf32>
    %cst_26 = arith.constant 3.906250e-03 : f32
    %68 = vector.broadcast %cst_26 : f32 to vector<32x1xf32>
    %69 = arith.mulf %67, %68 : vector<32x1xf32>
    %70 = vector.broadcast %57 : vector<32x1xf32> to vector<32x256xf32>
    %71 = arith.mulf %70, %64 : vector<32x256xf32>
    %cst_27 = arith.constant 9.99999974E-6 : f32
    %72 = vector.broadcast %cst_27 : f32 to vector<32x1xf32>
    %73 = arith.addf %69, %72 : vector<32x1xf32>
    %74 = math.rsqrt %73 : vector<32x1xf32>
    %75 = vector.broadcast %74 : vector<32x1xf32> to vector<32x256xf32>
    %76 = arith.mulf %71, %75 : vector<32x256xf32>
    %77 = vector.broadcast %58 : vector<32x1xf32> to vector<32x256xf32>
    %78 = arith.addf %76, %77 : vector<32x256xf32>
    %79 = arith.addf %78, %50 : vector<32x256xf32>
    %c0_28 = arith.constant 0 : index
    %c32 = arith.constant 32 : index
    %80 = vector.load %arg1[%c0_28, %c32] : memref<32x128xf32, #tpu.memory_space<vmem>>, vector<32x32xf32>
    %cst_29 = arith.constant dense<0.000000e+00> : vector<32x256xf32>
    %81 = tpu.matmul %80, %79, %cst_29 {dimension_numbers = #tpu.dot_dimension_numbers<[1], [0], [0], [1], [0, 0, 1, 1], [], []>, precision = #tpu.contract_precision<fp32>} : vector<32x32xf32>, vector<32x256xf32>, vector<32x256xf32> -> vector<32x256xf32>
    %c0_30 = arith.constant 0 : index
    %c102 = arith.constant 102 : index
    %82 = vector.load %arg1[%c0_30, %c102] : memref<32x128xf32, #tpu.memory_space<vmem>>, vector<32x1xf32>
    %83 = vector.broadcast %82 : vector<32x1xf32> to vector<32x256xf32>
    %84 = arith.addf %81, %83 : vector<32x256xf32>
    %85 = math.tanh %84 : vector<32x256xf32>
    %c0_31 = arith.constant 0 : index
    %c106 = arith.constant 106 : index
    %86 = vector.load %arg1[%c0_31, %c106] : memref<32x128xf32, #tpu.memory_space<vmem>>, vector<32x1xf32>
    %c0_32 = arith.constant 0 : index
    %c110 = arith.constant 110 : index
    %87 = vector.load %arg1[%c0_32, %c110] : memref<32x128xf32, #tpu.memory_space<vmem>>, vector<32x1xf32>
    %cst_33 = arith.constant dense<0.000000e+00> : vector<32xf32>
    %88 = vector.multi_reduction <add>, %85, %cst_33 [1] : vector<32x256xf32> to vector<32xf32>
    %89 = vector.shape_cast %88 : vector<32xf32> to vector<32x1xf32>
    %cst_34 = arith.constant 3.906250e-03 : f32
    %90 = vector.broadcast %cst_34 : f32 to vector<32x1xf32>
    %91 = arith.mulf %89, %90 : vector<32x1xf32>
    %92 = vector.broadcast %91 : vector<32x1xf32> to vector<32x256xf32>
    %93 = arith.subf %85, %92 : vector<32x256xf32>
    %94 = arith.mulf %93, %93 : vector<32x256xf32>
    %cst_35 = arith.constant dense<0.000000e+00> : vector<32xf32>
    %95 = vector.multi_reduction <add>, %94, %cst_35 [1] : vector<32x256xf32> to vector<32xf32>
    %96 = vector.shape_cast %95 : vector<32xf32> to vector<32x1xf32>
    %cst_36 = arith.constant 3.906250e-03 : f32
    %97 = vector.broadcast %cst_36 : f32 to vector<32x1xf32>
    %98 = arith.mulf %96, %97 : vector<32x1xf32>
    %99 = vector.broadcast %86 : vector<32x1xf32> to vector<32x256xf32>
    %100 = arith.mulf %99, %93 : vector<32x256xf32>
    %cst_37 = arith.constant 9.99999974E-6 : f32
    %101 = vector.broadcast %cst_37 : f32 to vector<32x1xf32>
    %102 = arith.addf %98, %101 : vector<32x1xf32>
    %103 = math.rsqrt %102 : vector<32x1xf32>
    %104 = vector.broadcast %103 : vector<32x1xf32> to vector<32x256xf32>
    %105 = arith.mulf %100, %104 : vector<32x256xf32>
    %106 = vector.broadcast %87 : vector<32x1xf32> to vector<32x256xf32>
    %107 = arith.addf %105, %106 : vector<32x256xf32>
    %108 = arith.addf %107, %79 : vector<32x256xf32>
    %c0_38 = arith.constant 0 : index
    %c64 = arith.constant 64 : index
    %109 = vector.load %arg1[%c0_38, %c64] : memref<32x128xf32, #tpu.memory_space<vmem>>, vector<32x32xf32>
    %cst_39 = arith.constant dense<0.000000e+00> : vector<32x256xf32>
    %110 = tpu.matmul %109, %108, %cst_39 {dimension_numbers = #tpu.dot_dimension_numbers<[1], [0], [0], [1], [0, 0, 1, 1], [], []>, precision = #tpu.contract_precision<fp32>} : vector<32x32xf32>, vector<32x256xf32>, vector<32x256xf32> -> vector<32x256xf32>
    %c0_40 = arith.constant 0 : index
    %c103 = arith.constant 103 : index
    %111 = vector.load %arg1[%c0_40, %c103] : memref<32x128xf32, #tpu.memory_space<vmem>>, vector<32x1xf32>
    %112 = vector.broadcast %111 : vector<32x1xf32> to vector<32x256xf32>
    %113 = arith.addf %110, %112 : vector<32x256xf32>
    %114 = math.tanh %113 : vector<32x256xf32>
    %c0_41 = arith.constant 0 : index
    %c107 = arith.constant 107 : index
    %115 = vector.load %arg1[%c0_41, %c107] : memref<32x128xf32, #tpu.memory_space<vmem>>, vector<32x1xf32>
    %c0_42 = arith.constant 0 : index
    %c111 = arith.constant 111 : index
    %116 = vector.load %arg1[%c0_42, %c111] : memref<32x128xf32, #tpu.memory_space<vmem>>, vector<32x1xf32>
    %cst_43 = arith.constant dense<0.000000e+00> : vector<32xf32>
    %117 = vector.multi_reduction <add>, %114, %cst_43 [1] : vector<32x256xf32> to vector<32xf32>
    %118 = vector.shape_cast %117 : vector<32xf32> to vector<32x1xf32>
    %cst_44 = arith.constant 3.906250e-03 : f32
    %119 = vector.broadcast %cst_44 : f32 to vector<32x1xf32>
    %120 = arith.mulf %118, %119 : vector<32x1xf32>
    %121 = vector.broadcast %120 : vector<32x1xf32> to vector<32x256xf32>
    %122 = arith.subf %114, %121 : vector<32x256xf32>
    %123 = arith.mulf %122, %122 : vector<32x256xf32>
    %cst_45 = arith.constant dense<0.000000e+00> : vector<32xf32>
    %124 = vector.multi_reduction <add>, %123, %cst_45 [1] : vector<32x256xf32> to vector<32xf32>
    %125 = vector.shape_cast %124 : vector<32xf32> to vector<32x1xf32>
    %cst_46 = arith.constant 3.906250e-03 : f32
    %126 = vector.broadcast %cst_46 : f32 to vector<32x1xf32>
    %127 = arith.mulf %125, %126 : vector<32x1xf32>
    %128 = vector.broadcast %115 : vector<32x1xf32> to vector<32x256xf32>
    %129 = arith.mulf %128, %122 : vector<32x256xf32>
    %cst_47 = arith.constant 9.99999974E-6 : f32
    %130 = vector.broadcast %cst_47 : f32 to vector<32x1xf32>
    %131 = arith.addf %127, %130 : vector<32x1xf32>
    %132 = math.rsqrt %131 : vector<32x1xf32>
    %133 = vector.broadcast %132 : vector<32x1xf32> to vector<32x256xf32>
    %134 = arith.mulf %129, %133 : vector<32x256xf32>
    %135 = vector.broadcast %116 : vector<32x1xf32> to vector<32x256xf32>
    %136 = arith.addf %134, %135 : vector<32x256xf32>
    %137 = arith.addf %136, %108 : vector<32x256xf32>
    %c0_48 = arith.constant 0 : index
    %c112 = arith.constant 112 : index
    %138 = vector.load %arg1[%c0_48, %c112] : memref<32x128xf32, #tpu.memory_space<vmem>>, vector<32x1xf32>
    %c0_49 = arith.constant 0 : index
    %c113 = arith.constant 113 : index
    %139 = vector.load %arg1[%c0_49, %c113] : memref<32x128xf32, #tpu.memory_space<vmem>>, vector<1x1xf32>
    %140 = vector.broadcast %138 : vector<32x1xf32> to vector<32x256xf32>
    %141 = arith.mulf %140, %137 : vector<32x256xf32>
    %cst_50 = arith.constant dense<0.000000e+00> : vector<256xf32>
    %142 = vector.multi_reduction <add>, %141, %cst_50 [0] : vector<32x256xf32> to vector<256xf32>
    %143 = vector.shape_cast %142 : vector<256xf32> to vector<1x256xf32>
    %144 = vector.broadcast %139 : vector<1x1xf32> to vector<1x256xf32>
    %145 = arith.addf %143, %144 : vector<1x256xf32>
    %c0_51 = arith.constant 0 : index
    %c0_52 = arith.constant 0 : index
    %146 = vector.load %arg2[%c0_51, %c0_52] : memref<1x256xf32, #tpu.memory_space<vmem>>, vector<1x256xf32>
    tpu.vector_store %arg2[%c0_51, %c0_52], %145 {strides = array<i32>} : memref<1x256xf32, #tpu.memory_space<vmem>>, vector<1x256xf32>,
    return
  }
}

</mosaic_0001>

<llo_original>
// kernel: bsde_forward.1
$region0: #{bsde_forward.1}
  #allocation0 [shape = 'u32[]', space=smem, size = 0x4, offset = 0x4, fixed_abs, tag = 'smem constant byte address 0x4 - core index']
  #allocation1 [shape = 'u32[144,128]{1,0:T(1,128)}', space=vmem, size = 0x12000, scoped, tag = 'internal scratch']
  %s0 = inlined_call_operand.hbm [shape: f32[4,256], index: 0, kind: input, shape index: {}]
  %s1 = inlined_call_operand.hbm [shape: f32[32,128], index: 1, kind: input, shape index: {}]
  %s2 = inlined_call_operand.hbm [shape: f32[1,256], index: 2, kind: output, shape index: {}]
  %s3 = sld [smem:[#allocation0]]
  $region26: #{bsde_forward.1} parent=0
    _
  %s5 = ssub.s32 1, %s3
  %s6 = scalar_select 0, %s5, %s3
  $region1: #{bsde_forward.1} parent=0
    #allocation2 [shape = 'u8[4096]{0}', space=vmem, size = 0x1000, scoped, tag = 'input window, operand 0, single buffered']
    #allocation3 [shape = 's32[1]{0}', space=sflag, size = 0x4, scoped, tag = 'scoped memory for bsde_forward.1']
    #allocation4 [shape = 's32[1]{0}', space=sflag, size = 0x4, scoped, tag = 'scoped memory for bsde_forward.1']
    #allocation5 [shape = 'u8[16384]{0}', space=vmem, size = 0x4000, scoped, tag = 'input window, operand 1, single buffered']
    #allocation6 [shape = 's32[1]{0}', space=sflag, size = 0x4, scoped, tag = 'scoped memory for bsde_forward.1']
    #allocation7 [shape = 'u8[1024]{0}', space=vmem, size = 0x400, scoped, tag = 'output window, operand 0, single buffered']
    %7 = vsyncpa [#allocation3], 0
    %8 = vsyncpa [#allocation6], 0
    %9 = vsyncpa [#allocation4], 0
    // Predicated region
    $region2: #{bsde_forward.1} parent=1 // pred_check
      _
    $region3: #{bsde_forward.1} parent=1 // pred_check_branch
      %11 = sbr.rel (0) target = $region5
    $region4: #{bsde_forward.1} parent=1 // pred_region
      %s13 = ssub.s32 128, 128
      %14 = vsyncadd [#allocation3], %s13
      %s16 = sshll.u32 [#allocation2], 4
      %s17 = int_to_ptr.vmem [resolvable:$true] %s16
      %19 = dma.hbm_to_vmem [thread:$0]  %s0, 128, %s17, [#allocation3]
    $region5: #{bsde_forward.1} parent=1 // pred_fallthru
      _
    // Predicated region
    $region6: #{bsde_forward.1} parent=1 // pred_check
      _
    $region7: #{bsde_forward.1} parent=1 // pred_check_branch
      %21 = sbr.rel (0) target = $region9
    $region8: #{bsde_forward.1} parent=1 // pred_region
      %s23 = ssub.s32 512, 512
      %24 = vsyncadd [#allocation6], %s23
      %s25 = sshll.u32 [#allocation5], 4
      %s26 = int_to_ptr.vmem [resolvable:$true] %s25
      %31 = dma.hbm_to_vmem [thread:$0]  %s1, 512, %s26, [#allocation6], 128, 128, 8
    $region9: #{bsde_forward.1} parent=1 // pred_fallthru
      _
    // Predicated region
    $region10: #{bsde_forward.1} parent=1 // pred_check
      _
    $region11: #{bsde_forward.1} parent=1 // pred_check_branch
      %33 = sbr.rel (0) target = $region13
    $region12: #{bsde_forward.1} parent=1 // pred_region
      %34 = dma.done [#allocation3], 128
    $region13: #{bsde_forward.1} parent=1 // pred_fallthru
      _
    // Predicated region
    $region14: #{bsde_forward.1} parent=1 // pred_check
      _
    $region15: #{bsde_forward.1} parent=1 // pred_check_branch
      %36 = sbr.rel (0) target = $region17
    $region16: #{bsde_forward.1} parent=1 // pred_region
      %37 = dma.done [#allocation6], 512
    $region17: #{bsde_forward.1} parent=1 // pred_fallthru
      _
    %v38 = vld [vmem:[#allocation2] sm:$0xff]
    %v39 = vld [vmem:[#allocation5] sm:$0xf]
    %v41 = vcombine.high %v38, %v38
    %vm43 = vcmask 1043456
    %v44 = vsel %vm43, %v38, 0.0
    %v45 = vsel %vm43, %v41, 0.0
    %v46 = vadd.f32 %v44, %v45
    %47 = vadd.xlane.f32.xlu0 %v46
    %v48 = vpop.xlane.xlu0 %47
    %v49 = vmul.f32 %v48, 0.00390625
    %v52 = vunpack.c.l.s4 839922192
    %v53 = vunpack.c.0.s8 %v52
    %v54 = vlaneseq
    %v55 = vshrl.u32 %v54, 7
    %v56 = vsub.s32 %v53, %v55
    %v57 = vrot.slane %v49, %v56
    %v59 = vsub.f32 %v38, %v57
    %v60 = vmul.f32 %v59, %v59
    %v62 = vcombine.high %v60, %v60
    %v64 = vsel %vm43, %v60, 0.0
    %v65 = vsel %vm43, %v62, 0.0
    %v66 = vadd.f32 %v64, %v65
    %67 = vadd.xlane.f32.xlu0 %v66
    %v68 = vpop.xlane.xlu0 %67
    %v69 = vmul.f32 %v68, 0.00390625
    %71 = vset.pattern.permute.xlu0 114
    %72 = vperm.xlu0 %71, %v39
    %v73 = vpop.permute.xlu0 %72
    %v76 = vcombine.high %v59, %v59
    %v78 = vmul.f32 %v73, %v59
    %v79 = vmul.f32 %v73, %v76
    %v80 = vadd.f32 %v69, 1e-05
    %v81 = vrsqrt.pop %v80
    %v82 = vmul.f32 %v78, %v81
    %v83 = vmul.f32 %v79, %v81
    %84 = vset.pattern.permute.xlu0 115
    %85 = vperm.xlu0 %84, %v39
    %v86 = vpop.permute.xlu0 %85
    %v88 = vadd.f32 %v82, %v86
    %v89 = vadd.f32 %v83, %v86
    %v90 = vld [vmem:[#allocation5] sm:$0xff]
    %v91 = vld [vmem:[#allocation5 + $0x8] sm:$0xff]
    %v92 = vld [vmem:[#allocation5 + $0x10] sm:$0xff]
    %v93 = vld [vmem:[#allocation5 + $0x18] sm:$0xff]
    %95 = vset.pattern.permute.xlu0 100
    %96 = vperm.xlu0 %95, %v90
    %v97 = vpop.permute.xlu0 %96
    %100 = vset.pattern.permute.xlu0 100
    %101 = vperm.xlu0 %100, %v91
    %v102 = vpop.permute.xlu0 %101
    %105 = vset.pattern.permute.xlu0 100
    %106 = vperm.xlu0 %105, %v92
    %v107 = vpop.permute.xlu0 %106
    %110 = vset.pattern.permute.xlu0 100
    %111 = vperm.xlu0 %110, %v93
    %v112 = vpop.permute.xlu0 %111
    %114 = vrot.lane.b32.xlu0 %v90, 32
    %v115 = vpop.permute.xlu0 %114
    %116 = vrot.lane.b32.xlu0 %v91, 32
    %v117 = vpop.permute.xlu0 %116
    %118 = vrot.lane.b32.xlu0 %v92, 32
    %v119 = vpop.permute.xlu0 %118
    %120 = vrot.lane.b32.xlu0 %v93, 32
    %v121 = vpop.permute.xlu0 %120
    %vm122 = vcmask 31744
    %v123 = vsel %vm122, %v115, 0
    %v125 = vsel %vm122, %v117, 0
    %v127 = vsel %vm122, %v119, 0
    %v129 = vsel %vm122, %v121, 0
    %v132 = vsel %vm43, %v88, 0
    %v135 = vsel %vm43, %v89, 0
    %137 = vmatprep.subr.mxu0 0.0
    %138 = vmatpush1.msra.mxu0 0.0
    %139 = vmatprep.subr.mxu0 0.0
    %140 = vmatpush1.msra.mxu0 0.0
    %141 = vmatprep.subr.mxu0 0.0
    %142 = vmatpush1.msra.mxu0 0.0
    %143 = vmatprep.subr.mxu0 0.0
    %144 = vmatpush1.msra.mxu0 0.0
    %145 = vmatprep.subr.mxu0 0.0
    %146 = vmatpush1.msra.mxu0 0.0
    %147 = vmatprep.subr.mxu0 0.0
    %148 = vmatpush1.msra.mxu0 0.0
    %149 = vmatprep.subr.mxu0 0.0
    %150 = vmatpush1.msra.mxu0 0.0
    %151 = vmatprep.subr.mxu0 0.0
    %152 = vmatpush1.msra.mxu0 0.0
    %153 = vmatprep.subr.mxu0 0.0
    %154 = vmatpush1.msra.mxu0 0.0
    %155 = vmatprep.subr.mxu0 0.0
    %156 = vmatpush1.msra.mxu0 0.0
    %157 = vmatprep.subr.mxu0 0.0
    %158 = vmatpush1.msra.mxu0 0.0
    %159 = vmatprep.subr.mxu0 0.0
    %160 = vmatpush1.msra.mxu0 0.0
    %161 = vmatprep.subr.mxu0 0.0
    %162 = vmatpush1.msra.mxu0 0.0
    %163 = vmatprep.subr.mxu0 0.0
    %164 = vmatpush1.msra.mxu0 0.0
    %165 = vmatprep.subr.mxu0 0.0
    %166 = vmatpush1.msra.mxu0 0.0
    %v167 = vand.u32 %v135, 4294901760
    %168 = vmatprep.subr.mxu0 %v167
    %v169 = vand.u32 %v132, 4294901760
    %170 = vmatpush1.msra.mxu0 %v169
    %171 = vmatprep.subr.mxu0 0.0
    %172 = vmatpush2.msra.mxu0 0.0
    %173 = vmatprep.subr.mxu0 0.0
    %174 = vmatpush2.msra.mxu0 0.0
    %175 = vmatprep.subr.mxu0 0.0
    %176 = vmatpush2.msra.mxu0 0.0
    %177 = vmatprep.subr.mxu0 0.0
    %178 = vmatpush2.msra.mxu0 0.0
    %179 = vmatprep.subr.mxu0 0.0
    %180 = vmatpush2.msra.mxu0 0.0
    %181 = vmatprep.subr.mxu0 0.0
    %182 = vmatpush2.msra.mxu0 0.0
    %183 = vmatprep.subr.mxu0 0.0
    %184 = vmatpush2.msra.mxu0 0.0
    %185 = vmatprep.subr.mxu0 0.0
    %186 = vmatpush2.msra.mxu0 0.0
    %187 = vmatprep.subr.mxu0 0.0
    %188 = vmatpush2.msra.mxu0 0.0
    %189 = vmatprep.subr.mxu0 0.0
    %190 = vmatpush2.msra.mxu0 0.0
    %191 = vmatprep.subr.mxu0 0.0
    %192 = vmatpush2.msra.mxu0 0.0
    %193 = vmatprep.subr.mxu0 0.0
    %194 = vmatpush2.msra.mxu0 0.0
    %195 = vmatprep.subr.mxu0 0.0
    %196 = vmatpush2.msra.mxu0 0.0
    %197 = vmatprep.subr.mxu0 0.0
    %198 = vmatpush2.msra.mxu0 0.0
    %199 = vmatprep.subr.mxu0 0.0
    %200 = vmatpush2.msra.mxu0 0.0
    %201 = vmatprep.subr.mxu0 0.0
    %202 = vmatpush2.msra.mxu0 0.0
    %203 = vmatprep.mubr.f32.mxu0 0.0
    %v204 = vand.u32 %v123, 4294901760
    %v205 = vsub.f32 %v123, %v204
    %v206 = vand.u32 %v205, 4294901760
    %v207 = vsub.f32 %v205, %v206
    %v208 = vand.u32 %v207, 4294901760
    %209 = vmatmul.mubr.f32.gmra.mxu0 %v208
    %v210 = vpop.f32.mrf.mxu0
    %v211 = vadd.f32 %v97, %v210
    %v212 = vpop.f32.mrf.mxu0
    %v213 = vadd.f32 %v97, %v212
    %214 = vmatprep.mubr.f32.mxu0 0.0
    %v215 = vand.u32 %v125, 4294901760
    %v216 = vsub.f32 %v125, %v215
    %v217 = vand.u32 %v216, 4294901760
    %v218 = vsub.f32 %v216, %v217
    %v219 = vand.u32 %v218, 4294901760
    %220 = vmatmul.mubr.f32.gmra.mxu0 %v219
    %v221 = vpop.f32.mrf.mxu0
    %v222 = vadd.f32 %v102, %v221
    %v223 = vpop.f32.mrf.mxu0
    %v224 = vadd.f32 %v102, %v223
    %225 = vmatprep.mubr.f32.mxu0 0.0
    %v226 = vand.u32 %v127, 4294901760
    %v227 = vsub.f32 %v127, %v226
    %v228 = vand.u32 %v227, 4294901760
    %v229 = vsub.f32 %v227, %v228
    %v230 = vand.u32 %v229, 4294901760
    %231 = vmatmul.mubr.f32.gmra.mxu0 %v230
    %v232 = vpop.f32.mrf.mxu0
    %v233 = vadd.f32 %v107, %v232
    %v234 = vpop.f32.mrf.mxu0
    %v235 = vadd.f32 %v107, %v234
    %236 = vmatprep.mubr.f32.mxu0 0.0
    %v237 = vand.u32 %v129, 4294901760
    %v238 = vsub.f32 %v129, %v237
    %v239 = vand.u32 %v238, 4294901760
    %v240 = vsub.f32 %v238, %v239
    %v241 = vand.u32 %v240, 4294901760
    %242 = vmatmul.mubr.f32.gmra.mxu0 %v241
    %v243 = vpop.f32.mrf.mxu0
    %v244 = vadd.f32 %v112, %v243
    %v245 = vpop.f32.mrf.mxu0
    %v246 = vadd.f32 %v112, %v245
    %247 = vdwg.mxu0
    %248 = vmatprep.subr.mxu0 0.0
    %249 = vmatpush1.msra.mxu0 0.0
    %250 = vmatprep.subr.mxu0 0.0
    %251 = vmatpush1.msra.mxu0 0.0
    %252 = vmatprep.subr.mxu0 0.0
    %253 = vmatpush1.msra.mxu0 0.0
    %254 = vmatprep.subr.mxu0 0.0
    %255 = vmatpush1.msra.mxu0 0.0
    %256 = vmatprep.subr.mxu0 0.0
    %257 = vmatpush1.msra.mxu0 0.0
    %258 = vmatprep.subr.mxu0 0.0
    %259 = vmatpush1.msra.mxu0 0.0
    %260 = vmatprep.subr.mxu0 0.0
    %261 = vmatpush1.msra.mxu0 0.0
    %262 = vmatprep.subr.mxu0 0.0
    %263 = vmatpush1.msra.mxu0 0.0
    %264 = vmatprep.subr.mxu0 0.0
    %265 = vmatpush1.msra.mxu0 0.0
    %266 = vmatprep.subr.mxu0 0.0
    %267 = vmatpush1.msra.mxu0 0.0
    %268 = vmatprep.subr.mxu0 0.0
    %269 = vmatpush1.msra.mxu0 0.0
    %270 = vmatprep.subr.mxu0 0.0
    %271 = vmatpush1.msra.mxu0 0.0
    %272 = vmatprep.subr.mxu0 0.0
    %273 = vmatpush1.msra.mxu0 0.0
    %274 = vmatprep.subr.mxu0 0.0
    %275 = vmatpush1.msra.mxu0 0.0
    %276 = vmatprep.subr.mxu0 0.0
    %277 = vmatpush1.msra.mxu0 0.0
    %v278 = vand.u32 %v135, 4294901760
    %v279 = vsub.f32 %v135, %v278
    %v280 = vand.u32 %v279, 4294901760
    %v281 = vsub.f32 %v279, %v280
    %v282 = vand.u32 %v281, 4294901760
    %283 = vmatprep.subr.mxu0 %v282
    %v284 = vand.u32 %v132, 4294901760
    %v285 = vsub.f32 %v132, %v284
    %v286 = vand.u32 %v285, 4294901760
    %v287 = vsub.f32 %v285, %v286
    %v288 = vand.u32 %v287, 4294901760
    %289 = vmatpush1.msra.mxu0 %v288
    %290 = vmatprep.subr.mxu0 0.0
    %291 = vmatpush2.msra.mxu0 0.0
    %292 = vmatprep.subr.mxu0 0.0
    %293 = vmatpush2.msra.mxu0 0.0
    %294 = vmatprep.subr.mxu0 0.0
    %295 = vmatpush2.msra.mxu0 0.0
    %296 = vmatprep.subr.mxu0 0.0
    %297 = vmatpush2.msra.mxu0 0.0
    %298 = vmatprep.subr.mxu0 0.0
    %299 = vmatpush2.msra.mxu0 0.0
    %300 = vmatprep.subr.mxu0 0.0
    %301 = vmatpush2.msra.mxu0 0.0
    %302 = vmatprep.subr.mxu0 0.0
    %303 = vmatpush2.msra.mxu0 0.0
    %304 = vmatprep.subr.mxu0 0.0
    %305 = vmatpush2.msra.mxu0 0.0
    %306 = vmatprep.subr.mxu0 0.0
    %307 = vmatpush2.msra.mxu0 0.0
    %308 = vmatprep.subr.mxu0 0.0
    %309 = vmatpush2.msra.mxu0 0.0
    %310 = vmatprep.subr.mxu0 0.0
    %311 = vmatpush2.msra.mxu0 0.0
    %312 = vmatprep.subr.mxu0 0.0
    %313 = vmatpush2.msra.mxu0 0.0
    %314 = vmatprep.subr.mxu0 0.0
    %315 = vmatpush2.msra.mxu0 0.0
    %316 = vmatprep.subr.mxu0 0.0
    %317 = vmatpush2.msra.mxu0 0.0
    %318 = vmatprep.subr.mxu0 0.0
    %319 = vmatpush2.msra.mxu0 0.0
    %320 = vmatprep.subr.mxu0 0.0
    %321 = vmatpush2.msra.mxu0 0.0
    %322 = vmatprep.mubr.f32.mxu0 0.0
    %v323 = vand.u32 %v123, 4294901760
    %324 = vmatmul.mubr.f32.gmra.mxu0 %v323
    %v325 = vpop.f32.mrf.mxu0
    %v326 = vadd.f32 %v211, %v325
    %v327 = vpop.f32.mrf.mxu0
    %v328 = vadd.f32 %v213, %v327
    %329 = vmatprep.mubr.f32.mxu0 0.0
    %v330 = vand.u32 %v125, 4294901760
    %331 = vmatmul.mubr.f32.gmra.mxu0 %v330
    %v332 = vpop.f32.mrf.mxu0
    %v333 = vadd.f32 %v222, %v332
    %v334 = vpop.f32.mrf.mxu0
    %v335 = vadd.f32 %v224, %v334
    %336 = vmatprep.mubr.f32.mxu0 0.0
    %v337 = vand.u32 %v127, 4294901760
    %338 = vmatmul.mubr.f32.gmra.mxu0 %v337
    %v339 = vpop.f32.mrf.mxu0
    %v340 = vadd.f32 %v233, %v339
    %v341 = vpop.f32.mrf.mxu0
    %v342 = vadd.f32 %v235, %v341
    %343 = vmatprep.mubr.f32.mxu0 0.0
    %v344 = vand.u32 %v129, 4294901760
    %345 = vmatmul.mubr.f32.gmra.mxu0 %v344
    %v346 = vpop.f32.mrf.mxu0
    %v347 = vadd.f32 %v244, %v346
    %v348 = vpop.f32.mrf.mxu0
    %v349 = vadd.f32 %v246, %v348
    %350 = vdwg.mxu0
    %351 = vmatprep.subr.mxu0 0.0
    %352 = vmatpush1.msra.mxu0 0.0
    %353 = vmatprep.subr.mxu0 0.0
    %354 = vmatpush1.msra.mxu0 0.0
    %355 = vmatprep.subr.mxu0 0.0
    %356 = vmatpush1.msra.mxu0 0.0
    %357 = vmatprep.subr.mxu0 0.0
    %358 = vmatpush1.msra.mxu0 0.0
    %359 = vmatprep.subr.mxu0 0.0
    %360 = vmatpush1.msra.mxu0 0.0
    %361 = vmatprep.subr.mxu0 0.0
    %362 = vmatpush1.msra.mxu0 0.0
    %363 = vmatprep.subr.mxu0 0.0
    %364 = vmatpush1.msra.mxu0 0.0
    %365 = vmatprep.subr.mxu0 0.0
    %366 = vmatpush1.msra.mxu0 0.0
    %367 = vmatprep.subr.mxu0 0.0
    %368 = vmatpush1.msra.mxu0 0.0
    %369 = vmatprep.subr.mxu0 0.0
    %370 = vmatpush1.msra.mxu0 0.0
    %371 = vmatprep.subr.mxu0 0.0
    %372 = vmatpush1.msra.mxu0 0.0
    %373 = vmatprep.subr.mxu0 0.0
    %374 = vmatpush1.msra.mxu0 0.0
    %375 = vmatprep.subr.mxu0 0.0
    %376 = vmatpush1.msra.mxu0 0.0
    %377 = vmatprep.subr.mxu0 0.0
    %378 = vmatpush1.msra.mxu0 0.0
    %379 = vmatprep.subr.mxu0 0.0
    %380 = vmatpush1.msra.mxu0 0.0
    %v381 = vand.u32 %v135, 4294901760
    %v382 = vsub.f32 %v135, %v381
    %383 = vmatprep.subr.mxu0 %v382
    %v384 = vand.u32 %v132, 4294901760
    %v385 = vsub.f32 %v132, %v384
    %386 = vmatpush1.msra.mxu0 %v385
    %387 = vmatprep.subr.mxu0 0.0
    %388 = vmatpush2.msra.mxu0 0.0
    %389 = vmatprep.subr.mxu0 0.0
    %390 = vmatpush2.msra.mxu0 0.0
    %391 = vmatprep.subr.mxu0 0.0
    %392 = vmatpush2.msra.mxu0 0.0
    %393 = vmatprep.subr.mxu0 0.0
    %394 = vmatpush2.msra.mxu0 0.0
    %395 = vmatprep.subr.mxu0 0.0
    %396 = vmatpush2.msra.mxu0 0.0
    %397 = vmatprep.subr.mxu0 0.0
    %398 = vmatpush2.msra.mxu0 0.0
    %399 = vmatprep.subr.mxu0 0.0
    %400 = vmatpush2.msra.mxu0 0.0
    %401 = vmatprep.subr.mxu0 0.0
    %402 = vmatpush2.msra.mxu0 0.0
    %403 = vmatprep.subr.mxu0 0.0
    %404 = vmatpush2.msra.mxu0 0.0
    %405 = vmatprep.subr.mxu0 0.0
    %406 = vmatpush2.msra.mxu0 0.0
    %407 = vmatprep.subr.mxu0 0.0
    %408 = vmatpush2.msra.mxu0 0.0
    %409 = vmatprep.subr.mxu0 0.0
    %410 = vmatpush2.msra.mxu0 0.0
    %411 = vmatprep.subr.mxu0 0.0
    %412 = vmatpush2.msra.mxu0 0.0
    %413 = vmatprep.subr.mxu0 0.0
    %414 = vmatpush2.msra.mxu0 0.0
    %415 = vmatprep.subr.mxu0 0.0
    %416 = vmatpush2.msra.mxu0 0.0
    %417 = vmatprep.subr.mxu0 0.0
    %418 = vmatpush2.msra.mxu0 0.0
    %419 = vmatprep.mubr.f32.mxu0 0.0
    %v420 = vand.u32 %v123, 4294901760
    %v421 = vsub.f32 %v123, %v420
    %422 = vmatmul.mubr.f32.gmra.mxu0 %v421
    %v423 = vpop.f32.mrf.mxu0
    %v424 = vadd.f32 %v326, %v423
    %v425 = vpop.f32.mrf.mxu0
    %v426 = vadd.f32 %v328, %v425
    %427 = vmatprep.mubr.f32.mxu0 0.0
    %v428 = vand.u32 %v125, 4294901760
    %v429 = vsub.f32 %v125, %v428
    %430 = vmatmul.mubr.f32.gmra.mxu0 %v429
    %v431 = vpop.f32.mrf.mxu0
    %v432 = vadd.f32 %v333, %v431
    %v433 = vpop.f32.mrf.mxu0
    %v434 = vadd.f32 %v335, %v433
    %435 = vmatprep.mubr.f32.mxu0 0.0
    %v436 = vand.u32 %v127, 4294901760
    %v437 = vsub.f32 %v127, %v436
    %438 = vmatmul.mubr.f32.gmra.mxu0 %v437
    %v439 = vpop.f32.mrf.mxu0
    %v440 = vadd.f32 %v340, %v439
    %v441 = vpop.f32.mrf.mxu0
    %v442 = vadd.f32 %v342, %v441
    %443 = vmatprep.mubr.f32.mxu0 0.0
    %v444 = vand.u32 %v129, 4294901760
    %v445 = vsub.f32 %v129, %v444
    %446 = vmatmul.mubr.f32.gmra.mxu0 %v445
    %v447 = vpop.f32.mrf.mxu0
    %v448 = vadd.f32 %v347, %v447
    %v449 = vpop.f32.mrf.mxu0
    %v450 = vadd.f32 %v349, %v449
    %451 = vdwg.mxu0
    %452 = vmatprep.subr.mxu0 0.0
    %453 = vmatpush1.msra.mxu0 0.0
    %454 = vmatprep.subr.mxu0 0.0
    %455 = vmatpush1.msra.mxu0 0.0
    %456 = vmatprep.subr.mxu0 0.0
    %457 = vmatpush1.msra.mxu0 0.0
    %458 = vmatprep.subr.mxu0 0.0
    %459 = vmatpush1.msra.mxu0 0.0
    %460 = vmatprep.subr.mxu0 0.0
    %461 = vmatpush1.msra.mxu0 0.0
    %462 = vmatprep.subr.mxu0 0.0
    %463 = vmatpush1.msra.mxu0 0.0
    %464 = vmatprep.subr.mxu0 0.0
    %465 = vmatpush1.msra.mxu0 0.0
    %466 = vmatprep.subr.mxu0 0.0
    %467 = vmatpush1.msra.mxu0 0.0
    %468 = vmatprep.subr.mxu0 0.0
    %469 = vmatpush1.msra.mxu0 0.0
    %470 = vmatprep.subr.mxu0 0.0
    %471 = vmatpush1.msra.mxu0 0.0
    %472 = vmatprep.subr.mxu0 0.0
    %473 = vmatpush1.msra.mxu0 0.0
    %474 = vmatprep.subr.mxu0 0.0
    %475 = vmatpush1.msra.mxu0 0.0
    %476 = vmatprep.subr.mxu0 0.0
    %477 = vmatpush1.msra.mxu0 0.0
    %478 = vmatprep.subr.mxu0 0.0
    %479 = vmatpush1.msra.mxu0 0.0
    %480 = vmatprep.subr.mxu0 0.0
    %481 = vmatpush1.msra.mxu0 0.0
    %v482 = vand.u32 %v135, 4294901760
    %483 = vmatprep.subr.mxu0 %v482
    %v484 = vand.u32 %v132, 4294901760
    %485 = vmatpush1.msra.mxu0 %v484
    %486 = vmatprep.subr.mxu0 0.0
    %487 = vmatpush2.msra.mxu0 0.0
    %488 = vmatprep.subr.mxu0 0.0
    %489 = vmatpush2.msra.mxu0 0.0
    %490 = vmatprep.subr.mxu0 0.0
    %491 = vmatpush2.msra.mxu0 0.0
    %492 = vmatprep.subr.mxu0 0.0
    %493 = vmatpush2.msra.mxu0 0.0
    %494 = vmatprep.subr.mxu0 0.0
    %495 = vmatpush2.msra.mxu0 0.0
    %496 = vmatprep.subr.mxu0 0.0
    %497 = vmatpush2.msra.mxu0 0.0
    %498 = vmatprep.subr.mxu0 0.0
    %499 = vmatpush2.msra.mxu0 0.0
    %500 = vmatprep.subr.mxu0 0.0
    %501 = vmatpush2.msra.mxu0 0.0
    %502 = vmatprep.subr.mxu0 0.0
    %503 = vmatpush2.msra.mxu0 0.0
    %504 = vmatprep.subr.mxu0 0.0
    %505 = vmatpush2.msra.mxu0 0.0
    %506 = vmatprep.subr.mxu0 0.0
    %507 = vmatpush2.msra.mxu0 0.0
    %508 = vmatprep.subr.mxu0 0.0
    %509 = vmatpush2.msra.mxu0 0.0
    %510 = vmatprep.subr.mxu0 0.0
    %511 = vmatpush2.msra.mxu0 0.0
    %512 = vmatprep.subr.mxu0 0.0
    %513 = vmatpush2.msra.mxu0 0.0
    %514 = vmatprep.subr.mxu0 0.0
    %515 = vmatpush2.msra.mxu0 0.0
    %516 = vmatprep.subr.mxu0 0.0
    %517 = vmatpush2.msra.mxu0 0.0
    %518 = vmatprep.mubr.f32.mxu0 0.0
    %v519 = vand.u32 %v123, 4294901760
    %v520 = vsub.f32 %v123, %v519
    %v521 = vand.u32 %v520, 4294901760
    %522 = vmatmul.mubr.f32.gmra.mxu0 %v521
    %v523 = vpop.f32.mrf.mxu0
    %v524 = vadd.f32 %v424, %v523
    %v525 = vpop.f32.mrf.mxu0
    %v526 = vadd.f32 %v426, %v525
    %527 = vmatprep.mubr.f32.mxu0 0.0
    %v528 = vand.u32 %v125, 4294901760
    %v529 = vsub.f32 %v125, %v528
    %v530 = vand.u32 %v529, 4294901760
    %531 = vmatmul.mubr.f32.gmra.mxu0 %v530
    %v532 = vpop.f32.mrf.mxu0
    %v533 = vadd.f32 %v432, %v532
    %v534 = vpop.f32.mrf.mxu0
    %v535 = vadd.f32 %v434, %v534
    %536 = vmatprep.mubr.f32.mxu0 0.0
    %v537 = vand.u32 %v127, 4294901760
    %v538 = vsub.f32 %v127, %v537
    %v539 = vand.u32 %v538, 4294901760
    %540 = vmatmul.mubr.f32.gmra.mxu0 %v539
    %v541 = vpop.f32.mrf.mxu0
    %v542 = vadd.f32 %v440, %v541
    %v543 = vpop.f32.mrf.mxu0
    %v544 = vadd.f32 %v442, %v543
    %545 = vmatprep.mubr.f32.mxu0 0.0
    %v546 = vand.u32 %v129, 4294901760
    %v547 = vsub.f32 %v129, %v546
    %v548 = vand.u32 %v547, 4294901760
    %549 = vmatmul.mubr.f32.gmra.mxu0 %v548
    %v550 = vpop.f32.mrf.mxu0
    %v551 = vadd.f32 %v448, %v550
    %v552 = vpop.f32.mrf.mxu0
    %v553 = vadd.f32 %v450, %v552
    %554 = vdwg.mxu0
    %555 = vmatprep.subr.mxu0 0.0
    %556 = vmatpush1.msra.mxu0 0.0
    %557 = vmatprep.subr.mxu0 0.0
    %558 = vmatpush1.msra.mxu0 0.0
    %559 = vmatprep.subr.mxu0 0.0
    %560 = vmatpush1.msra.mxu0 0.0
    %561 = vmatprep.subr.mxu0 0.0
    %562 = vmatpush1.msra.mxu0 0.0
    %563 = vmatprep.subr.mxu0 0.0
    %564 = vmatpush1.msra.mxu0 0.0
    %565 = vmatprep.subr.mxu0 0.0
    %566 = vmatpush1.msra.mxu0 0.0
    %567 = vmatprep.subr.mxu0 0.0
    %568 = vmatpush1.msra.mxu0 0.0
    %569 = vmatprep.subr.mxu0 0.0
    %570 = vmatpush1.msra.mxu0 0.0
    %571 = vmatprep.subr.mxu0 0.0
    %572 = vmatpush1.msra.mxu0 0.0
    %573 = vmatprep.subr.mxu0 0.0
    %574 = vmatpush1.msra.mxu0 0.0
    %575 = vmatprep.subr.mxu0 0.0
    %576 = vmatpush1.msra.mxu0 0.0
    %577 = vmatprep.subr.mxu0 0.0
    %578 = vmatpush1.msra.mxu0 0.0
    %579 = vmatprep.subr.mxu0 0.0
    %580 = vmatpush1.msra.mxu0 0.0
    %581 = vmatprep.subr.mxu0 0.0
    %582 = vmatpush1.msra.mxu0 0.0
    %583 = vmatprep.subr.mxu0 0.0
    %584 = vmatpush1.msra.mxu0 0.0
    %v585 = vand.u32 %v135, 4294901760
    %v586 = vsub.f32 %v135, %v585
    %v587 = vand.u32 %v586, 4294901760
    %588 = vmatprep.subr.mxu0 %v587
    %v589 = vand.u32 %v132, 4294901760
    %v590 = vsub.f32 %v132, %v589
    %v591 = vand.u32 %v590, 4294901760
    %592 = vmatpush1.msra.mxu0 %v591
    %593 = vmatprep.subr.mxu0 0.0
    %594 = vmatpush2.msra.mxu0 0.0
    %595 = vmatprep.subr.mxu0 0.0
    %596 = vmatpush2.msra.mxu0 0.0
    %597 = vmatprep.subr.mxu0 0.0
    %598 = vmatpush2.msra.mxu0 0.0
    %599 = vmatprep.subr.mxu0 0.0
    %600 = vmatpush2.msra.mxu0 0.0
    %601 = vmatprep.subr.mxu0 0.0
    %602 = vmatpush2.msra.mxu0 0.0
    %603 = vmatprep.subr.mxu0 0.0
    %604 = vmatpush2.msra.mxu0 0.0
    %605 = vmatprep.subr.mxu0 0.0
    %606 = vmatpush2.msra.mxu0 0.0
    %607 = vmatprep.subr.mxu0 0.0
    %608 = vmatpush2.msra.mxu0 0.0
    %609 = vmatprep.subr.mxu0 0.0
    %610 = vmatpush2.msra.mxu0 0.0
    %611 = vmatprep.subr.mxu0 0.0
    %612 = vmatpush2.msra.mxu0 0.0
    %613 = vmatprep.subr.mxu0 0.0
    %614 = vmatpush2.msra.mxu0 0.0
    %615 = vmatprep.subr.mxu0 0.0
    %616 = vmatpush2.msra.mxu0 0.0
    %617 = vmatprep.subr.mxu0 0.0
    %618 = vmatpush2.msra.mxu0 0.0
    %619 = vmatprep.subr.mxu0 0.0
    %620 = vmatpush2.msra.mxu0 0.0
    %621 = vmatprep.subr.mxu0 0.0
    %622 = vmatpush2.msra.mxu0 0.0
    %623 = vmatprep.subr.mxu0 0.0
    %624 = vmatpush2.msra.mxu0 0.0
    %625 = vmatprep.mubr.f32.mxu0 0.0
    %v626 = vand.u32 %v123, 4294901760
    %627 = vmatmul.mubr.f32.gmra.mxu0 %v626
    %v628 = vpop.f32.mrf.mxu0
    %v629 = vadd.f32 %v524, %v628
    %v630 = vpop.f32.mrf.mxu0
    %v631 = vadd.f32 %v526, %v630
    %632 = vmatprep.mubr.f32.mxu0 0.0
    %v633 = vand.u32 %v125, 4294901760
    %634 = vmatmul.mubr.f32.gmra.mxu0 %v633
    %v635 = vpop.f32.mrf.mxu0
    %v636 = vadd.f32 %v533, %v635
    %v637 = vpop.f32.mrf.mxu0
    %v638 = vadd.f32 %v535, %v637
    %639 = vmatprep.mubr.f32.mxu0 0.0
    %v640 = vand.u32 %v127, 4294901760
    %641 = vmatmul.mubr.f32.gmra.mxu0 %v640
    %v642 = vpop.f32.mrf.mxu0
    %v643 = vadd.f32 %v542, %v642
    %v644 = vpop.f32.mrf.mxu0
    %v645 = vadd.f32 %v544, %v644
    %646 = vmatprep.mubr.f32.mxu0 0.0
    %v647 = vand.u32 %v129, 4294901760
    %648 = vmatmul.mubr.f32.gmra.mxu0 %v647
    %v649 = vpop.f32.mrf.mxu0
    %v650 = vadd.f32 %v551, %v649
    %v651 = vpop.f32.mrf.mxu0
    %v652 = vadd.f32 %v553, %v651
    %653 = vdwg.mxu0
    %654 = vmatprep.subr.mxu0 0.0
    %655 = vmatpush1.msra.mxu0 0.0
    %656 = vmatprep.subr.mxu0 0.0
    %657 = vmatpush1.msra.mxu0 0.0
    %658 = vmatprep.subr.mxu0 0.0
    %659 = vmatpush1.msra.mxu0 0.0
    %660 = vmatprep.subr.mxu0 0.0
    %661 = vmatpush1.msra.mxu0 0.0
    %662 = vmatprep.subr.mxu0 0.0
    %663 = vmatpush1.msra.mxu0 0.0
    %664 = vmatprep.subr.mxu0 0.0
    %665 = vmatpush1.msra.mxu0 0.0
    %666 = vmatprep.subr.mxu0 0.0
    %667 = vmatpush1.msra.mxu0 0.0
    %668 = vmatprep.subr.mxu0 0.0
    %669 = vmatpush1.msra.mxu0 0.0
    %670 = vmatprep.subr.mxu0 0.0
    %671 = vmatpush1.msra.mxu0 0.0
    %672 = vmatprep.subr.mxu0 0.0
    %673 = vmatpush1.msra.mxu0 0.0
    %674 = vmatprep.subr.mxu0 0.0
    %675 = vmatpush1.msra.mxu0 0.0
    %676 = vmatprep.subr.mxu0 0.0
    %677 = vmatpush1.msra.mxu0 0.0
    %678 = vmatprep.subr.mxu0 0.0
    %679 = vmatpush1.msra.mxu0 0.0
    %680 = vmatprep.subr.mxu0 0.0
    %681 = vmatpush1.msra.mxu0 0.0
    %682 = vmatprep.subr.mxu0 0.0
    %683 = vmatpush1.msra.mxu0 0.0
    %v684 = vand.u32 %v135, 4294901760
    %685 = vmatprep.subr.mxu0 %v684
    %v686 = vand.u32 %v132, 4294901760
    %687 = vmatpush1.msra.mxu0 %v686
    %688 = vmatprep.subr.mxu0 0.0
    %689 = vmatpush2.msra.mxu0 0.0
    %690 = vmatprep.subr.mxu0 0.0
    %691 = vmatpush2.msra.mxu0 0.0
    %692 = vmatprep.subr.mxu0 0.0
    %693 = vmatpush2.msra.mxu0 0.0
    %694 = vmatprep.subr.mxu0 0.0
    %695 = vmatpush2.msra.mxu0 0.0
    %696 = vmatprep.subr.mxu0 0.0
    %697 = vmatpush2.msra.mxu0 0.0
    %698 = vmatprep.subr.mxu0 0.0
    %699 = vmatpush2.msra.mxu0 0.0
    %700 = vmatprep.subr.mxu0 0.0
    %701 = vmatpush2.msra.mxu0 0.0
    %702 = vmatprep.subr.mxu0 0.0
    %703 = vmatpush2.msra.mxu0 0.0
    %704 = vmatprep.subr.mxu0 0.0
    %705 = vmatpush2.msra.mxu0 0.0
    %706 = vmatprep.subr.mxu0 0.0
    %707 = vmatpush2.msra.mxu0 0.0
    %708 = vmatprep.subr.mxu0 0.0
    %709 = vmatpush2.msra.mxu0 0.0
    %710 = vmatprep.subr.mxu0 0.0
    %711 = vmatpush2.msra.mxu0 0.0
    %712 = vmatprep.subr.mxu0 0.0
    %713 = vmatpush2.msra.mxu0 0.0
    %714 = vmatprep.subr.mxu0 0.0
    %715 = vmatpush2.msra.mxu0 0.0
    %716 = vmatprep.subr.mxu0 0.0
    %717 = vmatpush2.msra.mxu0 0.0
    %718 = vmatprep.subr.mxu0 0.0
    %719 = vmatpush2.msra.mxu0 0.0
    %720 = vmatprep.mubr.f32.mxu0 0.0
    %v721 = vand.u32 %v123, 4294901760
    %722 = vmatmul.mubr.f32.gmra.mxu0 %v721
    %v723 = vpop.f32.mrf.mxu0
    %v724 = vadd.f32 %v629, %v723
    %v725 = vpop.f32.mrf.mxu0
    %v726 = vadd.f32 %v631, %v725
    %727 = vmatprep.mubr.f32.mxu0 0.0
    %v728 = vand.u32 %v125, 4294901760
    %729 = vmatmul.mubr.f32.gmra.mxu0 %v728
    %v730 = vpop.f32.mrf.mxu0
    %v731 = vadd.f32 %v636, %v730
    %v732 = vpop.f32.mrf.mxu0
    %v733 = vadd.f32 %v638, %v732
    %734 = vmatprep.mubr.f32.mxu0 0.0
    %v735 = vand.u32 %v127, 4294901760
    %736 = vmatmul.mubr.f32.gmra.mxu0 %v735
    %v737 = vpop.f32.mrf.mxu0
    %v738 = vadd.f32 %v643, %v737
    %v739 = vpop.f32.mrf.mxu0
    %v740 = vadd.f32 %v645, %v739
    %741 = vmatprep.mubr.f32.mxu0 0.0
    %v742 = vand.u32 %v129, 4294901760
    %743 = vmatmul.mubr.f32.gmra.mxu0 %v742
    %v744 = vpop.f32.mrf.mxu0
    %v745 = vadd.f32 %v650, %v744
    %v746 = vpop.f32.mrf.mxu0
    %v747 = vadd.f32 %v652, %v746
    %748 = vdwg.mxu0
    %v749 = vtanh.pop %v724
    %v750 = vtanh.pop %v726
    %v751 = vtanh.pop %v731
    %v752 = vtanh.pop %v733
    %v753 = vtanh.pop %v738
    %v754 = vtanh.pop %v740
    %v755 = vtanh.pop %v745
    %v756 = vtanh.pop %v747
    %v757 = vadd.f32 %v749, %v750
    %758 = vadd.xlane.f32.xlu0 %v757
    %v759 = vpop.xlane.xlu0 %758
    %v760 = vadd.f32 %v751, %v752
    %761 = vadd.xlane.f32.xlu0 %v760
    %v762 = vpop.xlane.xlu0 %761
    %v763 = vadd.f32 %v753, %v754
    %764 = vadd.xlane.f32.xlu0 %v763
    %v765 = vpop.xlane.xlu0 %764
    %v766 = vadd.f32 %v755, %v756
    %767 = vadd.xlane.f32.xlu0 %v766
    %v768 = vpop.xlane.xlu0 %767
    %v769 = vmul.f32 %v759, 0.00390625
    %v770 = vmul.f32 %v762, 0.00390625
    %v771 = vmul.f32 %v765, 0.00390625
    %v772 = vmul.f32 %v768, 0.00390625
    %v773 = vsub.f32 %v749, %v769
    %v774 = vsub.f32 %v750, %v769
    %v775 = vsub.f32 %v751, %v770
    %v776 = vsub.f32 %v752, %v770
    %v777 = vsub.f32 %v753, %v771
    %v778 = vsub.f32 %v754, %v771
    %v779 = vsub.f32 %v755, %v772
    %v780 = vsub.f32 %v756, %v772
    %v781 = vmul.f32 %v773, %v773
    %v782 = vmul.f32 %v774, %v774
    %v783 = vmul.f32 %v775, %v775
    %v784 = vmul.f32 %v776, %v776
    %v785 = vmul.f32 %v777, %v777
    %v786 = vmul.f32 %v778, %v778
    %v787 = vmul.f32 %v779, %v779
    %v788 = vmul.f32 %v780, %v780
    %v789 = vadd.f32 %v781, %v782
    %790 = vadd.xlane.f32.xlu0 %v789
    %v791 = vpop.xlane.xlu0 %790
    %v792 = vadd.f32 %v783, %v784
    %793 = vadd.xlane.f32.xlu0 %v792
    %v794 = vpop.xlane.xlu0 %793
    %v795 = vadd.f32 %v785, %v786
    %796 = vadd.xlane.f32.xlu0 %v795
    %v797 = vpop.xlane.xlu0 %796
    %v798 = vadd.f32 %v787, %v788
    %799 = vadd.xlane.f32.xlu0 %v798
    %v800 = vpop.xlane.xlu0 %799
    %v801 = vmul.f32 %v791, 0.00390625
    %v802 = vmul.f32 %v794, 0.00390625
    %v803 = vmul.f32 %v797, 0.00390625
    %v804 = vmul.f32 %v800, 0.00390625
    %805 = vset.pattern.permute.xlu0 104
    %806 = vperm.xlu0 %805, %v90
    %v807 = vpop.permute.xlu0 %806
    %809 = vset.pattern.permute.xlu0 104
    %810 = vperm.xlu0 %809, %v91
    %v811 = vpop.permute.xlu0 %810
    %813 = vset.pattern.permute.xlu0 104
    %814 = vperm.xlu0 %813, %v92
    %v815 = vpop.permute.xlu0 %814
    %817 = vset.pattern.permute.xlu0 104
    %818 = vperm.xlu0 %817, %v93
    %v819 = vpop.permute.xlu0 %818
    %v821 = vmul.f32 %v807, %v773
    %v822 = vmul.f32 %v807, %v774
    %v823 = vmul.f32 %v811, %v775
    %v824 = vmul.f32 %v811, %v776
    %v825 = vmul.f32 %v815, %v777
    %v826 = vmul.f32 %v815, %v778
    %v827 = vmul.f32 %v819, %v779
    %v828 = vmul.f32 %v819, %v780
    %v829 = vadd.f32 %v801, 1e-05
    %v830 = vadd.f32 %v802, 1e-05
    %v831 = vadd.f32 %v803, 1e-05
    %v832 = vadd.f32 %v804, 1e-05
    %v833 = vrsqrt.pop %v829
    %v834 = vrsqrt.pop %v830
    %v835 = vrsqrt.pop %v831
    %v836 = vrsqrt.pop %v832
    %v837 = vmul.f32 %v821, %v833
    %v838 = vmul.f32 %v822, %v833
    %v839 = vmul.f32 %v823, %v834
    %v840 = vmul.f32 %v824, %v834
    %v841 = vmul.f32 %v825, %v835
    %v842 = vmul.f32 %v826, %v835
    %v843 = vmul.f32 %v827, %v836
    %v844 = vmul.f32 %v828, %v836
    %845 = vset.pattern.permute.xlu0 108
    %846 = vperm.xlu0 %845, %v90
    %v847 = vpop.permute.xlu0 %846
    %849 = vset.pattern.permute.xlu0 108
    %850 = vperm.xlu0 %849, %v91
    %v851 = vpop.permute.xlu0 %850
    %853 = vset.pattern.permute.xlu0 108
    %854 = vperm.xlu0 %853, %v92
    %v855 = vpop.permute.xlu0 %854
    %857 = vset.pattern.permute.xlu0 108
    %858 = vperm.xlu0 %857, %v93
    %v859 = vpop.permute.xlu0 %858
    %v861 = vadd.f32 %v837, %v847
    %v862 = vadd.f32 %v838, %v847
    %v863 = vadd.f32 %v839, %v851
    %v864 = vadd.f32 %v840, %v851
    %v865 = vadd.f32 %v841, %v855
    %v866 = vadd.f32 %v842, %v855
    %v867 = vadd.f32 %v843, %v859
    %v868 = vadd.f32 %v844, %v859
    %869 = vset.pattern.permute.xlu0 101
    %870 = vperm.xlu0 %869, %v90
    %v871 = vpop.permute.xlu0 %870
    %873 = vset.pattern.permute.xlu0 101
    %874 = vperm.xlu0 %873, %v91
    %v875 = vpop.permute.xlu0 %874
    %877 = vset.pattern.permute.xlu0 101
    %878 = vperm.xlu0 %877, %v92
    %v879 = vpop.permute.xlu0 %878
    %881 = vset.pattern.permute.xlu0 101
    %882 = vperm.xlu0 %881, %v93
    %v883 = vpop.permute.xlu0 %882
    %vm885 = vcmask 261120
    %v886 = vsel %vm885, %v90, 0
    %v888 = vsel %vm885, %v91, 0
    %v890 = vsel %vm885, %v92, 0
    %v892 = vsel %vm885, %v93, 0
    %894 = vmatprep.subr.mxu0 0.0
    %895 = vmatpush1.msra.mxu0 0.0
    %896 = vmatprep.subr.mxu0 0.0
    %897 = vmatpush1.msra.mxu0 0.0
    %898 = vmatprep.subr.mxu0 0.0
    %899 = vmatpush1.msra.mxu0 0.0
    %900 = vmatprep.subr.mxu0 0.0
    %901 = vmatpush1.msra.mxu0 0.0
    %902 = vmatprep.subr.mxu0 0.0
    %903 = vmatpush1.msra.mxu0 0.0
    %904 = vmatprep.subr.mxu0 0.0
    %905 = vmatpush1.msra.mxu0 0.0
    %906 = vmatprep.subr.mxu0 0.0
    %907 = vmatpush1.msra.mxu0 0.0
    %908 = vmatprep.subr.mxu0 0.0
    %909 = vmatpush1.msra.mxu0 0.0
    %910 = vmatprep.subr.mxu0 0.0
    %911 = vmatpush1.msra.mxu0 0.0
    %912 = vmatprep.subr.mxu0 0.0
    %913 = vmatpush1.msra.mxu0 0.0
    %914 = vmatprep.subr.mxu0 0.0
    %915 = vmatpush1.msra.mxu0 0.0
    %916 = vmatprep.subr.mxu0 0.0
    %917 = vmatpush1.msra.mxu0 0.0
    %v918 = vand.u32 %v868, 4294901760
    %919 = vmatprep.subr.mxu0 %v918
    %v920 = vand.u32 %v867, 4294901760
    %921 = vmatpush1.msra.mxu0 %v920
    %v922 = vand.u32 %v866, 4294901760
    %923 = vmatprep.subr.mxu0 %v922
    %v924 = vand.u32 %v865, 4294901760
    %925 = vmatpush1.msra.mxu0 %v924
    %v926 = vand.u32 %v864, 4294901760
    %927 = vmatprep.subr.mxu0 %v926
    %v928 = vand.u32 %v863, 4294901760
    %929 = vmatpush1.msra.mxu0 %v928
    %v930 = vand.u32 %v862, 4294901760
    %931 = vmatprep.subr.mxu0 %v930
    %v932 = vand.u32 %v861, 4294901760
    %933 = vmatpush1.msra.mxu0 %v932
    %934 = vmatprep.subr.mxu0 0.0
    %935 = vmatpush2.msra.mxu0 0.0
    %936 = vmatprep.subr.mxu0 0.0
    %937 = vmatpush2.msra.mxu0 0.0
    %938 = vmatprep.subr.mxu0 0.0
    %939 = vmatpush2.msra.mxu0 0.0
    %940 = vmatprep.subr.mxu0 0.0
    %941 = vmatpush2.msra.mxu0 0.0
    %942 = vmatprep.subr.mxu0 0.0
    %943 = vmatpush2.msra.mxu0 0.0
    %944 = vmatprep.subr.mxu0 0.0
    %945 = vmatpush2.msra.mxu0 0.0
    %946 = vmatprep.subr.mxu0 0.0
    %947 = vmatpush2.msra.mxu0 0.0
    %948 = vmatprep.subr.mxu0 0.0
    %949 = vmatpush2.msra.mxu0 0.0
    %950 = vmatprep.subr.mxu0 0.0
    %951 = vmatpush2.msra.mxu0 0.0
    %952 = vmatprep.subr.mxu0 0.0
    %953 = vmatpush2.msra.mxu0 0.0
    %954 = vmatprep.subr.mxu0 0.0
    %955 = vmatpush2.msra.mxu0 0.0
    %956 = vmatprep.subr.mxu0 0.0
    %957 = vmatpush2.msra.mxu0 0.0
    %958 = vmatprep.subr.mxu0 0.0
    %959 = vmatpush2.msra.mxu0 0.0
    %960 = vmatprep.subr.mxu0 0.0
    %961 = vmatpush2.msra.mxu0 0.0
    %962 = vmatprep.subr.mxu0 0.0
    %963 = vmatpush2.msra.mxu0 0.0
    %964 = vmatprep.subr.mxu0 0.0
    %965 = vmatpush2.msra.mxu0 0.0
    %966 = vmatprep.mubr.f32.mxu0 0.0
    %v967 = vand.u32 %v886, 4294901760
    %v968 = vsub.f32 %v886, %v967
    %v969 = vand.u32 %v968, 4294901760
    %v970 = vsub.f32 %v968, %v969
    %v971 = vand.u32 %v970, 4294901760
    %972 = vmatmul.mubr.f32.gmra.mxu0 %v971
    %v973 = vpop.f32.mrf.mxu0
    %v974 = vadd.f32 %v871, %v973
    %v975 = vpop.f32.mrf.mxu0
    %v976 = vadd.f32 %v871, %v975
    %977 = vmatprep.mubr.f32.mxu0 0.0
    %v978 = vand.u32 %v888, 4294901760
    %v979 = vsub.f32 %v888, %v978
    %v980 = vand.u32 %v979, 4294901760
    %v981 = vsub.f32 %v979, %v980
    %v982 = vand.u32 %v981, 4294901760
    %983 = vmatmul.mubr.f32.gmra.mxu0 %v982
    %v984 = vpop.f32.mrf.mxu0
    %v985 = vadd.f32 %v875, %v984
    %v986 = vpop.f32.mrf.mxu0
    %v987 = vadd.f32 %v875, %v986
    %988 = vmatprep.mubr.f32.mxu0 0.0
    %v989 = vand.u32 %v890, 4294901760
    %v990 = vsub.f32 %v890, %v989
    %v991 = vand.u32 %v990, 4294901760
    %v992 = vsub.f32 %v990, %v991
    %v993 = vand.u32 %v992, 4294901760
    %994 = vmatmul.mubr.f32.gmra.mxu0 %v993
    %v995 = vpop.f32.mrf.mxu0
    %v996 = vadd.f32 %v879, %v995
    %v997 = vpop.f32.mrf.mxu0
    %v998 = vadd.f32 %v879, %v997
    %999 = vmatprep.mubr.f32.mxu0 0.0
    %v1000 = vand.u32 %v892, 4294901760
    %v1001 = vsub.f32 %v892, %v1000
    %v1002 = vand.u32 %v1001, 4294901760
    %v1003 = vsub.f32 %v1001, %v1002
    %v1004 = vand.u32 %v1003, 4294901760
    %1005 = vmatmul.mubr.f32.gmra.mxu0 %v1004
    %v1006 = vpop.f32.mrf.mxu0
    %v1007 = vadd.f32 %v883, %v1006
    %v1008 = vpop.f32.mrf.mxu0
    %v1009 = vadd.f32 %v883, %v1008
    %1010 = vdwg.mxu0
    %1011 = vmatprep.subr.mxu0 0.0
    %1012 = vmatpush1.msra.mxu0 0.0
    %1013 = vmatprep.subr.mxu0 0.0
    %1014 = vmatpush1.msra.mxu0 0.0
    %1015 = vmatprep.subr.mxu0 0.0
    %1016 = vmatpush1.msra.mxu0 0.0
    %1017 = vmatprep.subr.mxu0 0.0
    %1018 = vmatpush1.msra.mxu0 0.0
    %1019 = vmatprep.subr.mxu0 0.0
    %1020 = vmatpush1.msra.mxu0 0.0
    %1021 = vmatprep.subr.mxu0 0.0
    %1022 = vmatpush1.msra.mxu0 0.0
    %1023 = vmatprep.subr.mxu0 0.0
    %1024 = vmatpush1.msra.mxu0 0.0
    %1025 = vmatprep.subr.mxu0 0.0
    %1026 = vmatpush1.msra.mxu0 0.0
    %1027 = vmatprep.subr.mxu0 0.0
    %1028 = vmatpush1.msra.mxu0 0.0
    %1029 = vmatprep.subr.mxu0 0.0
    %1030 = vmatpush1.msra.mxu0 0.0
    %1031 = vmatprep.subr.mxu0 0.0
    %1032 = vmatpush1.msra.mxu0 0.0
    %1033 = vmatprep.subr.mxu0 0.0
    %1034 = vmatpush1.msra.mxu0 0.0
    %v1035 = vand.u32 %v868, 4294901760
    %v1036 = vsub.f32 %v868, %v1035
    %v1037 = vand.u32 %v1036, 4294901760
    %v1038 = vsub.f32 %v1036, %v1037
    %v1039 = vand.u32 %v1038, 4294901760
    %1040 = vmatprep.subr.mxu0 %v1039
    %v1041 = vand.u32 %v867, 4294901760
    %v1042 = vsub.f32 %v867, %v1041
    %v1043 = vand.u32 %v1042, 4294901760
    %v1044 = vsub.f32 %v1042, %v1043
    %v1045 = vand.u32 %v1044, 4294901760
    %1046 = vmatpush1.msra.mxu0 %v1045
    %v1047 = vand.u32 %v866, 4294901760
    %v1048 = vsub.f32 %v866, %v1047
    %v1049 = vand.u32 %v1048, 4294901760
    %v1050 = vsub.f32 %v1048, %v1049
    %v1051 = vand.u32 %v1050, 4294901760
    %1052 = vmatprep.subr.mxu0 %v1051
    %v1053 = vand.u32 %v865, 4294901760
    %v1054 = vsub.f32 %v865, %v1053
    %v1055 = vand.u32 %v1054, 4294901760
    %v1056 = vsub.f32 %v1054, %v1055
    %v1057 = vand.u32 %v1056, 4294901760
    %1058 = vmatpush1.msra.mxu0 %v1057
    %v1059 = vand.u32 %v864, 4294901760
    %v1060 = vsub.f32 %v864, %v1059
    %v1061 = vand.u32 %v1060, 4294901760
    %v1062 = vsub.f32 %v1060, %v1061
    %v1063 = vand.u32 %v1062, 4294901760
    %1064 = vmatprep.subr.mxu0 %v1063
    %v1065 = vand.u32 %v863, 4294901760
    %v1066 = vsub.f32 %v863, %v1065
    %v1067 = vand.u32 %v1066, 4294901760
    %v1068 = vsub.f32 %v1066, %v1067
    %v1069 = vand.u32 %v1068, 4294901760
    %1070 = vmatpush1.msra.mxu0 %v1069
    %v1071 = vand.u32 %v862, 4294901760
    %v1072 = vsub.f32 %v862, %v1071
    %v1073 = vand.u32 %v1072, 4294901760
    %v1074 = vsub.f32 %v1072, %v1073
    %v1075 = vand.u32 %v1074, 4294901760
    %1076 = vmatprep.subr.mxu0 %v1075
    %v1077 = vand.u32 %v861, 4294901760
    %v1078 = vsub.f32 %v861, %v1077
    %v1079 = vand.u32 %v1078, 4294901760
    %v1080 = vsub.f32 %v1078, %v1079
    %v1081 = vand.u32 %v1080, 4294901760
    %1082 = vmatpush1.msra.mxu0 %v1081
    %1083 = vmatprep.subr.mxu0 0.0
    %1084 = vmatpush2.msra.mxu0 0.0
    %1085 = vmatprep.subr.mxu0 0.0
    %1086 = vmatpush2.msra.mxu0 0.0
    %1087 = vmatprep.subr.mxu0 0.0
    %1088 = vmatpush2.msra.mxu0 0.0
    %1089 = vmatprep.subr.mxu0 0.0
    %1090 = vmatpush2.msra.mxu0 0.0
    %1091 = vmatprep.subr.mxu0 0.0
    %1092 = vmatpush2.msra.mxu0 0.0
    %1093 = vmatprep.subr.mxu0 0.0
    %1094 = vmatpush2.msra.mxu0 0.0
    %1095 = vmatprep.subr.mxu0 0.0
    %1096 = vmatpush2.msra.mxu0 0.0
    %1097 = vmatprep.subr.mxu0 0.0
    %1098 = vmatpush2.msra.mxu0 0.0
    %1099 = vmatprep.subr.mxu0 0.0
    %1100 = vmatpush2.msra.mxu0 0.0
    %1101 = vmatprep.subr.mxu0 0.0
    %1102 = vmatpush2.msra.mxu0 0.0
    %1103 = vmatprep.subr.mxu0 0.0
    %1104 = vmatpush2.msra.mxu0 0.0
    %1105 = vmatprep.subr.mxu0 0.0
    %1106 = vmatpush2.msra.mxu0 0.0
    %1107 = vmatprep.subr.mxu0 0.0
    %1108 = vmatpush2.msra.mxu0 0.0
    %1109 = vmatprep.subr.mxu0 0.0
    %1110 = vmatpush2.msra.mxu0 0.0
    %1111 = vmatprep.subr.mxu0 0.0
    %1112 = vmatpush2.msra.mxu0 0.0
    %1113 = vmatprep.subr.mxu0 0.0
    %1114 = vmatpush2.msra.mxu0 0.0
    %1115 = vmatprep.mubr.f32.mxu0 0.0
    %v1116 = vand.u32 %v886, 4294901760
    %1117 = vmatmul.mubr.f32.gmra.mxu0 %v1116
    %v1118 = vpop.f32.mrf.mxu0
    %v1119 = vadd.f32 %v974, %v1118
    %v1120 = vpop.f32.mrf.mxu0
    %v1121 = vadd.f32 %v976, %v1120
    %1122 = vmatprep.mubr.f32.mxu0 0.0
    %v1123 = vand.u32 %v888, 4294901760
    %1124 = vmatmul.mubr.f32.gmra.mxu0 %v1123
    %v1125 = vpop.f32.mrf.mxu0
    %v1126 = vadd.f32 %v985, %v1125
    %v1127 = vpop.f32.mrf.mxu0
    %v1128 = vadd.f32 %v987, %v1127
    %1129 = vmatprep.mubr.f32.mxu0 0.0
    %v1130 = vand.u32 %v890, 4294901760
    %1131 = vmatmul.mubr.f32.gmra.mxu0 %v1130
    %v1132 = vpop.f32.mrf.mxu0
    %v1133 = vadd.f32 %v996, %v1132
    %v1134 = vpop.f32.mrf.mxu0
    %v1135 = vadd.f32 %v998, %v1134
    %1136 = vmatprep.mubr.f32.mxu0 0.0
    %v1137 = vand.u32 %v892, 4294901760
    %1138 = vmatmul.mubr.f32.gmra.mxu0 %v1137
    %v1139 = vpop.f32.mrf.mxu0
    %v1140 = vadd.f32 %v1007, %v1139
    %v1141 = vpop.f32.mrf.mxu0
    %v1142 = vadd.f32 %v1009, %v1141
    %1143 = vdwg.mxu0
    %1144 = vmatprep.subr.mxu0 0.0
    %1145 = vmatpush1.msra.mxu0 0.0
    %1146 = vmatprep.subr.mxu0 0.0
    %1147 = vmatpush1.msra.mxu0 0.0
    %1148 = vmatprep.subr.mxu0 0.0
    %1149 = vmatpush1.msra.mxu0 0.0
    %1150 = vmatprep.subr.mxu0 0.0
    %1151 = vmatpush1.msra.mxu0 0.0
    %1152 = vmatprep.subr.mxu0 0.0
    %1153 = vmatpush1.msra.mxu0 0.0
    %1154 = vmatprep.subr.mxu0 0.0
    %1155 = vmatpush1.msra.mxu0 0.0
    %1156 = vmatprep.subr.mxu0 0.0
    %1157 = vmatpush1.msra.mxu0 0.0
    %1158 = vmatprep.subr.mxu0 0.0
    %1159 = vmatpush1.msra.mxu0 0.0
    %1160 = vmatprep.subr.mxu0 0.0
    %1161 = vmatpush1.msra.mxu0 0.0
    %1162 = vmatprep.subr.mxu0 0.0
    %1163 = vmatpush1.msra.mxu0 0.0
    %1164 = vmatprep.subr.mxu0 0.0
    %1165 = vmatpush1.msra.mxu0 0.0
    %1166 = vmatprep.subr.mxu0 0.0
    %1167 = vmatpush1.msra.mxu0 0.0
    %v1168 = vand.u32 %v868, 4294901760
    %v1169 = vsub.f32 %v868, %v1168
    %1170 = vmatprep.subr.mxu0 %v1169
    %v1171 = vand.u32 %v867, 4294901760
    %v1172 = vsub.f32 %v867, %v1171
    %1173 = vmatpush1.msra.mxu0 %v1172
    %v1174 = vand.u32 %v866, 4294901760
    %v1175 = vsub.f32 %v866, %v1174
    %1176 = vmatprep.subr.mxu0 %v1175
    %v1177 = vand.u32 %v865, 4294901760
    %v1178 = vsub.f32 %v865, %v1177
    %1179 = vmatpush1.msra.mxu0 %v1178
    %v1180 = vand.u32 %v864, 4294901760
    %v1181 = vsub.f32 %v864, %v1180
    %1182 = vmatprep.subr.mxu0 %v1181
    %v1183 = vand.u32 %v863, 4294901760
    %v1184 = vsub.f32 %v863, %v1183
    %1185 = vmatpush1.msra.mxu0 %v1184
    %v1186 = vand.u32 %v862, 4294901760
    %v1187 = vsub.f32 %v862, %v1186
    %1188 = vmatprep.subr.mxu0 %v1187
    %v1189 = vand.u32 %v861, 4294901760
    %v1190 = vsub.f32 %v861, %v1189
    %1191 = vmatpush1.msra.mxu0 %v1190
    %1192 = vmatprep.subr.mxu0 0.0
    %1193 = vmatpush2.msra.mxu0 0.0
    %1194 = vmatprep.subr.mxu0 0.0
    %1195 = vmatpush2.msra.mxu0 0.0
    %1196 = vmatprep.subr.mxu0 0.0
    %1197 = vmatpush2.msra.mxu0 0.0
    %1198 = vmatprep.subr.mxu0 0.0
    %1199 = vmatpush2.msra.mxu0 0.0
    %1200 = vmatprep.subr.mxu0 0.0
    %1201 = vmatpush2.msra.mxu0 0.0
    %1202 = vmatprep.subr.mxu0 0.0
    %1203 = vmatpush2.msra.mxu0 0.0
    %1204 = vmatprep.subr.mxu0 0.0
    %1205 = vmatpush2.msra.mxu0 0.0
    %1206 = vmatprep.subr.mxu0 0.0
    %1207 = vmatpush2.msra.mxu0 0.0
    %1208 = vmatprep.subr.mxu0 0.0
    %1209 = vmatpush2.msra.mxu0 0.0
    %1210 = vmatprep.subr.mxu0 0.0
    %1211 = vmatpush2.msra.mxu0 0.0
    %1212 = vmatprep.subr.mxu0 0.0
    %1213 = vmatpush2.msra.mxu0 0.0
    %1214 = vmatprep.subr.mxu0 0.0
    %1215 = vmatpush2.msra.mxu0 0.0
    %1216 = vmatprep.subr.mxu0 0.0
    %1217 = vmatpush2.msra.mxu0 0.0
    %1218 = vmatprep.subr.mxu0 0.0
    %1219 = vmatpush2.msra.mxu0 0.0
    %1220 = vmatprep.subr.mxu0 0.0
    %1221 = vmatpush2.msra.mxu0 0.0
    %1222 = vmatprep.subr.mxu0 0.0
    %1223 = vmatpush2.msra.mxu0 0.0
    %1224 = vmatprep.mubr.f32.mxu0 0.0
    %v1225 = vand.u32 %v886, 4294901760
    %v1226 = vsub.f32 %v886, %v1225
    %1227 = vmatmul.mubr.f32.gmra.mxu0 %v1226
    %v1228 = vpop.f32.mrf.mxu0
    %v1229 = vadd.f32 %v1119, %v1228
    %v1230 = vpop.f32.mrf.mxu0
    %v1231 = vadd.f32 %v1121, %v1230
    %1232 = vmatprep.mubr.f32.mxu0 0.0
    %v1233 = vand.u32 %v888, 4294901760
    %v1234 = vsub.f32 %v888, %v1233
    %1235 = vmatmul.mubr.f32.gmra.mxu0 %v1234
    %v1236 = vpop.f32.mrf.mxu0
    %v1237 = vadd.f32 %v1126, %v1236
    %v1238 = vpop.f32.mrf.mxu0
    %v1239 = vadd.f32 %v1128, %v1238
    %1240 = vmatprep.mubr.f32.mxu0 0.0
    %v1241 = vand.u32 %v890, 4294901760
    %v1242 = vsub.f32 %v890, %v1241
    %1243 = vmatmul.mubr.f32.gmra.mxu0 %v1242
    %v1244 = vpop.f32.mrf.mxu0
    %v1245 = vadd.f32 %v1133, %v1244
    %v1246 = vpop.f32.mrf.mxu0
    %v1247 = vadd.f32 %v1135, %v1246
    %1248 = vmatprep.mubr.f32.mxu0 0.0
    %v1249 = vand.u32 %v892, 4294901760
    %v1250 = vsub.f32 %v892, %v1249
    %1251 = vmatmul.mubr.f32.gmra.mxu0 %v1250
    %v1252 = vpop.f32.mrf.mxu0
    %v1253 = vadd.f32 %v1140, %v1252
    %v1254 = vpop.f32.mrf.mxu0
    %v1255 = vadd.f32 %v1142, %v1254
    %1256 = vdwg.mxu0
    %1257 = vmatprep.subr.mxu0 0.0
    %1258 = vmatpush1.msra.mxu0 0.0
    %1259 = vmatprep.subr.mxu0 0.0
    %1260 = vmatpush1.msra.mxu0 0.0
    %1261 = vmatprep.subr.mxu0 0.0
    %1262 = vmatpush1.msra.mxu0 0.0
    %1263 = vmatprep.subr.mxu0 0.0
    %1264 = vmatpush1.msra.mxu0 0.0
    %1265 = vmatprep.subr.mxu0 0.0
    %1266 = vmatpush1.msra.mxu0 0.0
    %1267 = vmatprep.subr.mxu0 0.0
    %1268 = vmatpush1.msra.mxu0 0.0
    %1269 = vmatprep.subr.mxu0 0.0
    %1270 = vmatpush1.msra.mxu0 0.0
    %1271 = vmatprep.subr.mxu0 0.0
    %1272 = vmatpush1.msra.mxu0 0.0
    %1273 = vmatprep.subr.mxu0 0.0
    %1274 = vmatpush1.msra.mxu0 0.0
    %1275 = vmatprep.subr.mxu0 0.0
    %1276 = vmatpush1.msra.mxu0 0.0
    %1277 = vmatprep.subr.mxu0 0.0
    %1278 = vmatpush1.msra.mxu0 0.0
    %1279 = vmatprep.subr.mxu0 0.0
    %1280 = vmatpush1.msra.mxu0 0.0
    %v1281 = vand.u32 %v868, 4294901760
    %1282 = vmatprep.subr.mxu0 %v1281
    %v1283 = vand.u32 %v867, 4294901760
    %1284 = vmatpush1.msra.mxu0 %v1283
    %v1285 = vand.u32 %v866, 4294901760
    %1286 = vmatprep.subr.mxu0 %v1285
    %v1287 = vand.u32 %v865, 4294901760
    %1288 = vmatpush1.msra.mxu0 %v1287
    %v1289 = vand.u32 %v864, 4294901760
    %1290 = vmatprep.subr.mxu0 %v1289
    %v1291 = vand.u32 %v863, 4294901760
    %1292 = vmatpush1.msra.mxu0 %v1291
    %v1293 = vand.u32 %v862, 4294901760
    %1294 = vmatprep.subr.mxu0 %v1293
    %v1295 = vand.u32 %v861, 4294901760
    %1296 = vmatpush1.msra.mxu0 %v1295
    %1297 = vmatprep.subr.mxu0 0.0
    %1298 = vmatpush2.msra.mxu0 0.0
    %1299 = vmatprep.subr.mxu0 0.0
    %1300 = vmatpush2.msra.mxu0 0.0
    %1301 = vmatprep.subr.mxu0 0.0
    %1302 = vmatpush2.msra.mxu0 0.0
    %1303 = vmatprep.subr.mxu0 0.0
    %1304 = vmatpush2.msra.mxu0 0.0
    %1305 = vmatprep.subr.mxu0 0.0
    %1306 = vmatpush2.msra.mxu0 0.0
    %1307 = vmatprep.subr.mxu0 0.0
    %1308 = vmatpush2.msra.mxu0 0.0
    %1309 = vmatprep.subr.mxu0 0.0
    %1310 = vmatpush2.msra.mxu0 0.0
    %1311 = vmatprep.subr.mxu0 0.0
    %1312 = vmatpush2.msra.mxu0 0.0
    %1313 = vmatprep.subr.mxu0 0.0
    %1314 = vmatpush2.msra.mxu0 0.0
    %1315 = vmatprep.subr.mxu0 0.0
    %1316 = vmatpush2.msra.mxu0 0.0
    %1317 = vmatprep.subr.mxu0 0.0
    %1318 = vmatpush2.msra.mxu0 0.0
    %1319 = vmatprep.subr.mxu0 0.0
    %1320 = vmatpush2.msra.mxu0 0.0
    %1321 = vmatprep.subr.mxu0 0.0
    %1322 = vmatpush2.msra.mxu0 0.0
    %1323 = vmatprep.subr.mxu0 0.0
    %1324 = vmatpush2.msra.mxu0 0.0
    %1325 = vmatprep.subr.mxu0 0.0
    %1326 = vmatpush2.msra.mxu0 0.0
    %1327 = vmatprep.subr.mxu0 0.0
    %1328 = vmatpush2.msra.mxu0 0.0
    %1329 = vmatprep.mubr.f32.mxu0 0.0
    %v1330 = vand.u32 %v886, 4294901760
    %v1331 = vsub.f32 %v886, %v1330
    %v1332 = vand.u32 %v1331, 4294901760
    %1333 = vmatmul.mubr.f32.gmra.mxu0 %v1332
    %v1334 = vpop.f32.mrf.mxu0
    %v1335 = vadd.f32 %v1229, %v1334
    %v1336 = vpop.f32.mrf.mxu0
    %v1337 = vadd.f32 %v1231, %v1336
    %1338 = vmatprep.mubr.f32.mxu0 0.0
    %v1339 = vand.u32 %v888, 4294901760
    %v1340 = vsub.f32 %v888, %v1339
    %v1341 = vand.u32 %v1340, 4294901760
    %1342 = vmatmul.mubr.f32.gmra.mxu0 %v1341
    %v1343 = vpop.f32.mrf.mxu0
    %v1344 = vadd.f32 %v1237, %v1343
    %v1345 = vpop.f32.mrf.mxu0
    %v1346 = vadd.f32 %v1239, %v1345
    %1347 = vmatprep.mubr.f32.mxu0 0.0
    %v1348 = vand.u32 %v890, 4294901760
    %v1349 = vsub.f32 %v890, %v1348
    %v1350 = vand.u32 %v1349, 4294901760
    %1351 = vmatmul.mubr.f32.gmra.mxu0 %v1350
    %v1352 = vpop.f32.mrf.mxu0
    %v1353 = vadd.f32 %v1245, %v1352
    %v1354 = vpop.f32.mrf.mxu0
    %v1355 = vadd.f32 %v1247, %v1354
    %1356 = vmatprep.mubr.f32.mxu0 0.0
    %v1357 = vand.u32 %v892, 4294901760
    %v1358 = vsub.f32 %v892, %v1357
    %v1359 = vand.u32 %v1358, 4294901760
    %1360 = vmatmul.mubr.f32.gmra.mxu0 %v1359
    %v1361 = vpop.f32.mrf.mxu0
    %v1362 = vadd.f32 %v1253, %v1361
    %v1363 = vpop.f32.mrf.mxu0
    %v1364 = vadd.f32 %v1255, %v1363
    %1365 = vdwg.mxu0
    %1366 = vmatprep.subr.mxu0 0.0
    %1367 = vmatpush1.msra.mxu0 0.0
    %1368 = vmatprep.subr.mxu0 0.0
    %1369 = vmatpush1.msra.mxu0 0.0
    %1370 = vmatprep.subr.mxu0 0.0
    %1371 = vmatpush1.msra.mxu0 0.0
    %1372 = vmatprep.subr.mxu0 0.0
    %1373 = vmatpush1.msra.mxu0 0.0
    %1374 = vmatprep.subr.mxu0 0.0
    %1375 = vmatpush1.msra.mxu0 0.0
    %1376 = vmatprep.subr.mxu0 0.0
    %1377 = vmatpush1.msra.mxu0 0.0
    %1378 = vmatprep.subr.mxu0 0.0
    %1379 = vmatpush1.msra.mxu0 0.0
    %1380 = vmatprep.subr.mxu0 0.0
    %1381 = vmatpush1.msra.mxu0 0.0
    %1382 = vmatprep.subr.mxu0 0.0
    %1383 = vmatpush1.msra.mxu0 0.0
    %1384 = vmatprep.subr.mxu0 0.0
    %1385 = vmatpush1.msra.mxu0 0.0
    %1386 = vmatprep.subr.mxu0 0.0
    %1387 = vmatpush1.msra.mxu0 0.0
    %1388 = vmatprep.subr.mxu0 0.0
    %1389 = vmatpush1.msra.mxu0 0.0
    %v1390 = vand.u32 %v868, 4294901760
    %v1391 = vsub.f32 %v868, %v1390
    %v1392 = vand.u32 %v1391, 4294901760
    %1393 = vmatprep.subr.mxu0 %v1392
    %v1394 = vand.u32 %v867, 4294901760
    %v1395 = vsub.f32 %v867, %v1394
    %v1396 = vand.u32 %v1395, 4294901760
    %1397 = vmatpush1.msra.mxu0 %v1396
    %v1398 = vand.u32 %v866, 4294901760
    %v1399 = vsub.f32 %v866, %v1398
    %v1400 = vand.u32 %v1399, 4294901760
    %1401 = vmatprep.subr.mxu0 %v1400
    %v1402 = vand.u32 %v865, 4294901760
    %v1403 = vsub.f32 %v865, %v1402
    %v1404 = vand.u32 %v1403, 4294901760
    %1405 = vmatpush1.msra.mxu0 %v1404
    %v1406 = vand.u32 %v864, 4294901760
    %v1407 = vsub.f32 %v864, %v1406
    %v1408 = vand.u32 %v1407, 4294901760
    %1409 = vmatprep.subr.mxu0 %v1408
    %v1410 = vand.u32 %v863, 4294901760
    %v1411 = vsub.f32 %v863, %v1410
    %v1412 = vand.u32 %v1411, 4294901760
    %1413 = vmatpush1.msra.mxu0 %v1412
    %v1414 = vand.u32 %v862, 4294901760
    %v1415 = vsub.f32 %v862, %v1414
    %v1416 = vand.u32 %v1415, 4294901760
    %1417 = vmatprep.subr.mxu0 %v1416
    %v1418 = vand.u32 %v861, 4294901760
    %v1419 = vsub.f32 %v861, %v1418
    %v1420 = vand.u32 %v1419, 4294901760
    %1421 = vmatpush1.msra.mxu0 %v1420
    %1422 = vmatprep.subr.mxu0 0.0
    %1423 = vmatpush2.msra.mxu0 0.0
    %1424 = vmatprep.subr.mxu0 0.0
    %1425 = vmatpush2.msra.mxu0 0.0
    %1426 = vmatprep.subr.mxu0 0.0
    %1427 = vmatpush2.msra.mxu0 0.0
    %1428 = vmatprep.subr.mxu0 0.0
    %1429 = vmatpush2.msra.mxu0 0.0
    %1430 = vmatprep.subr.mxu0 0.0
    %1431 = vmatpush2.msra.mxu0 0.0
    %1432 = vmatprep.subr.mxu0 0.0
    %1433 = vmatpush2.msra.mxu0 0.0
    %1434 = vmatprep.subr.mxu0 0.0
    %1435 = vmatpush2.msra.mxu0 0.0
    %1436 = vmatprep.subr.mxu0 0.0
    %1437 = vmatpush2.msra.mxu0 0.0
    %1438 = vmatprep.subr.mxu0 0.0
    %1439 = vmatpush2.msra.mxu0 0.0
    %1440 = vmatprep.subr.mxu0 0.0
    %1441 = vmatpush2.msra.mxu0 0.0
    %1442 = vmatprep.subr.mxu0 0.0
    %1443 = vmatpush2.msra.mxu0 0.0
    %1444 = vmatprep.subr.mxu0 0.0
    %1445 = vmatpush2.msra.mxu0 0.0
    %1446 = vmatprep.subr.mxu0 0.0
    %1447 = vmatpush2.msra.mxu0 0.0
    %1448 = vmatprep.subr.mxu0 0.0
    %1449 = vmatpush2.msra.mxu0 0.0
    %1450 = vmatprep.subr.mxu0 0.0
    %1451 = vmatpush2.msra.mxu0 0.0
    %1452 = vmatprep.subr.mxu0 0.0
    %1453 = vmatpush2.msra.mxu0 0.0
    %1454 = vmatprep.mubr.f32.mxu0 0.0
    %v1455 = vand.u32 %v886, 4294901760
    %1456 = vmatmul.mubr.f32.gmra.mxu0 %v1455
    %v1457 = vpop.f32.mrf.mxu0
    %v1458 = vadd.f32 %v1335, %v1457
    %v1459 = vpop.f32.mrf.mxu0
    %v1460 = vadd.f32 %v1337, %v1459
    %1461 = vmatprep.mubr.f32.mxu0 0.0
    %v1462 = vand.u32 %v888, 4294901760
    %1463 = vmatmul.mubr.f32.gmra.mxu0 %v1462
    %v1464 = vpop.f32.mrf.mxu0
    %v1465 = vadd.f32 %v1344, %v1464
    %v1466 = vpop.f32.mrf.mxu0
    %v1467 = vadd.f32 %v1346, %v1466
    %1468 = vmatprep.mubr.f32.mxu0 0.0
    %v1469 = vand.u32 %v890, 4294901760
    %1470 = vmatmul.mubr.f32.gmra.mxu0 %v1469
    %v1471 = vpop.f32.mrf.mxu0
    %v1472 = vadd.f32 %v1353, %v1471
    %v1473 = vpop.f32.mrf.mxu0
    %v1474 = vadd.f32 %v1355, %v1473
    %1475 = vmatprep.mubr.f32.mxu0 0.0
    %v1476 = vand.u32 %v892, 4294901760
    %1477 = vmatmul.mubr.f32.gmra.mxu0 %v1476
    %v1478 = vpop.f32.mrf.mxu0
    %v1479 = vadd.f32 %v1362, %v1478
    %v1480 = vpop.f32.mrf.mxu0
    %v1481 = vadd.f32 %v1364, %v1480
    %1482 = vdwg.mxu0
    %1483 = vmatprep.subr.mxu0 0.0
    %1484 = vmatpush1.msra.mxu0 0.0
    %1485 = vmatprep.subr.mxu0 0.0
    %1486 = vmatpush1.msra.mxu0 0.0
    %1487 = vmatprep.subr.mxu0 0.0
    %1488 = vmatpush1.msra.mxu0 0.0
    %1489 = vmatprep.subr.mxu0 0.0
    %1490 = vmatpush1.msra.mxu0 0.0
    %1491 = vmatprep.subr.mxu0 0.0
    %1492 = vmatpush1.msra.mxu0 0.0
    %1493 = vmatprep.subr.mxu0 0.0
    %1494 = vmatpush1.msra.mxu0 0.0
    %1495 = vmatprep.subr.mxu0 0.0
    %1496 = vmatpush1.msra.mxu0 0.0
    %1497 = vmatprep.subr.mxu0 0.0
    %1498 = vmatpush1.msra.mxu0 0.0
    %1499 = vmatprep.subr.mxu0 0.0
    %1500 = vmatpush1.msra.mxu0 0.0
    %1501 = vmatprep.subr.mxu0 0.0
    %1502 = vmatpush1.msra.mxu0 0.0
    %1503 = vmatprep.subr.mxu0 0.0
    %1504 = vmatpush1.msra.mxu0 0.0
    %1505 = vmatprep.subr.mxu0 0.0
    %1506 = vmatpush1.msra.mxu0 0.0
    %v1507 = vand.u32 %v868, 4294901760
    %1508 = vmatprep.subr.mxu0 %v1507
    %v1509 = vand.u32 %v867, 4294901760
    %1510 = vmatpush1.msra.mxu0 %v1509
    %v1511 = vand.u32 %v866, 4294901760
    %1512 = vmatprep.subr.mxu0 %v1511
    %v1513 = vand.u32 %v865, 4294901760
    %1514 = vmatpush1.msra.mxu0 %v1513
    %v1515 = vand.u32 %v864, 4294901760
    %1516 = vmatprep.subr.mxu0 %v1515
    %v1517 = vand.u32 %v863, 4294901760
    %1518 = vmatpush1.msra.mxu0 %v1517
    %v1519 = vand.u32 %v862, 4294901760
    %1520 = vmatprep.subr.mxu0 %v1519
    %v1521 = vand.u32 %v861, 4294901760
    %1522 = vmatpush1.msra.mxu0 %v1521
    %1523 = vmatprep.subr.mxu0 0.0
    %1524 = vmatpush2.msra.mxu0 0.0
    %1525 = vmatprep.subr.mxu0 0.0
    %1526 = vmatpush2.msra.mxu0 0.0
    %1527 = vmatprep.subr.mxu0 0.0
    %1528 = vmatpush2.msra.mxu0 0.0
    %1529 = vmatprep.subr.mxu0 0.0
    %1530 = vmatpush2.msra.mxu0 0.0
    %1531 = vmatprep.subr.mxu0 0.0
    %1532 = vmatpush2.msra.mxu0 0.0
    %1533 = vmatprep.subr.mxu0 0.0
    %1534 = vmatpush2.msra.mxu0 0.0
    %1535 = vmatprep.subr.mxu0 0.0
    %1536 = vmatpush2.msra.mxu0 0.0
    %1537 = vmatprep.subr.mxu0 0.0
    %1538 = vmatpush2.msra.mxu0 0.0
    %1539 = vmatprep.subr.mxu0 0.0
    %1540 = vmatpush2.msra.mxu0 0.0
    %1541 = vmatprep.subr.mxu0 0.0
    %1542 = vmatpush2.msra.mxu0 0.0
    %1543 = vmatprep.subr.mxu0 0.0
    %1544 = vmatpush2.msra.mxu0 0.0
    %1545 = vmatprep.subr.mxu0 0.0
    %1546 = vmatpush2.msra.mxu0 0.0
    %1547 = vmatprep.subr.mxu0 0.0
    %1548 = vmatpush2.msra.mxu0 0.0
    %1549 = vmatprep.subr.mxu0 0.0
    %1550 = vmatpush2.msra.mxu0 0.0
    %1551 = vmatprep.subr.mxu0 0.0
    %1552 = vmatpush2.msra.mxu0 0.0
    %1553 = vmatprep.subr.mxu0 0.0
    %1554 = vmatpush2.msra.mxu0 0.0
    %1555 = vmatprep.mubr.f32.mxu0 0.0
    %v1556 = vand.u32 %v886, 4294901760
    %1557 = vmatmul.mubr.f32.gmra.mxu0 %v1556
    %v1558 = vpop.f32.mrf.mxu0
    %v1559 = vadd.f32 %v1458, %v1558
    %v1560 = vpop.f32.mrf.mxu0
    %v1561 = vadd.f32 %v1460, %v1560
    %1562 = vmatprep.mubr.f32.mxu0 0.0
    %v1563 = vand.u32 %v888, 4294901760
    %1564 = vmatmul.mubr.f32.gmra.mxu0 %v1563
    %v1565 = vpop.f32.mrf.mxu0
    %v1566 = vadd.f32 %v1465, %v1565
    %v1567 = vpop.f32.mrf.mxu0
    %v1568 = vadd.f32 %v1467, %v1567
    %1569 = vmatprep.mubr.f32.mxu0 0.0
    %v1570 = vand.u32 %v890, 4294901760
    %1571 = vmatmul.mubr.f32.gmra.mxu0 %v1570
    %v1572 = vpop.f32.mrf.mxu0
    %v1573 = vadd.f32 %v1472, %v1572
    %v1574 = vpop.f32.mrf.mxu0
    %v1575 = vadd.f32 %v1474, %v1574
    %1576 = vmatprep.mubr.f32.mxu0 0.0
    %v1577 = vand.u32 %v892, 4294901760
    %1578 = vmatmul.mubr.f32.gmra.mxu0 %v1577
    %v1579 = vpop.f32.mrf.mxu0
    %v1580 = vadd.f32 %v1479, %v1579
    %v1581 = vpop.f32.mrf.mxu0
    %v1582 = vadd.f32 %v1481, %v1581
    %1583 = vdwg.mxu0
    %v1584 = vtanh.pop %v1559
    %v1585 = vtanh.pop %v1561
    %v1586 = vtanh.pop %v1566
    %v1587 = vtanh.pop %v1568
    %v1588 = vtanh.pop %v1573
    %v1589 = vtanh.pop %v1575
    %v1590 = vtanh.pop %v1580
    %v1591 = vtanh.pop %v1582
    %v1592 = vadd.f32 %v1584, %v1585
    %1593 = vadd.xlane.f32.xlu0 %v1592
    %v1594 = vpop.xlane.xlu0 %1593
    %v1595 = vadd.f32 %v1586, %v1587
    %1596 = vadd.xlane.f32.xlu0 %v1595
    %v1597 = vpop.xlane.xlu0 %1596
    %v1598 = vadd.f32 %v1588, %v1589
    %1599 = vadd.xlane.f32.xlu0 %v1598
    %v1600 = vpop.xlane.xlu0 %1599
    %v1601 = vadd.f32 %v1590, %v1591
    %1602 = vadd.xlane.f32.xlu0 %v1601
    %v1603 = vpop.xlane.xlu0 %1602
    %v1604 = vmul.f32 %v1594, 0.00390625
    %v1605 = vmul.f32 %v1597, 0.00390625
    %v1606 = vmul.f32 %v1600, 0.00390625
    %v1607 = vmul.f32 %v1603, 0.00390625
    %v1608 = vsub.f32 %v1584, %v1604
    %v1609 = vsub.f32 %v1585, %v1604
    %v1610 = vsub.f32 %v1586, %v1605
    %v1611 = vsub.f32 %v1587, %v1605
    %v1612 = vsub.f32 %v1588, %v1606
    %v1613 = vsub.f32 %v1589, %v1606
    %v1614 = vsub.f32 %v1590, %v1607
    %v1615 = vsub.f32 %v1591, %v1607
    %v1616 = vmul.f32 %v1608, %v1608
    %v1617 = vmul.f32 %v1609, %v1609
    %v1618 = vmul.f32 %v1610, %v1610
    %v1619 = vmul.f32 %v1611, %v1611
    %v1620 = vmul.f32 %v1612, %v1612
    %v1621 = vmul.f32 %v1613, %v1613
    %v1622 = vmul.f32 %v1614, %v1614
    %v1623 = vmul.f32 %v1615, %v1615
    %v1624 = vadd.f32 %v1616, %v1617
    %1625 = vadd.xlane.f32.xlu0 %v1624
    %v1626 = vpop.xlane.xlu0 %1625
    %v1627 = vadd.f32 %v1618, %v1619
    %1628 = vadd.xlane.f32.xlu0 %v1627
    %v1629 = vpop.xlane.xlu0 %1628
    %v1630 = vadd.f32 %v1620, %v1621
    %1631 = vadd.xlane.f32.xlu0 %v1630
    %v1632 = vpop.xlane.xlu0 %1631
    %v1633 = vadd.f32 %v1622, %v1623
    %1634 = vadd.xlane.f32.xlu0 %v1633
    %v1635 = vpop.xlane.xlu0 %1634
    %v1636 = vmul.f32 %v1626, 0.00390625
    %v1637 = vmul.f32 %v1629, 0.00390625
    %v1638 = vmul.f32 %v1632, 0.00390625
    %v1639 = vmul.f32 %v1635, 0.00390625
    %1640 = vset.pattern.permute.xlu0 105
    %1641 = vperm.xlu0 %1640, %v90
    %v1642 = vpop.permute.xlu0 %1641
    %1644 = vset.pattern.permute.xlu0 105
    %1645 = vperm.xlu0 %1644, %v91
    %v1646 = vpop.permute.xlu0 %1645
    %1648 = vset.pattern.permute.xlu0 105
    %1649 = vperm.xlu0 %1648, %v92
    %v1650 = vpop.permute.xlu0 %1649
    %1652 = vset.pattern.permute.xlu0 105
    %1653 = vperm.xlu0 %1652, %v93
    %v1654 = vpop.permute.xlu0 %1653
    %v1656 = vmul.f32 %v1642, %v1608
    %v1657 = vmul.f32 %v1642, %v1609
    %v1658 = vmul.f32 %v1646, %v1610
    %v1659 = vmul.f32 %v1646, %v1611
    %v1660 = vmul.f32 %v1650, %v1612
    %v1661 = vmul.f32 %v1650, %v1613
    %v1662 = vmul.f32 %v1654, %v1614
    %v1663 = vmul.f32 %v1654, %v1615
    %v1664 = vadd.f32 %v1636, 1e-05
    %v1665 = vadd.f32 %v1637, 1e-05
    %v1666 = vadd.f32 %v1638, 1e-05
    %v1667 = vadd.f32 %v1639, 1e-05
    %v1668 = vrsqrt.pop %v1664
    %v1669 = vrsqrt.pop %v1665
    %v1670 = vrsqrt.pop %v1666
    %v1671 = vrsqrt.pop %v1667
    %v1672 = vmul.f32 %v1656, %v1668
    %v1673 = vmul.f32 %v1657, %v1668
    %v1674 = vmul.f32 %v1658, %v1669
    %v1675 = vmul.f32 %v1659, %v1669
    %v1676 = vmul.f32 %v1660, %v1670
    %v1677 = vmul.f32 %v1661, %v1670
    %v1678 = vmul.f32 %v1662, %v1671
    %v1679 = vmul.f32 %v1663, %v1671
    %1680 = vset.pattern.permute.xlu0 109
    %1681 = vperm.xlu0 %1680, %v90
    %v1682 = vpop.permute.xlu0 %1681
    %1684 = vset.pattern.permute.xlu0 109
    %1685 = vperm.xlu0 %1684, %v91
    %v1686 = vpop.permute.xlu0 %1685
    %1688 = vset.pattern.permute.xlu0 109
    %1689 = vperm.xlu0 %1688, %v92
    %v1690 = vpop.permute.xlu0 %1689
    %1692 = vset.pattern.permute.xlu0 109
    %1693 = vperm.xlu0 %1692, %v93
    %v1694 = vpop.permute.xlu0 %1693
    %v1696 = vadd.f32 %v1672, %v1682
    %v1697 = vadd.f32 %v1673, %v1682
    %v1698 = vadd.f32 %v1674, %v1686
    %v1699 = vadd.f32 %v1675, %v1686
    %v1700 = vadd.f32 %v1676, %v1690
    %v1701 = vadd.f32 %v1677, %v1690
    %v1702 = vadd.f32 %v1678, %v1694
    %v1703 = vadd.f32 %v1679, %v1694
    %v1704 = vadd.f32 %v1696, %v861
    %v1705 = vadd.f32 %v1697, %v862
    %v1706 = vadd.f32 %v1698, %v863
    %v1707 = vadd.f32 %v1699, %v864
    %v1708 = vadd.f32 %v1700, %v865
    %v1709 = vadd.f32 %v1701, %v866
    %v1710 = vadd.f32 %v1702, %v867
    %v1711 = vadd.f32 %v1703, %v868
    %1712 = vset.pattern.permute.xlu0 102
    %1713 = vperm.xlu0 %1712, %v90
    %v1714 = vpop.permute.xlu0 %1713
    %1716 = vset.pattern.permute.xlu0 102
    %1717 = vperm.xlu0 %1716, %v91
    %v1718 = vpop.permute.xlu0 %1717
    %1720 = vset.pattern.permute.xlu0 102
    %1721 = vperm.xlu0 %1720, %v92
    %v1722 = vpop.permute.xlu0 %1721
    %1724 = vset.pattern.permute.xlu0 102
    %1725 = vperm.xlu0 %1724, %v93
    %v1726 = vpop.permute.xlu0 %1725
    %1728 = vrot.lane.b32.xlu0 %v90, 96
    %v1729 = vpop.permute.xlu0 %1728
    %1730 = vrot.lane.b32.xlu0 %v91, 96
    %v1731 = vpop.permute.xlu0 %1730
    %1732 = vrot.lane.b32.xlu0 %v92, 96
    %v1733 = vpop.permute.xlu0 %1732
    %1734 = vrot.lane.b32.xlu0 %v93, 96
    %v1735 = vpop.permute.xlu0 %1734
    %v1736 = vsel %vm885, %v1729, 0
    %v1738 = vsel %vm885, %v1731, 0
    %v1740 = vsel %vm885, %v1733, 0
    %v1742 = vsel %vm885, %v1735, 0
    %1744 = vmatprep.subr.mxu0 0.0
    %1745 = vmatpush1.msra.mxu0 0.0
    %1746 = vmatprep.subr.mxu0 0.0
    %1747 = vmatpush1.msra.mxu0 0.0
    %1748 = vmatprep.subr.mxu0 0.0
    %1749 = vmatpush1.msra.mxu0 0.0
    %1750 = vmatprep.subr.mxu0 0.0
    %1751 = vmatpush1.msra.mxu0 0.0
    %1752 = vmatprep.subr.mxu0 0.0
    %1753 = vmatpush1.msra.mxu0 0.0
    %1754 = vmatprep.subr.mxu0 0.0
    %1755 = vmatpush1.msra.mxu0 0.0
    %1756 = vmatprep.subr.mxu0 0.0
    %1757 = vmatpush1.msra.mxu0 0.0
    %1758 = vmatprep.subr.mxu0 0.0
    %1759 = vmatpush1.msra.mxu0 0.0
    %1760 = vmatprep.subr.mxu0 0.0
    %1761 = vmatpush1.msra.mxu0 0.0
    %1762 = vmatprep.subr.mxu0 0.0
    %1763 = vmatpush1.msra.mxu0 0.0
    %1764 = vmatprep.subr.mxu0 0.0
    %1765 = vmatpush1.msra.mxu0 0.0
    %1766 = vmatprep.subr.mxu0 0.0
    %1767 = vmatpush1.msra.mxu0 0.0
    %v1768 = vand.u32 %v1711, 4294901760
    %1769 = vmatprep.subr.mxu0 %v1768
    %v1770 = vand.u32 %v1710, 4294901760
    %1771 = vmatpush1.msra.mxu0 %v1770
    %v1772 = vand.u32 %v1709, 4294901760
    %1773 = vmatprep.subr.mxu0 %v1772
    %v1774 = vand.u32 %v1708, 4294901760
    %1775 = vmatpush1.msra.mxu0 %v1774
    %v1776 = vand.u32 %v1707, 4294901760
    %1777 = vmatprep.subr.mxu0 %v1776
    %v1778 = vand.u32 %v1706, 4294901760
    %1779 = vmatpush1.msra.mxu0 %v1778
    %v1780 = vand.u32 %v1705, 4294901760
    %1781 = vmatprep.subr.mxu0 %v1780
    %v1782 = vand.u32 %v1704, 4294901760
    %1783 = vmatpush1.msra.mxu0 %v1782
    %1784 = vmatprep.subr.mxu0 0.0
    %1785 = vmatpush2.msra.mxu0 0.0
    %1786 = vmatprep.subr.mxu0 0.0
    %1787 = vmatpush2.msra.mxu0 0.0
    %1788 = vmatprep.subr.mxu0 0.0
    %1789 = vmatpush2.msra.mxu0 0.0
    %1790 = vmatprep.subr.mxu0 0.0
    %1791 = vmatpush2.msra.mxu0 0.0
    %1792 = vmatprep.subr.mxu0 0.0
    %1793 = vmatpush2.msra.mxu0 0.0
    %1794 = vmatprep.subr.mxu0 0.0
    %1795 = vmatpush2.msra.mxu0 0.0
    %1796 = vmatprep.subr.mxu0 0.0
    %1797 = vmatpush2.msra.mxu0 0.0
    %1798 = vmatprep.subr.mxu0 0.0
    %1799 = vmatpush2.msra.mxu0 0.0
    %1800 = vmatprep.subr.mxu0 0.0
    %1801 = vmatpush2.msra.mxu0 0.0
    %1802 = vmatprep.subr.mxu0 0.0
    %1803 = vmatpush2.msra.mxu0 0.0
    %1804 = vmatprep.subr.mxu0 0.0
    %1805 = vmatpush2.msra.mxu0 0.0
    %1806 = vmatprep.subr.mxu0 0.0
    %1807 = vmatpush2.msra.mxu0 0.0
    %1808 = vmatprep.subr.mxu0 0.0
    %1809 = vmatpush2.msra.mxu0 0.0
    %1810 = vmatprep.subr.mxu0 0.0
    %1811 = vmatpush2.msra.mxu0 0.0
    %1812 = vmatprep.subr.mxu0 0.0
    %1813 = vmatpush2.msra.mxu0 0.0
    %1814 = vmatprep.subr.mxu0 0.0
    %1815 = vmatpush2.msra.mxu0 0.0
    %1816 = vmatprep.mubr.f32.mxu0 0.0
    %v1817 = vand.u32 %v1736, 4294901760
    %v1818 = vsub.f32 %v1736, %v1817
    %v1819 = vand.u32 %v1818, 4294901760
    %v1820 = vsub.f32 %v1818, %v1819
    %v1821 = vand.u32 %v1820, 4294901760
    %1822 = vmatmul.mubr.f32.gmra.mxu0 %v1821
    %v1823 = vpop.f32.mrf.mxu0
    %v1824 = vadd.f32 %v1714, %v1823
    %v1825 = vpop.f32.mrf.mxu0
    %v1826 = vadd.f32 %v1714, %v1825
    %1827 = vmatprep.mubr.f32.mxu0 0.0
    %v1828 = vand.u32 %v1738, 4294901760
    %v1829 = vsub.f32 %v1738, %v1828
    %v1830 = vand.u32 %v1829, 4294901760
    %v1831 = vsub.f32 %v1829, %v1830
    %v1832 = vand.u32 %v1831, 4294901760
    %1833 = vmatmul.mubr.f32.gmra.mxu0 %v1832
    %v1834 = vpop.f32.mrf.mxu0
    %v1835 = vadd.f32 %v1718, %v1834
    %v1836 = vpop.f32.mrf.mxu0
    %v1837 = vadd.f32 %v1718, %v1836
    %1838 = vmatprep.mubr.f32.mxu0 0.0
    %v1839 = vand.u32 %v1740, 4294901760
    %v1840 = vsub.f32 %v1740, %v1839
    %v1841 = vand.u32 %v1840, 4294901760
    %v1842 = vsub.f32 %v1840, %v1841
    %v1843 = vand.u32 %v1842, 4294901760
    %1844 = vmatmul.mubr.f32.gmra.mxu0 %v1843
    %v1845 = vpop.f32.mrf.mxu0
    %v1846 = vadd.f32 %v1722, %v1845
    %v1847 = vpop.f32.mrf.mxu0
    %v1848 = vadd.f32 %v1722, %v1847
    %1849 = vmatprep.mubr.f32.mxu0 0.0
    %v1850 = vand.u32 %v1742, 4294901760
    %v1851 = vsub.f32 %v1742, %v1850
    %v1852 = vand.u32 %v1851, 4294901760
    %v1853 = vsub.f32 %v1851, %v1852
    %v1854 = vand.u32 %v1853, 4294901760
    %1855 = vmatmul.mubr.f32.gmra.mxu0 %v1854
    %v1856 = vpop.f32.mrf.mxu0
    %v1857 = vadd.f32 %v1726, %v1856
    %v1858 = vpop.f32.mrf.mxu0
    %v1859 = vadd.f32 %v1726, %v1858
    %1860 = vdwg.mxu0
    %1861 = vmatprep.subr.mxu0 0.0
    %1862 = vmatpush1.msra.mxu0 0.0
    %1863 = vmatprep.subr.mxu0 0.0
    %1864 = vmatpush1.msra.mxu0 0.0
    %1865 = vmatprep.subr.mxu0 0.0
    %1866 = vmatpush1.msra.mxu0 0.0
    %1867 = vmatprep.subr.mxu0 0.0
    %1868 = vmatpush1.msra.mxu0 0.0
    %1869 = vmatprep.subr.mxu0 0.0
    %1870 = vmatpush1.msra.mxu0 0.0
    %1871 = vmatprep.subr.mxu0 0.0
    %1872 = vmatpush1.msra.mxu0 0.0
    %1873 = vmatprep.subr.mxu0 0.0
    %1874 = vmatpush1.msra.mxu0 0.0
    %1875 = vmatprep.subr.mxu0 0.0
    %1876 = vmatpush1.msra.mxu0 0.0
    %1877 = vmatprep.subr.mxu0 0.0
    %1878 = vmatpush1.msra.mxu0 0.0
    %1879 = vmatprep.subr.mxu0 0.0
    %1880 = vmatpush1.msra.mxu0 0.0
    %1881 = vmatprep.subr.mxu0 0.0
    %1882 = vmatpush1.msra.mxu0 0.0
    %1883 = vmatprep.subr.mxu0 0.0
    %1884 = vmatpush1.msra.mxu0 0.0
    %v1885 = vand.u32 %v1711, 4294901760
    %v1886 = vsub.f32 %v1711, %v1885
    %v1887 = vand.u32 %v1886, 4294901760
    %v1888 = vsub.f32 %v1886, %v1887
    %v1889 = vand.u32 %v1888, 4294901760
    %1890 = vmatprep.subr.mxu0 %v1889
    %v1891 = vand.u32 %v1710, 4294901760
    %v1892 = vsub.f32 %v1710, %v1891
    %v1893 = vand.u32 %v1892, 4294901760
    %v1894 = vsub.f32 %v1892, %v1893
    %v1895 = vand.u32 %v1894, 4294901760
    %1896 = vmatpush1.msra.mxu0 %v1895
    %v1897 = vand.u32 %v1709, 4294901760
    %v1898 = vsub.f32 %v1709, %v1897
    %v1899 = vand.u32 %v1898, 4294901760
    %v1900 = vsub.f32 %v1898, %v1899
    %v1901 = vand.u32 %v1900, 4294901760
    %1902 = vmatprep.subr.mxu0 %v1901
    %v1903 = vand.u32 %v1708, 4294901760
    %v1904 = vsub.f32 %v1708, %v1903
    %v1905 = vand.u32 %v1904, 4294901760
    %v1906 = vsub.f32 %v1904, %v1905
    %v1907 = vand.u32 %v1906, 4294901760
    %1908 = vmatpush1.msra.mxu0 %v1907
    %v1909 = vand.u32 %v1707, 4294901760
    %v1910 = vsub.f32 %v1707, %v1909
    %v1911 = vand.u32 %v1910, 4294901760
    %v1912 = vsub.f32 %v1910, %v1911
    %v1913 = vand.u32 %v1912, 4294901760
    %1914 = vmatprep.subr.mxu0 %v1913
    %v1915 = vand.u32 %v1706, 4294901760
    %v1916 = vsub.f32 %v1706, %v1915
    %v1917 = vand.u32 %v1916, 4294901760
    %v1918 = vsub.f32 %v1916, %v1917
    %v1919 = vand.u32 %v1918, 4294901760
    %1920 = vmatpush1.msra.mxu0 %v1919
    %v1921 = vand.u32 %v1705, 4294901760
    %v1922 = vsub.f32 %v1705, %v1921
    %v1923 = vand.u32 %v1922, 4294901760
    %v1924 = vsub.f32 %v1922, %v1923
    %v1925 = vand.u32 %v1924, 4294901760
    %1926 = vmatprep.subr.mxu0 %v1925
    %v1927 = vand.u32 %v1704, 4294901760
    %v1928 = vsub.f32 %v1704, %v1927
    %v1929 = vand.u32 %v1928, 4294901760
    %v1930 = vsub.f32 %v1928, %v1929
    %v1931 = vand.u32 %v1930, 4294901760
    %1932 = vmatpush1.msra.mxu0 %v1931
    %1933 = vmatprep.subr.mxu0 0.0
    %1934 = vmatpush2.msra.mxu0 0.0
    %1935 = vmatprep.subr.mxu0 0.0
    %1936 = vmatpush2.msra.mxu0 0.0
    %1937 = vmatprep.subr.mxu0 0.0
    %1938 = vmatpush2.msra.mxu0 0.0
    %1939 = vmatprep.subr.mxu0 0.0
    %1940 = vmatpush2.msra.mxu0 0.0
    %1941 = vmatprep.subr.mxu0 0.0
    %1942 = vmatpush2.msra.mxu0 0.0
    %1943 = vmatprep.subr.mxu0 0.0
    %1944 = vmatpush2.msra.mxu0 0.0
    %1945 = vmatprep.subr.mxu0 0.0
    %1946 = vmatpush2.msra.mxu0 0.0
    %1947 = vmatprep.subr.mxu0 0.0
    %1948 = vmatpush2.msra.mxu0 0.0
    %1949 = vmatprep.subr.mxu0 0.0
    %1950 = vmatpush2.msra.mxu0 0.0
    %1951 = vmatprep.subr.mxu0 0.0
    %1952 = vmatpush2.msra.mxu0 0.0
    %1953 = vmatprep.subr.mxu0 0.0
    %1954 = vmatpush2.msra.mxu0 0.0
    %1955 = vmatprep.subr.mxu0 0.0
    %1956 = vmatpush2.msra.mxu0 0.0
    %1957 = vmatprep.subr.mxu0 0.0
    %1958 = vmatpush2.msra.mxu0 0.0
    %1959 = vmatprep.subr.mxu0 0.0
    %1960 = vmatpush2.msra.mxu0 0.0
    %1961 = vmatprep.subr.mxu0 0.0
    %1962 = vmatpush2.msra.mxu0 0.0
    %1963 = vmatprep.subr.mxu0 0.0
    %1964 = vmatpush2.msra.mxu0 0.0
    %1965 = vmatprep.mubr.f32.mxu0 0.0
    %v1966 = vand.u32 %v1736, 4294901760
    %1967 = vmatmul.mubr.f32.gmra.mxu0 %v1966
    %v1968 = vpop.f32.mrf.mxu0
    %v1969 = vadd.f32 %v1824, %v1968
    %v1970 = vpop.f32.mrf.mxu0
    %v1971 = vadd.f32 %v1826, %v1970
    %1972 = vmatprep.mubr.f32.mxu0 0.0
    %v1973 = vand.u32 %v1738, 4294901760
    %1974 = vmatmul.mubr.f32.gmra.mxu0 %v1973
    %v1975 = vpop.f32.mrf.mxu0
    %v1976 = vadd.f32 %v1835, %v1975
    %v1977 = vpop.f32.mrf.mxu0
    %v1978 = vadd.f32 %v1837, %v1977
    %1979 = vmatprep.mubr.f32.mxu0 0.0
    %v1980 = vand.u32 %v1740, 4294901760
    %1981 = vmatmul.mubr.f32.gmra.mxu0 %v1980
    %v1982 = vpop.f32.mrf.mxu0
    %v1983 = vadd.f32 %v1846, %v1982
    %v1984 = vpop.f32.mrf.mxu0
    %v1985 = vadd.f32 %v1848, %v1984
    %1986 = vmatprep.mubr.f32.mxu0 0.0
    %v1987 = vand.u32 %v1742, 4294901760
    %1988 = vmatmul.mubr.f32.gmra.mxu0 %v1987
    %v1989 = vpop.f32.mrf.mxu0
    %v1990 = vadd.f32 %v1857, %v1989
    %v1991 = vpop.f32.mrf.mxu0
    %v1992 = vadd.f32 %v1859, %v1991
    %1993 = vdwg.mxu0
    %1994 = vmatprep.subr.mxu0 0.0
    %1995 = vmatpush1.msra.mxu0 0.0
    %1996 = vmatprep.subr.mxu0 0.0
    %1997 = vmatpush1.msra.mxu0 0.0
    %1998 = vmatprep.subr.mxu0 0.0
    %1999 = vmatpush1.msra.mxu0 0.0
    %2000 = vmatprep.subr.mxu0 0.0
    %2001 = vmatpush1.msra.mxu0 0.0
    %2002 = vmatprep.subr.mxu0 0.0
    %2003 = vmatpush1.msra.mxu0 0.0
    %2004 = vmatprep.subr.mxu0 0.0
    %2005 = vmatpush1.msra.mxu0 0.0
    %2006 = vmatprep.subr.mxu0 0.0
    %2007 = vmatpush1.msra.mxu0 0.0
    %2008 = vmatprep.subr.mxu0 0.0
    %2009 = vmatpush1.msra.mxu0 0.0
    %2010 = vmatprep.subr.mxu0 0.0
    %2011 = vmatpush1.msra.mxu0 0.0
    %2012 = vmatprep.subr.mxu0 0.0
    %2013 = vmatpush1.msra.mxu0 0.0
    %2014 = vmatprep.subr.mxu0 0.0
    %2015 = vmatpush1.msra.mxu0 0.0
    %2016 = vmatprep.subr.mxu0 0.0
    %2017 = vmatpush1.msra.mxu0 0.0
    %v2018 = vand.u32 %v1711, 4294901760
    %v2019 = vsub.f32 %v1711, %v2018
    %2020 = vmatprep.subr.mxu0 %v2019
    %v2021 = vand.u32 %v1710, 4294901760
    %v2022 = vsub.f32 %v1710, %v2021
    %2023 = vmatpush1.msra.mxu0 %v2022
    %v2024 = vand.u32 %v1709, 4294901760
    %v2025 = vsub.f32 %v1709, %v2024
    %2026 = vmatprep.subr.mxu0 %v2025
    %v2027 = vand.u32 %v1708, 4294901760
    %v2028 = vsub.f32 %v1708, %v2027
    %2029 = vmatpush1.msra.mxu0 %v2028
    %v2030 = vand.u32 %v1707, 4294901760
    %v2031 = vsub.f32 %v1707, %v2030
    %2032 = vmatprep.subr.mxu0 %v2031
    %v2033 = vand.u32 %v1706, 4294901760
    %v2034 = vsub.f32 %v1706, %v2033
    %2035 = vmatpush1.msra.mxu0 %v2034
    %v2036 = vand.u32 %v1705, 4294901760
    %v2037 = vsub.f32 %v1705, %v2036
    %2038 = vmatprep.subr.mxu0 %v2037
    %v2039 = vand.u32 %v1704, 4294901760
    %v2040 = vsub.f32 %v1704, %v2039
    %2041 = vmatpush1.msra.mxu0 %v2040
    %2042 = vmatprep.subr.mxu0 0.0
    %2043 = vmatpush2.msra.mxu0 0.0
    %2044 = vmatprep.subr.mxu0 0.0
    %2045 = vmatpush2.msra.mxu0 0.0
    %2046 = vmatprep.subr.mxu0 0.0
    %2047 = vmatpush2.msra.mxu0 0.0
    %2048 = vmatprep.subr.mxu0 0.0
    %2049 = vmatpush2.msra.mxu0 0.0
    %2050 = vmatprep.subr.mxu0 0.0
    %2051 = vmatpush2.msra.mxu0 0.0
    %2052 = vmatprep.subr.mxu0 0.0
    %2053 = vmatpush2.msra.mxu0 0.0
    %2054 = vmatprep.subr.mxu0 0.0
    %2055 = vmatpush2.msra.mxu0 0.0
    %2056 = vmatprep.subr.mxu0 0.0
    %2057 = vmatpush2.msra.mxu0 0.0
    %2058 = vmatprep.subr.mxu0 0.0
    %2059 = vmatpush2.msra.mxu0 0.0
    %2060 = vmatprep.subr.mxu0 0.0
    %2061 = vmatpush2.msra.mxu0 0.0
    %2062 = vmatprep.subr.mxu0 0.0
    %2063 = vmatpush2.msra.mxu0 0.0
    %2064 = vmatprep.subr.mxu0 0.0
    %2065 = vmatpush2.msra.mxu0 0.0
    %2066 = vmatprep.subr.mxu0 0.0
    %2067 = vmatpush2.msra.mxu0 0.0
    %2068 = vmatprep.subr.mxu0 0.0
    %2069 = vmatpush2.msra.mxu0 0.0
    %2070 = vmatprep.subr.mxu0 0.0
    %2071 = vmatpush2.msra.mxu0 0.0
    %2072 = vmatprep.subr.mxu0 0.0
    %2073 = vmatpush2.msra.mxu0 0.0
    %2074 = vmatprep.mubr.f32.mxu0 0.0
    %v2075 = vand.u32 %v1736, 4294901760
    %v2076 = vsub.f32 %v1736, %v2075
    %2077 = vmatmul.mubr.f32.gmra.mxu0 %v2076
    %v2078 = vpop.f32.mrf.mxu0
    %v2079 = vadd.f32 %v1969, %v2078
    %v2080 = vpop.f32.mrf.mxu0
    %v2081 = vadd.f32 %v1971, %v2080
    %2082 = vmatprep.mubr.f32.mxu0 0.0
    %v2083 = vand.u32 %v1738, 4294901760
    %v2084 = vsub.f32 %v1738, %v2083
    %2085 = vmatmul.mubr.f32.gmra.mxu0 %v2084
    %v2086 = vpop.f32.mrf.mxu0
    %v2087 = vadd.f32 %v1976, %v2086
    %v2088 = vpop.f32.mrf.mxu0
    %v2089 = vadd.f32 %v1978, %v2088
    %2090 = vmatprep.mubr.f32.mxu0 0.0
    %v2091 = vand.u32 %v1740, 4294901760
    %v2092 = vsub.f32 %v1740, %v2091
    %2093 = vmatmul.mubr.f32.gmra.mxu0 %v2092
    %v2094 = vpop.f32.mrf.mxu0
    %v2095 = vadd.f32 %v1983, %v2094
    %v2096 = vpop.f32.mrf.mxu0
    %v2097 = vadd.f32 %v1985, %v2096
    %2098 = vmatprep.mubr.f32.mxu0 0.0
    %v2099 = vand.u32 %v1742, 4294901760
    %v2100 = vsub.f32 %v1742, %v2099
    %2101 = vmatmul.mubr.f32.gmra.mxu0 %v2100
    %v2102 = vpop.f32.mrf.mxu0
    %v2103 = vadd.f32 %v1990, %v2102
    %v2104 = vpop.f32.mrf.mxu0
    %v2105 = vadd.f32 %v1992, %v2104
    %2106 = vdwg.mxu0
    %2107 = vmatprep.subr.mxu0 0.0
    %2108 = vmatpush1.msra.mxu0 0.0
    %2109 = vmatprep.subr.mxu0 0.0
    %2110 = vmatpush1.msra.mxu0 0.0
    %2111 = vmatprep.subr.mxu0 0.0
    %2112 = vmatpush1.msra.mxu0 0.0
    %2113 = vmatprep.subr.mxu0 0.0
    %2114 = vmatpush1.msra.mxu0 0.0
    %2115 = vmatprep.subr.mxu0 0.0
    %2116 = vmatpush1.msra.mxu0 0.0
    %2117 = vmatprep.subr.mxu0 0.0
    %2118 = vmatpush1.msra.mxu0 0.0
    %2119 = vmatprep.subr.mxu0 0.0
    %2120 = vmatpush1.msra.mxu0 0.0
    %2121 = vmatprep.subr.mxu0 0.0
    %2122 = vmatpush1.msra.mxu0 0.0
    %2123 = vmatprep.subr.mxu0 0.0
    %2124 = vmatpush1.msra.mxu0 0.0
    %2125 = vmatprep.subr.mxu0 0.0
    %2126 = vmatpush1.msra.mxu0 0.0
    %2127 = vmatprep.subr.mxu0 0.0
    %2128 = vmatpush1.msra.mxu0 0.0
    %2129 = vmatprep.subr.mxu0 0.0
    %2130 = vmatpush1.msra.mxu0 0.0
    %v2131 = vand.u32 %v1711, 4294901760
    %2132 = vmatprep.subr.mxu0 %v2131
    %v2133 = vand.u32 %v1710, 4294901760
    %2134 = vmatpush1.msra.mxu0 %v2133
    %v2135 = vand.u32 %v1709, 4294901760
    %2136 = vmatprep.subr.mxu0 %v2135
    %v2137 = vand.u32 %v1708, 4294901760
    %2138 = vmatpush1.msra.mxu0 %v2137
    %v2139 = vand.u32 %v1707, 4294901760
    %2140 = vmatprep.subr.mxu0 %v2139
    %v2141 = vand.u32 %v1706, 4294901760
    %2142 = vmatpush1.msra.mxu0 %v2141
    %v2143 = vand.u32 %v1705, 4294901760
    %2144 = vmatprep.subr.mxu0 %v2143
    %v2145 = vand.u32 %v1704, 4294901760
    %2146 = vmatpush1.msra.mxu0 %v2145
    %2147 = vmatprep.subr.mxu0 0.0
    %2148 = vmatpush2.msra.mxu0 0.0
    %2149 = vmatprep.subr.mxu0 0.0
    %2150 = vmatpush2.msra.mxu0 0.0
    %2151 = vmatprep.subr.mxu0 0.0
    %2152 = vmatpush2.msra.mxu0 0.0
    %2153 = vmatprep.subr.mxu0 0.0
    %2154 = vmatpush2.msra.mxu0 0.0
    %2155 = vmatprep.subr.mxu0 0.0
    %2156 = vmatpush2.msra.mxu0 0.0
    %2157 = vmatprep.subr.mxu0 0.0
    %2158 = vmatpush2.msra.mxu0 0.0
    %2159 = vmatprep.subr.mxu0 0.0
    %2160 = vmatpush2.msra.mxu0 0.0
    %2161 = vmatprep.subr.mxu0 0.0
    %2162 = vmatpush2.msra.mxu0 0.0
    %2163 = vmatprep.subr.mxu0 0.0
    %2164 = vmatpush2.msra.mxu0 0.0
    %2165 = vmatprep.subr.mxu0 0.0
    %2166 = vmatpush2.msra.mxu0 0.0
    %2167 = vmatprep.subr.mxu0 0.0
    %2168 = vmatpush2.msra.mxu0 0.0
    %2169 = vmatprep.subr.mxu0 0.0
    %2170 = vmatpush2.msra.mxu0 0.0
    %2171 = vmatprep.subr.mxu0 0.0
    %2172 = vmatpush2.msra.mxu0 0.0
    %2173 = vmatprep.subr.mxu0 0.0
    %2174 = vmatpush2.msra.mxu0 0.0
    %2175 = vmatprep.subr.mxu0 0.0
    %2176 = vmatpush2.msra.mxu0 0.0
    %2177 = vmatprep.subr.mxu0 0.0
    %2178 = vmatpush2.msra.mxu0 0.0
    %2179 = vmatprep.mubr.f32.mxu0 0.0
    %v2180 = vand.u32 %v1736, 4294901760
    %v2181 = vsub.f32 %v1736, %v2180
    %v2182 = vand.u32 %v2181, 4294901760
    %2183 = vmatmul.mubr.f32.gmra.mxu0 %v2182
    %v2184 = vpop.f32.mrf.mxu0
    %v2185 = vadd.f32 %v2079, %v2184
    %v2186 = vpop.f32.mrf.mxu0
    %v2187 = vadd.f32 %v2081, %v2186
    %2188 = vmatprep.mubr.f32.mxu0 0.0
    %v2189 = vand.u32 %v1738, 4294901760
    %v2190 = vsub.f32 %v1738, %v2189
    %v2191 = vand.u32 %v2190, 4294901760
    %2192 = vmatmul.mubr.f32.gmra.mxu0 %v2191
    %v2193 = vpop.f32.mrf.mxu0
    %v2194 = vadd.f32 %v2087, %v2193
    %v2195 = vpop.f32.mrf.mxu0
    %v2196 = vadd.f32 %v2089, %v2195
    %2197 = vmatprep.mubr.f32.mxu0 0.0
    %v2198 = vand.u32 %v1740, 4294901760
    %v2199 = vsub.f32 %v1740, %v2198
    %v2200 = vand.u32 %v2199, 4294901760
    %2201 = vmatmul.mubr.f32.gmra.mxu0 %v2200
    %v2202 = vpop.f32.mrf.mxu0
    %v2203 = vadd.f32 %v2095, %v2202
    %v2204 = vpop.f32.mrf.mxu0
    %v2205 = vadd.f32 %v2097, %v2204
    %2206 = vmatprep.mubr.f32.mxu0 0.0
    %v2207 = vand.u32 %v1742, 4294901760
    %v2208 = vsub.f32 %v1742, %v2207
    %v2209 = vand.u32 %v2208, 4294901760
    %2210 = vmatmul.mubr.f32.gmra.mxu0 %v2209
    %v2211 = vpop.f32.mrf.mxu0
    %v2212 = vadd.f32 %v2103, %v2211
    %v2213 = vpop.f32.mrf.mxu0
    %v2214 = vadd.f32 %v2105, %v2213
    %2215 = vdwg.mxu0
    %2216 = vmatprep.subr.mxu0 0.0
    %2217 = vmatpush1.msra.mxu0 0.0
    %2218 = vmatprep.subr.mxu0 0.0
    %2219 = vmatpush1.msra.mxu0 0.0
    %2220 = vmatprep.subr.mxu0 0.0
    %2221 = vmatpush1.msra.mxu0 0.0
    %2222 = vmatprep.subr.mxu0 0.0
    %2223 = vmatpush1.msra.mxu0 0.0
    %2224 = vmatprep.subr.mxu0 0.0
    %2225 = vmatpush1.msra.mxu0 0.0
    %2226 = vmatprep.subr.mxu0 0.0
    %2227 = vmatpush1.msra.mxu0 0.0
    %2228 = vmatprep.subr.mxu0 0.0
    %2229 = vmatpush1.msra.mxu0 0.0
    %2230 = vmatprep.subr.mxu0 0.0
    %2231 = vmatpush1.msra.mxu0 0.0
    %2232 = vmatprep.subr.mxu0 0.0
    %2233 = vmatpush1.msra.mxu0 0.0
    %2234 = vmatprep.subr.mxu0 0.0
    %2235 = vmatpush1.msra.mxu0 0.0
    %2236 = vmatprep.subr.mxu0 0.0
    %2237 = vmatpush1.msra.mxu0 0.0
    %2238 = vmatprep.subr.mxu0 0.0
    %2239 = vmatpush1.msra.mxu0 0.0
    %v2240 = vand.u32 %v1711, 4294901760
    %v2241 = vsub.f32 %v1711, %v2240
    %v2242 = vand.u32 %v2241, 4294901760
    %2243 = vmatprep.subr.mxu0 %v2242
    %v2244 = vand.u32 %v1710, 4294901760
    %v2245 = vsub.f32 %v1710, %v2244
    %v2246 = vand.u32 %v2245, 4294901760
    %2247 = vmatpush1.msra.mxu0 %v2246
    %v2248 = vand.u32 %v1709, 4294901760
    %v2249 = vsub.f32 %v1709, %v2248
    %v2250 = vand.u32 %v2249, 4294901760
    %2251 = vmatprep.subr.mxu0 %v2250
    %v2252 = vand.u32 %v1708, 4294901760
    %v2253 = vsub.f32 %v1708, %v2252
    %v2254 = vand.u32 %v2253, 4294901760
    %2255 = vmatpush1.msra.mxu0 %v2254
    %v2256 = vand.u32 %v1707, 4294901760
    %v2257 = vsub.f32 %v1707, %v2256
    %v2258 = vand.u32 %v2257, 4294901760
    %2259 = vmatprep.subr.mxu0 %v2258
    %v2260 = vand.u32 %v1706, 4294901760
    %v2261 = vsub.f32 %v1706, %v2260
    %v2262 = vand.u32 %v2261, 4294901760
    %2263 = vmatpush1.msra.mxu0 %v2262
    %v2264 = vand.u32 %v1705, 4294901760
    %v2265 = vsub.f32 %v1705, %v2264
    %v2266 = vand.u32 %v2265, 4294901760
    %2267 = vmatprep.subr.mxu0 %v2266
    %v2268 = vand.u32 %v1704, 4294901760
    %v2269 = vsub.f32 %v1704, %v2268
    %v2270 = vand.u32 %v2269, 4294901760
    %2271 = vmatpush1.msra.mxu0 %v2270
    %2272 = vmatprep.subr.mxu0 0.0
    %2273 = vmatpush2.msra.mxu0 0.0
    %2274 = vmatprep.subr.mxu0 0.0
    %2275 = vmatpush2.msra.mxu0 0.0
    %2276 = vmatprep.subr.mxu0 0.0
    %2277 = vmatpush2.msra.mxu0 0.0
    %2278 = vmatprep.subr.mxu0 0.0
    %2279 = vmatpush2.msra.mxu0 0.0
    %2280 = vmatprep.subr.mxu0 0.0
    %2281 = vmatpush2.msra.mxu0 0.0
    %2282 = vmatprep.subr.mxu0 0.0
    %2283 = vmatpush2.msra.mxu0 0.0
    %2284 = vmatprep.subr.mxu0 0.0
    %2285 = vmatpush2.msra.mxu0 0.0
    %2286 = vmatprep.subr.mxu0 0.0
    %2287 = vmatpush2.msra.mxu0 0.0
    %2288 = vmatprep.subr.mxu0 0.0
    %2289 = vmatpush2.msra.mxu0 0.0
    %2290 = vmatprep.subr.mxu0 0.0
    %2291 = vmatpush2.msra.mxu0 0.0
    %2292 = vmatprep.subr.mxu0 0.0
    %2293 = vmatpush2.msra.mxu0 0.0
    %2294 = vmatprep.subr.mxu0 0.0
    %2295 = vmatpush2.msra.mxu0 0.0
    %2296 = vmatprep.subr.mxu0 0.0
    %2297 = vmatpush2.msra.mxu0 0.0
    %2298 = vmatprep.subr.mxu0 0.0
    %2299 = vmatpush2.msra.mxu0 0.0
    %2300 = vmatprep.subr.mxu0 0.0
    %2301 = vmatpush2.msra.mxu0 0.0
    %2302 = vmatprep.subr.mxu0 0.0
    %2303 = vmatpush2.msra.mxu0 0.0
    %2304 = vmatprep.mubr.f32.mxu0 0.0
    %v2305 = vand.u32 %v1736, 4294901760
    %2306 = vmatmul.mubr.f32.gmra.mxu0 %v2305
    %v2307 = vpop.f32.mrf.mxu0
    %v2308 = vadd.f32 %v2185, %v2307
    %v2309 = vpop.f32.mrf.mxu0
    %v2310 = vadd.f32 %v2187, %v2309
    %2311 = vmatprep.mubr.f32.mxu0 0.0
    %v2312 = vand.u32 %v1738, 4294901760
    %2313 = vmatmul.mubr.f32.gmra.mxu0 %v2312
    %v2314 = vpop.f32.mrf.mxu0
    %v2315 = vadd.f32 %v2194, %v2314
    %v2316 = vpop.f32.mrf.mxu0
    %v2317 = vadd.f32 %v2196, %v2316
    %2318 = vmatprep.mubr.f32.mxu0 0.0
    %v2319 = vand.u32 %v1740, 4294901760
    %2320 = vmatmul.mubr.f32.gmra.mxu0 %v2319
    %v2321 = vpop.f32.mrf.mxu0
    %v2322 = vadd.f32 %v2203, %v2321
    %v2323 = vpop.f32.mrf.mxu0
    %v2324 = vadd.f32 %v2205, %v2323
    %2325 = vmatprep.mubr.f32.mxu0 0.0
    %v2326 = vand.u32 %v1742, 4294901760
    %2327 = vmatmul.mubr.f32.gmra.mxu0 %v2326
    %v2328 = vpop.f32.mrf.mxu0
    %v2329 = vadd.f32 %v2212, %v2328
    %v2330 = vpop.f32.mrf.mxu0
    %v2331 = vadd.f32 %v2214, %v2330
    %2332 = vdwg.mxu0
    %2333 = vmatprep.subr.mxu0 0.0
    %2334 = vmatpush1.msra.mxu0 0.0
    %2335 = vmatprep.subr.mxu0 0.0
    %2336 = vmatpush1.msra.mxu0 0.0
    %2337 = vmatprep.subr.mxu0 0.0
    %2338 = vmatpush1.msra.mxu0 0.0
    %2339 = vmatprep.subr.mxu0 0.0
    %2340 = vmatpush1.msra.mxu0 0.0
    %2341 = vmatprep.subr.mxu0 0.0
    %2342 = vmatpush1.msra.mxu0 0.0
    %2343 = vmatprep.subr.mxu0 0.0
    %2344 = vmatpush1.msra.mxu0 0.0
    %2345 = vmatprep.subr.mxu0 0.0
    %2346 = vmatpush1.msra.mxu0 0.0
    %2347 = vmatprep.subr.mxu0 0.0
    %2348 = vmatpush1.msra.mxu0 0.0
    %2349 = vmatprep.subr.mxu0 0.0
    %2350 = vmatpush1.msra.mxu0 0.0
    %2351 = vmatprep.subr.mxu0 0.0
    %2352 = vmatpush1.msra.mxu0 0.0
    %2353 = vmatprep.subr.mxu0 0.0
    %2354 = vmatpush1.msra.mxu0 0.0
    %2355 = vmatprep.subr.mxu0 0.0
    %2356 = vmatpush1.msra.mxu0 0.0
    %v2357 = vand.u32 %v1711, 4294901760
    %2358 = vmatprep.subr.mxu0 %v2357
    %v2359 = vand.u32 %v1710, 4294901760
    %2360 = vmatpush1.msra.mxu0 %v2359
    %v2361 = vand.u32 %v1709, 4294901760
    %2362 = vmatprep.subr.mxu0 %v2361
    %v2363 = vand.u32 %v1708, 4294901760
    %2364 = vmatpush1.msra.mxu0 %v2363
    %v2365 = vand.u32 %v1707, 4294901760
    %2366 = vmatprep.subr.mxu0 %v2365
    %v2367 = vand.u32 %v1706, 4294901760
    %2368 = vmatpush1.msra.mxu0 %v2367
    %v2369 = vand.u32 %v1705, 4294901760
    %2370 = vmatprep.subr.mxu0 %v2369
    %v2371 = vand.u32 %v1704, 4294901760
    %2372 = vmatpush1.msra.mxu0 %v2371
    %2373 = vmatprep.subr.mxu0 0.0
    %2374 = vmatpush2.msra.mxu0 0.0
    %2375 = vmatprep.subr.mxu0 0.0
    %2376 = vmatpush2.msra.mxu0 0.0
    %2377 = vmatprep.subr.mxu0 0.0
    %2378 = vmatpush2.msra.mxu0 0.0
    %2379 = vmatprep.subr.mxu0 0.0
    %2380 = vmatpush2.msra.mxu0 0.0
    %2381 = vmatprep.subr.mxu0 0.0
    %2382 = vmatpush2.msra.mxu0 0.0
    %2383 = vmatprep.subr.mxu0 0.0
    %2384 = vmatpush2.msra.mxu0 0.0
    %2385 = vmatprep.subr.mxu0 0.0
    %2386 = vmatpush2.msra.mxu0 0.0
    %2387 = vmatprep.subr.mxu0 0.0
    %2388 = vmatpush2.msra.mxu0 0.0
    %2389 = vmatprep.subr.mxu0 0.0
    %2390 = vmatpush2.msra.mxu0 0.0
    %2391 = vmatprep.subr.mxu0 0.0
    %2392 = vmatpush2.msra.mxu0 0.0
    %2393 = vmatprep.subr.mxu0 0.0
    %2394 = vmatpush2.msra.mxu0 0.0
    %2395 = vmatprep.subr.mxu0 0.0
    %2396 = vmatpush2.msra.mxu0 0.0
    %2397 = vmatprep.subr.mxu0 0.0
    %2398 = vmatpush2.msra.mxu0 0.0
    %2399 = vmatprep.subr.mxu0 0.0
    %2400 = vmatpush2.msra.mxu0 0.0
    %2401 = vmatprep.subr.mxu0 0.0
    %2402 = vmatpush2.msra.mxu0 0.0
    %2403 = vmatprep.subr.mxu0 0.0
    %2404 = vmatpush2.msra.mxu0 0.0
    %2405 = vmatprep.mubr.f32.mxu0 0.0
    %v2406 = vand.u32 %v1736, 4294901760
    %2407 = vmatmul.mubr.f32.gmra.mxu0 %v2406
    %v2408 = vpop.f32.mrf.mxu0
    %v2409 = vadd.f32 %v2308, %v2408
    %v2410 = vpop.f32.mrf.mxu0
    %v2411 = vadd.f32 %v2310, %v2410
    %2412 = vmatprep.mubr.f32.mxu0 0.0
    %v2413 = vand.u32 %v1738, 4294901760
    %2414 = vmatmul.mubr.f32.gmra.mxu0 %v2413
    %v2415 = vpop.f32.mrf.mxu0
    %v2416 = vadd.f32 %v2315, %v2415
    %v2417 = vpop.f32.mrf.mxu0
    %v2418 = vadd.f32 %v2317, %v2417
    %2419 = vmatprep.mubr.f32.mxu0 0.0
    %v2420 = vand.u32 %v1740, 4294901760
    %2421 = vmatmul.mubr.f32.gmra.mxu0 %v2420
    %v2422 = vpop.f32.mrf.mxu0
    %v2423 = vadd.f32 %v2322, %v2422
    %v2424 = vpop.f32.mrf.mxu0
    %v2425 = vadd.f32 %v2324, %v2424
    %2426 = vmatprep.mubr.f32.mxu0 0.0
    %v2427 = vand.u32 %v1742, 4294901760
    %2428 = vmatmul.mubr.f32.gmra.mxu0 %v2427
    %v2429 = vpop.f32.mrf.mxu0
    %v2430 = vadd.f32 %v2329, %v2429
    %v2431 = vpop.f32.mrf.mxu0
    %v2432 = vadd.f32 %v2331, %v2431
    %2433 = vdwg.mxu0
    %v2434 = vtanh.pop %v2409
    %v2435 = vtanh.pop %v2411
    %v2436 = vtanh.pop %v2416
    %v2437 = vtanh.pop %v2418
    %v2438 = vtanh.pop %v2423
    %v2439 = vtanh.pop %v2425
    %v2440 = vtanh.pop %v2430
    %v2441 = vtanh.pop %v2432
    %v2442 = vadd.f32 %v2434, %v2435
    %2443 = vadd.xlane.f32.xlu0 %v2442
    %v2444 = vpop.xlane.xlu0 %2443
    %v2445 = vadd.f32 %v2436, %v2437
    %2446 = vadd.xlane.f32.xlu0 %v2445
    %v2447 = vpop.xlane.xlu0 %2446
    %v2448 = vadd.f32 %v2438, %v2439
    %2449 = vadd.xlane.f32.xlu0 %v2448
    %v2450 = vpop.xlane.xlu0 %2449
    %v2451 = vadd.f32 %v2440, %v2441
    %2452 = vadd.xlane.f32.xlu0 %v2451
    %v2453 = vpop.xlane.xlu0 %2452
    %v2454 = vmul.f32 %v2444, 0.00390625
    %v2455 = vmul.f32 %v2447, 0.00390625
    %v2456 = vmul.f32 %v2450, 0.00390625
    %v2457 = vmul.f32 %v2453, 0.00390625
    %v2458 = vsub.f32 %v2434, %v2454
    %v2459 = vsub.f32 %v2435, %v2454
    %v2460 = vsub.f32 %v2436, %v2455
    %v2461 = vsub.f32 %v2437, %v2455
    %v2462 = vsub.f32 %v2438, %v2456
    %v2463 = vsub.f32 %v2439, %v2456
    %v2464 = vsub.f32 %v2440, %v2457
    %v2465 = vsub.f32 %v2441, %v2457
    %v2466 = vmul.f32 %v2458, %v2458
    %v2467 = vmul.f32 %v2459, %v2459
    %v2468 = vmul.f32 %v2460, %v2460
    %v2469 = vmul.f32 %v2461, %v2461
    %v2470 = vmul.f32 %v2462, %v2462
    %v2471 = vmul.f32 %v2463, %v2463
    %v2472 = vmul.f32 %v2464, %v2464
    %v2473 = vmul.f32 %v2465, %v2465
    %v2474 = vadd.f32 %v2466, %v2467
    %2475 = vadd.xlane.f32.xlu0 %v2474
    %v2476 = vpop.xlane.xlu0 %2475
    %v2477 = vadd.f32 %v2468, %v2469
    %2478 = vadd.xlane.f32.xlu0 %v2477
    %v2479 = vpop.xlane.xlu0 %2478
    %v2480 = vadd.f32 %v2470, %v2471
    %2481 = vadd.xlane.f32.xlu0 %v2480
    %v2482 = vpop.xlane.xlu0 %2481
    %v2483 = vadd.f32 %v2472, %v2473
    %2484 = vadd.xlane.f32.xlu0 %v2483
    %v2485 = vpop.xlane.xlu0 %2484
    %v2486 = vmul.f32 %v2476, 0.00390625
    %v2487 = vmul.f32 %v2479, 0.00390625
    %v2488 = vmul.f32 %v2482, 0.00390625
    %v2489 = vmul.f32 %v2485, 0.00390625
    %2490 = vset.pattern.permute.xlu0 106
    %2491 = vperm.xlu0 %2490, %v90
    %v2492 = vpop.permute.xlu0 %2491
    %2494 = vset.pattern.permute.xlu0 106
    %2495 = vperm.xlu0 %2494, %v91
    %v2496 = vpop.permute.xlu0 %2495
    %2498 = vset.pattern.permute.xlu0 106
    %2499 = vperm.xlu0 %2498, %v92
    %v2500 = vpop.permute.xlu0 %2499
    %2502 = vset.pattern.permute.xlu0 106
    %2503 = vperm.xlu0 %2502, %v93
    %v2504 = vpop.permute.xlu0 %2503
    %v2506 = vmul.f32 %v2492, %v2458
    %v2507 = vmul.f32 %v2492, %v2459
    %v2508 = vmul.f32 %v2496, %v2460
    %v2509 = vmul.f32 %v2496, %v2461
    %v2510 = vmul.f32 %v2500, %v2462
    %v2511 = vmul.f32 %v2500, %v2463
    %v2512 = vmul.f32 %v2504, %v2464
    %v2513 = vmul.f32 %v2504, %v2465
    %v2514 = vadd.f32 %v2486, 1e-05
    %v2515 = vadd.f32 %v2487, 1e-05
    %v2516 = vadd.f32 %v2488, 1e-05
    %v2517 = vadd.f32 %v2489, 1e-05
    %v2518 = vrsqrt.pop %v2514
    %v2519 = vrsqrt.pop %v2515
    %v2520 = vrsqrt.pop %v2516
    %v2521 = vrsqrt.pop %v2517
    %v2522 = vmul.f32 %v2506, %v2518
    %v2523 = vmul.f32 %v2507, %v2518
    %v2524 = vmul.f32 %v2508, %v2519
    %v2525 = vmul.f32 %v2509, %v2519
    %v2526 = vmul.f32 %v2510, %v2520
    %v2527 = vmul.f32 %v2511, %v2520
    %v2528 = vmul.f32 %v2512, %v2521
    %v2529 = vmul.f32 %v2513, %v2521
    %2530 = vset.pattern.permute.xlu0 110
    %2531 = vperm.xlu0 %2530, %v90
    %v2532 = vpop.permute.xlu0 %2531
    %2534 = vset.pattern.permute.xlu0 110
    %2535 = vperm.xlu0 %2534, %v91
    %v2536 = vpop.permute.xlu0 %2535
    %2538 = vset.pattern.permute.xlu0 110
    %2539 = vperm.xlu0 %2538, %v92
    %v2540 = vpop.permute.xlu0 %2539
    %2542 = vset.pattern.permute.xlu0 110
    %2543 = vperm.xlu0 %2542, %v93
    %v2544 = vpop.permute.xlu0 %2543
    %v2546 = vadd.f32 %v2522, %v2532
    %v2547 = vadd.f32 %v2523, %v2532
    %v2548 = vadd.f32 %v2524, %v2536
    %v2549 = vadd.f32 %v2525, %v2536
    %v2550 = vadd.f32 %v2526, %v2540
    %v2551 = vadd.f32 %v2527, %v2540
    %v2552 = vadd.f32 %v2528, %v2544
    %v2553 = vadd.f32 %v2529, %v2544
    %v2554 = vadd.f32 %v2546, %v1704
    %v2555 = vadd.f32 %v2547, %v1705
    %v2556 = vadd.f32 %v2548, %v1706
    %v2557 = vadd.f32 %v2549, %v1707
    %v2558 = vadd.f32 %v2550, %v1708
    %v2559 = vadd.f32 %v2551, %v1709
    %v2560 = vadd.f32 %v2552, %v1710
    %v2561 = vadd.f32 %v2553, %v1711
    %2562 = vset.pattern.permute.xlu0 103
    %2563 = vperm.xlu0 %2562, %v90
    %v2564 = vpop.permute.xlu0 %2563
    %2566 = vset.pattern.permute.xlu0 103
    %2567 = vperm.xlu0 %2566, %v91
    %v2568 = vpop.permute.xlu0 %2567
    %2570 = vset.pattern.permute.xlu0 103
    %2571 = vperm.xlu0 %2570, %v92
    %v2572 = vpop.permute.xlu0 %2571
    %2574 = vset.pattern.permute.xlu0 103
    %2575 = vperm.xlu0 %2574, %v93
    %v2576 = vpop.permute.xlu0 %2575
    %2578 = vrot.lane.b32.xlu0 %v90, 64
    %v2579 = vpop.permute.xlu0 %2578
    %2580 = vrot.lane.b32.xlu0 %v91, 64
    %v2581 = vpop.permute.xlu0 %2580
    %2582 = vrot.lane.b32.xlu0 %v92, 64
    %v2583 = vpop.permute.xlu0 %2582
    %2584 = vrot.lane.b32.xlu0 %v93, 64
    %v2585 = vpop.permute.xlu0 %2584
    %v2586 = vsel %vm885, %v2579, 0
    %v2588 = vsel %vm885, %v2581, 0
    %v2590 = vsel %vm885, %v2583, 0
    %v2592 = vsel %vm885, %v2585, 0
    %2594 = vmatprep.subr.mxu0 0.0
    %2595 = vmatpush1.msra.mxu0 0.0
    %2596 = vmatprep.subr.mxu0 0.0
    %2597 = vmatpush1.msra.mxu0 0.0
    %2598 = vmatprep.subr.mxu0 0.0
    %2599 = vmatpush1.msra.mxu0 0.0
    %2600 = vmatprep.subr.mxu0 0.0
    %2601 = vmatpush1.msra.mxu0 0.0
    %2602 = vmatprep.subr.mxu0 0.0
    %2603 = vmatpush1.msra.mxu0 0.0
    %2604 = vmatprep.subr.mxu0 0.0
    %2605 = vmatpush1.msra.mxu0 0.0
    %2606 = vmatprep.subr.mxu0 0.0
    %2607 = vmatpush1.msra.mxu0 0.0
    %2608 = vmatprep.subr.mxu0 0.0
    %2609 = vmatpush1.msra.mxu0 0.0
    %2610 = vmatprep.subr.mxu0 0.0
    %2611 = vmatpush1.msra.mxu0 0.0
    %2612 = vmatprep.subr.mxu0 0.0
    %2613 = vmatpush1.msra.mxu0 0.0
    %2614 = vmatprep.subr.mxu0 0.0
    %2615 = vmatpush1.msra.mxu0 0.0
    %2616 = vmatprep.subr.mxu0 0.0
    %2617 = vmatpush1.msra.mxu0 0.0
    %v2618 = vand.u32 %v2561, 4294901760
    %2619 = vmatprep.subr.mxu0 %v2618
    %v2620 = vand.u32 %v2560, 4294901760
    %2621 = vmatpush1.msra.mxu0 %v2620
    %v2622 = vand.u32 %v2559, 4294901760
    %2623 = vmatprep.subr.mxu0 %v2622
    %v2624 = vand.u32 %v2558, 4294901760
    %2625 = vmatpush1.msra.mxu0 %v2624
    %v2626 = vand.u32 %v2557, 4294901760
    %2627 = vmatprep.subr.mxu0 %v2626
    %v2628 = vand.u32 %v2556, 4294901760
    %2629 = vmatpush1.msra.mxu0 %v2628
    %v2630 = vand.u32 %v2555, 4294901760
    %2631 = vmatprep.subr.mxu0 %v2630
    %v2632 = vand.u32 %v2554, 4294901760
    %2633 = vmatpush1.msra.mxu0 %v2632
    %2634 = vmatprep.subr.mxu0 0.0
    %2635 = vmatpush2.msra.mxu0 0.0
    %2636 = vmatprep.subr.mxu0 0.0
    %2637 = vmatpush2.msra.mxu0 0.0
    %2638 = vmatprep.subr.mxu0 0.0
    %2639 = vmatpush2.msra.mxu0 0.0
    %2640 = vmatprep.subr.mxu0 0.0
    %2641 = vmatpush2.msra.mxu0 0.0
    %2642 = vmatprep.subr.mxu0 0.0
    %2643 = vmatpush2.msra.mxu0 0.0
    %2644 = vmatprep.subr.mxu0 0.0
    %2645 = vmatpush2.msra.mxu0 0.0
    %2646 = vmatprep.subr.mxu0 0.0
    %2647 = vmatpush2.msra.mxu0 0.0
    %2648 = vmatprep.subr.mxu0 0.0
    %2649 = vmatpush2.msra.mxu0 0.0
    %2650 = vmatprep.subr.mxu0 0.0
    %2651 = vmatpush2.msra.mxu0 0.0
    %2652 = vmatprep.subr.mxu0 0.0
    %2653 = vmatpush2.msra.mxu0 0.0
    %2654 = vmatprep.subr.mxu0 0.0
    %2655 = vmatpush2.msra.mxu0 0.0
    %2656 = vmatprep.subr.mxu0 0.0
    %2657 = vmatpush2.msra.mxu0 0.0
    %2658 = vmatprep.subr.mxu0 0.0
    %2659 = vmatpush2.msra.mxu0 0.0
    %2660 = vmatprep.subr.mxu0 0.0
    %2661 = vmatpush2.msra.mxu0 0.0
    %2662 = vmatprep.subr.mxu0 0.0
    %2663 = vmatpush2.msra.mxu0 0.0
    %2664 = vmatprep.subr.mxu0 0.0
    %2665 = vmatpush2.msra.mxu0 0.0
    %2666 = vmatprep.mubr.f32.mxu0 0.0
    %v2667 = vand.u32 %v2586, 4294901760
    %v2668 = vsub.f32 %v2586, %v2667
    %v2669 = vand.u32 %v2668, 4294901760
    %v2670 = vsub.f32 %v2668, %v2669
    %v2671 = vand.u32 %v2670, 4294901760
    %2672 = vmatmul.mubr.f32.gmra.mxu0 %v2671
    %v2673 = vpop.f32.mrf.mxu0
    %v2674 = vadd.f32 %v2564, %v2673
    %v2675 = vpop.f32.mrf.mxu0
    %v2676 = vadd.f32 %v2564, %v2675
    %2677 = vmatprep.mubr.f32.mxu0 0.0
    %v2678 = vand.u32 %v2588, 4294901760
    %v2679 = vsub.f32 %v2588, %v2678
    %v2680 = vand.u32 %v2679, 4294901760
    %v2681 = vsub.f32 %v2679, %v2680
    %v2682 = vand.u32 %v2681, 4294901760
    %2683 = vmatmul.mubr.f32.gmra.mxu0 %v2682
    %v2684 = vpop.f32.mrf.mxu0
    %v2685 = vadd.f32 %v2568, %v2684
    %v2686 = vpop.f32.mrf.mxu0
    %v2687 = vadd.f32 %v2568, %v2686
    %2688 = vmatprep.mubr.f32.mxu0 0.0
    %v2689 = vand.u32 %v2590, 4294901760
    %v2690 = vsub.f32 %v2590, %v2689
    %v2691 = vand.u32 %v2690, 4294901760
    %v2692 = vsub.f32 %v2690, %v2691
    %v2693 = vand.u32 %v2692, 4294901760
    %2694 = vmatmul.mubr.f32.gmra.mxu0 %v2693
    %v2695 = vpop.f32.mrf.mxu0
    %v2696 = vadd.f32 %v2572, %v2695
    %v2697 = vpop.f32.mrf.mxu0
    %v2698 = vadd.f32 %v2572, %v2697
    %2699 = vmatprep.mubr.f32.mxu0 0.0
    %v2700 = vand.u32 %v2592, 4294901760
    %v2701 = vsub.f32 %v2592, %v2700
    %v2702 = vand.u32 %v2701, 4294901760
    %v2703 = vsub.f32 %v2701, %v2702
    %v2704 = vand.u32 %v2703, 4294901760
    %2705 = vmatmul.mubr.f32.gmra.mxu0 %v2704
    %v2706 = vpop.f32.mrf.mxu0
    %v2707 = vadd.f32 %v2576, %v2706
    %v2708 = vpop.f32.mrf.mxu0
    %v2709 = vadd.f32 %v2576, %v2708
    %2710 = vdwg.mxu0
    %2711 = vmatprep.subr.mxu0 0.0
    %2712 = vmatpush1.msra.mxu0 0.0
    %2713 = vmatprep.subr.mxu0 0.0
    %2714 = vmatpush1.msra.mxu0 0.0
    %2715 = vmatprep.subr.mxu0 0.0
    %2716 = vmatpush1.msra.mxu0 0.0
    %2717 = vmatprep.subr.mxu0 0.0
    %2718 = vmatpush1.msra.mxu0 0.0
    %2719 = vmatprep.subr.mxu0 0.0
    %2720 = vmatpush1.msra.mxu0 0.0
    %2721 = vmatprep.subr.mxu0 0.0
    %2722 = vmatpush1.msra.mxu0 0.0
    %2723 = vmatprep.subr.mxu0 0.0
    %2724 = vmatpush1.msra.mxu0 0.0
    %2725 = vmatprep.subr.mxu0 0.0
    %2726 = vmatpush1.msra.mxu0 0.0
    %2727 = vmatprep.subr.mxu0 0.0
    %2728 = vmatpush1.msra.mxu0 0.0
    %2729 = vmatprep.subr.mxu0 0.0
    %2730 = vmatpush1.msra.mxu0 0.0
    %2731 = vmatprep.subr.mxu0 0.0
    %2732 = vmatpush1.msra.mxu0 0.0
    %2733 = vmatprep.subr.mxu0 0.0
    %2734 = vmatpush1.msra.mxu0 0.0
    %v2735 = vand.u32 %v2561, 4294901760
    %v2736 = vsub.f32 %v2561, %v2735
    %v2737 = vand.u32 %v2736, 4294901760
    %v2738 = vsub.f32 %v2736, %v2737
    %v2739 = vand.u32 %v2738, 4294901760
    %2740 = vmatprep.subr.mxu0 %v2739
    %v2741 = vand.u32 %v2560, 4294901760
    %v2742 = vsub.f32 %v2560, %v2741
    %v2743 = vand.u32 %v2742, 4294901760
    %v2744 = vsub.f32 %v2742, %v2743
    %v2745 = vand.u32 %v2744, 4294901760
    %2746 = vmatpush1.msra.mxu0 %v2745
    %v2747 = vand.u32 %v2559, 4294901760
    %v2748 = vsub.f32 %v2559, %v2747
    %v2749 = vand.u32 %v2748, 4294901760
    %v2750 = vsub.f32 %v2748, %v2749
    %v2751 = vand.u32 %v2750, 4294901760
    %2752 = vmatprep.subr.mxu0 %v2751
    %v2753 = vand.u32 %v2558, 4294901760
    %v2754 = vsub.f32 %v2558, %v2753
    %v2755 = vand.u32 %v2754, 4294901760
    %v2756 = vsub.f32 %v2754, %v2755
    %v2757 = vand.u32 %v2756, 4294901760
    %2758 = vmatpush1.msra.mxu0 %v2757
    %v2759 = vand.u32 %v2557, 4294901760
    %v2760 = vsub.f32 %v2557, %v2759
    %v2761 = vand.u32 %v2760, 4294901760
    %v2762 = vsub.f32 %v2760, %v2761
    %v2763 = vand.u32 %v2762, 4294901760
    %2764 = vmatprep.subr.mxu0 %v2763
    %v2765 = vand.u32 %v2556, 4294901760
    %v2766 = vsub.f32 %v2556, %v2765
    %v2767 = vand.u32 %v2766, 4294901760
    %v2768 = vsub.f32 %v2766, %v2767
    %v2769 = vand.u32 %v2768, 4294901760
    %2770 = vmatpush1.msra.mxu0 %v2769
    %v2771 = vand.u32 %v2555, 4294901760
    %v2772 = vsub.f32 %v2555, %v2771
    %v2773 = vand.u32 %v2772, 4294901760
    %v2774 = vsub.f32 %v2772, %v2773
    %v2775 = vand.u32 %v2774, 4294901760
    %2776 = vmatprep.subr.mxu0 %v2775
    %v2777 = vand.u32 %v2554, 4294901760
    %v2778 = vsub.f32 %v2554, %v2777
    %v2779 = vand.u32 %v2778, 4294901760
    %v2780 = vsub.f32 %v2778, %v2779
    %v2781 = vand.u32 %v2780, 4294901760
    %2782 = vmatpush1.msra.mxu0 %v2781
    %2783 = vmatprep.subr.mxu0 0.0
    %2784 = vmatpush2.msra.mxu0 0.0
    %2785 = vmatprep.subr.mxu0 0.0
    %2786 = vmatpush2.msra.mxu0 0.0
    %2787 = vmatprep.subr.mxu0 0.0
    %2788 = vmatpush2.msra.mxu0 0.0
    %2789 = vmatprep.subr.mxu0 0.0
    %2790 = vmatpush2.msra.mxu0 0.0
    %2791 = vmatprep.subr.mxu0 0.0
    %2792 = vmatpush2.msra.mxu0 0.0
    %2793 = vmatprep.subr.mxu0 0.0
    %2794 = vmatpush2.msra.mxu0 0.0
    %2795 = vmatprep.subr.mxu0 0.0
    %2796 = vmatpush2.msra.mxu0 0.0
    %2797 = vmatprep.subr.mxu0 0.0
    %2798 = vmatpush2.msra.mxu0 0.0
    %2799 = vmatprep.subr.mxu0 0.0
    %2800 = vmatpush2.msra.mxu0 0.0
    %2801 = vmatprep.subr.mxu0 0.0
    %2802 = vmatpush2.msra.mxu0 0.0
    %2803 = vmatprep.subr.mxu0 0.0
    %2804 = vmatpush2.msra.mxu0 0.0
    %2805 = vmatprep.subr.mxu0 0.0
    %2806 = vmatpush2.msra.mxu0 0.0
    %2807 = vmatprep.subr.mxu0 0.0
    %2808 = vmatpush2.msra.mxu0 0.0
    %2809 = vmatprep.subr.mxu0 0.0
    %2810 = vmatpush2.msra.mxu0 0.0
    %2811 = vmatprep.subr.mxu0 0.0
    %2812 = vmatpush2.msra.mxu0 0.0
    %2813 = vmatprep.subr.mxu0 0.0
    %2814 = vmatpush2.msra.mxu0 0.0
    %2815 = vmatprep.mubr.f32.mxu0 0.0
    %v2816 = vand.u32 %v2586, 4294901760
    %2817 = vmatmul.mubr.f32.gmra.mxu0 %v2816
    %v2818 = vpop.f32.mrf.mxu0
    %v2819 = vadd.f32 %v2674, %v2818
    %v2820 = vpop.f32.mrf.mxu0
    %v2821 = vadd.f32 %v2676, %v2820
    %2822 = vmatprep.mubr.f32.mxu0 0.0
    %v2823 = vand.u32 %v2588, 4294901760
    %2824 = vmatmul.mubr.f32.gmra.mxu0 %v2823
    %v2825 = vpop.f32.mrf.mxu0
    %v2826 = vadd.f32 %v2685, %v2825
    %v2827 = vpop.f32.mrf.mxu0
    %v2828 = vadd.f32 %v2687, %v2827
    %2829 = vmatprep.mubr.f32.mxu0 0.0
    %v2830 = vand.u32 %v2590, 4294901760
    %2831 = vmatmul.mubr.f32.gmra.mxu0 %v2830
    %v2832 = vpop.f32.mrf.mxu0
    %v2833 = vadd.f32 %v2696, %v2832
    %v2834 = vpop.f32.mrf.mxu0
    %v2835 = vadd.f32 %v2698, %v2834
    %2836 = vmatprep.mubr.f32.mxu0 0.0
    %v2837 = vand.u32 %v2592, 4294901760
    %2838 = vmatmul.mubr.f32.gmra.mxu0 %v2837
    %v2839 = vpop.f32.mrf.mxu0
    %v2840 = vadd.f32 %v2707, %v2839
    %v2841 = vpop.f32.mrf.mxu0
    %v2842 = vadd.f32 %v2709, %v2841
    %2843 = vdwg.mxu0
    %2844 = vmatprep.subr.mxu0 0.0
    %2845 = vmatpush1.msra.mxu0 0.0
    %2846 = vmatprep.subr.mxu0 0.0
    %2847 = vmatpush1.msra.mxu0 0.0
    %2848 = vmatprep.subr.mxu0 0.0
    %2849 = vmatpush1.msra.mxu0 0.0
    %2850 = vmatprep.subr.mxu0 0.0
    %2851 = vmatpush1.msra.mxu0 0.0
    %2852 = vmatprep.subr.mxu0 0.0
    %2853 = vmatpush1.msra.mxu0 0.0
    %2854 = vmatprep.subr.mxu0 0.0
    %2855 = vmatpush1.msra.mxu0 0.0
    %2856 = vmatprep.subr.mxu0 0.0
    %2857 = vmatpush1.msra.mxu0 0.0
    %2858 = vmatprep.subr.mxu0 0.0
    %2859 = vmatpush1.msra.mxu0 0.0
    %2860 = vmatprep.subr.mxu0 0.0
    %2861 = vmatpush1.msra.mxu0 0.0
    %2862 = vmatprep.subr.mxu0 0.0
    %2863 = vmatpush1.msra.mxu0 0.0
    %2864 = vmatprep.subr.mxu0 0.0
    %2865 = vmatpush1.msra.mxu0 0.0
    %2866 = vmatprep.subr.mxu0 0.0
    %2867 = vmatpush1.msra.mxu0 0.0
    %v2868 = vand.u32 %v2561, 4294901760
    %v2869 = vsub.f32 %v2561, %v2868
    %2870 = vmatprep.subr.mxu0 %v2869
    %v2871 = vand.u32 %v2560, 4294901760
    %v2872 = vsub.f32 %v2560, %v2871
    %2873 = vmatpush1.msra.mxu0 %v2872
    %v2874 = vand.u32 %v2559, 4294901760
    %v2875 = vsub.f32 %v2559, %v2874
    %2876 = vmatprep.subr.mxu0 %v2875
    %v2877 = vand.u32 %v2558, 4294901760
    %v2878 = vsub.f32 %v2558, %v2877
    %2879 = vmatpush1.msra.mxu0 %v2878
    %v2880 = vand.u32 %v2557, 4294901760
    %v2881 = vsub.f32 %v2557, %v2880
    %2882 = vmatprep.subr.mxu0 %v2881
    %v2883 = vand.u32 %v2556, 4294901760
    %v2884 = vsub.f32 %v2556, %v2883
    %2885 = vmatpush1.msra.mxu0 %v2884
    %v2886 = vand.u32 %v2555, 4294901760
    %v2887 = vsub.f32 %v2555, %v2886
    %2888 = vmatprep.subr.mxu0 %v2887
    %v2889 = vand.u32 %v2554, 4294901760
    %v2890 = vsub.f32 %v2554, %v2889
    %2891 = vmatpush1.msra.mxu0 %v2890
    %2892 = vmatprep.subr.mxu0 0.0
    %2893 = vmatpush2.msra.mxu0 0.0
    %2894 = vmatprep.subr.mxu0 0.0
    %2895 = vmatpush2.msra.mxu0 0.0
    %2896 = vmatprep.subr.mxu0 0.0
    %2897 = vmatpush2.msra.mxu0 0.0
    %2898 = vmatprep.subr.mxu0 0.0
    %2899 = vmatpush2.msra.mxu0 0.0
    %2900 = vmatprep.subr.mxu0 0.0
    %2901 = vmatpush2.msra.mxu0 0.0
    %2902 = vmatprep.subr.mxu0 0.0
    %2903 = vmatpush2.msra.mxu0 0.0
    %2904 = vmatprep.subr.mxu0 0.0
    %2905 = vmatpush2.msra.mxu0 0.0
    %2906 = vmatprep.subr.mxu0 0.0
    %2907 = vmatpush2.msra.mxu0 0.0
    %2908 = vmatprep.subr.mxu0 0.0
    %2909 = vmatpush2.msra.mxu0 0.0
    %2910 = vmatprep.subr.mxu0 0.0
    %2911 = vmatpush2.msra.mxu0 0.0
    %2912 = vmatprep.subr.mxu0 0.0
    %2913 = vmatpush2.msra.mxu0 0.0
    %2914 = vmatprep.subr.mxu0 0.0
    %2915 = vmatpush2.msra.mxu0 0.0
    %2916 = vmatprep.subr.mxu0 0.0
    %2917 = vmatpush2.msra.mxu0 0.0
    %2918 = vmatprep.subr.mxu0 0.0
    %2919 = vmatpush2.msra.mxu0 0.0
    %2920 = vmatprep.subr.mxu0 0.0
    %2921 = vmatpush2.msra.mxu0 0.0
    %2922 = vmatprep.subr.mxu0 0.0
    %2923 = vmatpush2.msra.mxu0 0.0
    %2924 = vmatprep.mubr.f32.mxu0 0.0
    %v2925 = vand.u32 %v2586, 4294901760
    %v2926 = vsub.f32 %v2586, %v2925
    %2927 = vmatmul.mubr.f32.gmra.mxu0 %v2926
    %v2928 = vpop.f32.mrf.mxu0
    %v2929 = vadd.f32 %v2819, %v2928
    %v2930 = vpop.f32.mrf.mxu0
    %v2931 = vadd.f32 %v2821, %v2930
    %2932 = vmatprep.mubr.f32.mxu0 0.0
    %v2933 = vand.u32 %v2588, 4294901760
    %v2934 = vsub.f32 %v2588, %v2933
    %2935 = vmatmul.mubr.f32.gmra.mxu0 %v2934
    %v2936 = vpop.f32.mrf.mxu0
    %v2937 = vadd.f32 %v2826, %v2936
    %v2938 = vpop.f32.mrf.mxu0
    %v2939 = vadd.f32 %v2828, %v2938
    %2940 = vmatprep.mubr.f32.mxu0 0.0
    %v2941 = vand.u32 %v2590, 4294901760
    %v2942 = vsub.f32 %v2590, %v2941
    %2943 = vmatmul.mubr.f32.gmra.mxu0 %v2942
    %v2944 = vpop.f32.mrf.mxu0
    %v2945 = vadd.f32 %v2833, %v2944
    %v2946 = vpop.f32.mrf.mxu0
    %v2947 = vadd.f32 %v2835, %v2946
    %2948 = vmatprep.mubr.f32.mxu0 0.0
    %v2949 = vand.u32 %v2592, 4294901760
    %v2950 = vsub.f32 %v2592, %v2949
    %2951 = vmatmul.mubr.f32.gmra.mxu0 %v2950
    %v2952 = vpop.f32.mrf.mxu0
    %v2953 = vadd.f32 %v2840, %v2952
    %v2954 = vpop.f32.mrf.mxu0
    %v2955 = vadd.f32 %v2842, %v2954
    %2956 = vdwg.mxu0
    %2957 = vmatprep.subr.mxu0 0.0
    %2958 = vmatpush1.msra.mxu0 0.0
    %2959 = vmatprep.subr.mxu0 0.0
    %2960 = vmatpush1.msra.mxu0 0.0
    %2961 = vmatprep.subr.mxu0 0.0
    %2962 = vmatpush1.msra.mxu0 0.0
    %2963 = vmatprep.subr.mxu0 0.0
    %2964 = vmatpush1.msra.mxu0 0.0
    %2965 = vmatprep.subr.mxu0 0.0
    %2966 = vmatpush1.msra.mxu0 0.0
    %2967 = vmatprep.subr.mxu0 0.0
    %2968 = vmatpush1.msra.mxu0 0.0
    %2969 = vmatprep.subr.mxu0 0.0
    %2970 = vmatpush1.msra.mxu0 0.0
    %2971 = vmatprep.subr.mxu0 0.0
    %2972 = vmatpush1.msra.mxu0 0.0
    %2973 = vmatprep.subr.mxu0 0.0
    %2974 = vmatpush1.msra.mxu0 0.0
    %2975 = vmatprep.subr.mxu0 0.0
    %2976 = vmatpush1.msra.mxu0 0.0
    %2977 = vmatprep.subr.mxu0 0.0
    %2978 = vmatpush1.msra.mxu0 0.0
    %2979 = vmatprep.subr.mxu0 0.0
    %2980 = vmatpush1.msra.mxu0 0.0
    %v2981 = vand.u32 %v2561, 4294901760
    %2982 = vmatprep.subr.mxu0 %v2981
    %v2983 = vand.u32 %v2560, 4294901760
    %2984 = vmatpush1.msra.mxu0 %v2983
    %v2985 = vand.u32 %v2559, 4294901760
    %2986 = vmatprep.subr.mxu0 %v2985
    %v2987 = vand.u32 %v2558, 4294901760
    %2988 = vmatpush1.msra.mxu0 %v2987
    %v2989 = vand.u32 %v2557, 4294901760
    %2990 = vmatprep.subr.mxu0 %v2989
    %v2991 = vand.u32 %v2556, 4294901760
    %2992 = vmatpush1.msra.mxu0 %v2991
    %v2993 = vand.u32 %v2555, 4294901760
    %2994 = vmatprep.subr.mxu0 %v2993
    %v2995 = vand.u32 %v2554, 4294901760
    %2996 = vmatpush1.msra.mxu0 %v2995
    %2997 = vmatprep.subr.mxu0 0.0
    %2998 = vmatpush2.msra.mxu0 0.0
    %2999 = vmatprep.subr.mxu0 0.0
    %3000 = vmatpush2.msra.mxu0 0.0
    %3001 = vmatprep.subr.mxu0 0.0
    %3002 = vmatpush2.msra.mxu0 0.0
    %3003 = vmatprep.subr.mxu0 0.0
    %3004 = vmatpush2.msra.mxu0 0.0
    %3005 = vmatprep.subr.mxu0 0.0
    %3006 = vmatpush2.msra.mxu0 0.0
    %3007 = vmatprep.subr.mxu0 0.0
    %3008 = vmatpush2.msra.mxu0 0.0
    %3009 = vmatprep.subr.mxu0 0.0
    %3010 = vmatpush2.msra.mxu0 0.0
    %3011 = vmatprep.subr.mxu0 0.0
    %3012 = vmatpush2.msra.mxu0 0.0
    %3013 = vmatprep.subr.mxu0 0.0
    %3014 = vmatpush2.msra.mxu0 0.0
    %3015 = vmatprep.subr.mxu0 0.0
    %3016 = vmatpush2.msra.mxu0 0.0
    %3017 = vmatprep.subr.mxu0 0.0
    %3018 = vmatpush2.msra.mxu0 0.0
    %3019 = vmatprep.subr.mxu0 0.0
    %3020 = vmatpush2.msra.mxu0 0.0
    %3021 = vmatprep.subr.mxu0 0.0
    %3022 = vmatpush2.msra.mxu0 0.0
    %3023 = vmatprep.subr.mxu0 0.0
    %3024 = vmatpush2.msra.mxu0 0.0
    %3025 = vmatprep.subr.mxu0 0.0
    %3026 = vmatpush2.msra.mxu0 0.0
    %3027 = vmatprep.subr.mxu0 0.0
    %3028 = vmatpush2.msra.mxu0 0.0
    %3029 = vmatprep.mubr.f32.mxu0 0.0
    %v3030 = vand.u32 %v2586, 4294901760
    %v3031 = vsub.f32 %v2586, %v3030
    %v3032 = vand.u32 %v3031, 4294901760
    %3033 = vmatmul.mubr.f32.gmra.mxu0 %v3032
    %v3034 = vpop.f32.mrf.mxu0
    %v3035 = vadd.f32 %v2929, %v3034
    %v3036 = vpop.f32.mrf.mxu0
    %v3037 = vadd.f32 %v2931, %v3036
    %3038 = vmatprep.mubr.f32.mxu0 0.0
    %v3039 = vand.u32 %v2588, 4294901760
    %v3040 = vsub.f32 %v2588, %v3039
    %v3041 = vand.u32 %v3040, 4294901760
    %3042 = vmatmul.mubr.f32.gmra.mxu0 %v3041
    %v3043 = vpop.f32.mrf.mxu0
    %v3044 = vadd.f32 %v2937, %v3043
    %v3045 = vpop.f32.mrf.mxu0
    %v3046 = vadd.f32 %v2939, %v3045
    %3047 = vmatprep.mubr.f32.mxu0 0.0
    %v3048 = vand.u32 %v2590, 4294901760
    %v3049 = vsub.f32 %v2590, %v3048
    %v3050 = vand.u32 %v3049, 4294901760
    %3051 = vmatmul.mubr.f32.gmra.mxu0 %v3050
    %v3052 = vpop.f32.mrf.mxu0
    %v3053 = vadd.f32 %v2945, %v3052
    %v3054 = vpop.f32.mrf.mxu0
    %v3055 = vadd.f32 %v2947, %v3054
    %3056 = vmatprep.mubr.f32.mxu0 0.0
    %v3057 = vand.u32 %v2592, 4294901760
    %v3058 = vsub.f32 %v2592, %v3057
    %v3059 = vand.u32 %v3058, 4294901760
    %3060 = vmatmul.mubr.f32.gmra.mxu0 %v3059
    %v3061 = vpop.f32.mrf.mxu0
    %v3062 = vadd.f32 %v2953, %v3061
    %v3063 = vpop.f32.mrf.mxu0
    %v3064 = vadd.f32 %v2955, %v3063
    %3065 = vdwg.mxu0
    %3066 = vmatprep.subr.mxu0 0.0
    %3067 = vmatpush1.msra.mxu0 0.0
    %3068 = vmatprep.subr.mxu0 0.0
    %3069 = vmatpush1.msra.mxu0 0.0
    %3070 = vmatprep.subr.mxu0 0.0
    %3071 = vmatpush1.msra.mxu0 0.0
    %3072 = vmatprep.subr.mxu0 0.0
    %3073 = vmatpush1.msra.mxu0 0.0
    %3074 = vmatprep.subr.mxu0 0.0
    %3075 = vmatpush1.msra.mxu0 0.0
    %3076 = vmatprep.subr.mxu0 0.0
    %3077 = vmatpush1.msra.mxu0 0.0
    %3078 = vmatprep.subr.mxu0 0.0
    %3079 = vmatpush1.msra.mxu0 0.0
    %3080 = vmatprep.subr.mxu0 0.0
    %3081 = vmatpush1.msra.mxu0 0.0
    %3082 = vmatprep.subr.mxu0 0.0
    %3083 = vmatpush1.msra.mxu0 0.0
    %3084 = vmatprep.subr.mxu0 0.0
    %3085 = vmatpush1.msra.mxu0 0.0
    %3086 = vmatprep.subr.mxu0 0.0
    %3087 = vmatpush1.msra.mxu0 0.0
    %3088 = vmatprep.subr.mxu0 0.0
    %3089 = vmatpush1.msra.mxu0 0.0
    %v3090 = vand.u32 %v2561, 4294901760
    %v3091 = vsub.f32 %v2561, %v3090
    %v3092 = vand.u32 %v3091, 4294901760
    %3093 = vmatprep.subr.mxu0 %v3092
    %v3094 = vand.u32 %v2560, 4294901760
    %v3095 = vsub.f32 %v2560, %v3094
    %v3096 = vand.u32 %v3095, 4294901760
    %3097 = vmatpush1.msra.mxu0 %v3096
    %v3098 = vand.u32 %v2559, 4294901760
    %v3099 = vsub.f32 %v2559, %v3098
    %v3100 = vand.u32 %v3099, 4294901760
    %3101 = vmatprep.subr.mxu0 %v3100
    %v3102 = vand.u32 %v2558, 4294901760
    %v3103 = vsub.f32 %v2558, %v3102
    %v3104 = vand.u32 %v3103, 4294901760
    %3105 = vmatpush1.msra.mxu0 %v3104
    %v3106 = vand.u32 %v2557, 4294901760
    %v3107 = vsub.f32 %v2557, %v3106
    %v3108 = vand.u32 %v3107, 4294901760
    %3109 = vmatprep.subr.mxu0 %v3108
    %v3110 = vand.u32 %v2556, 4294901760
    %v3111 = vsub.f32 %v2556, %v3110
    %v3112 = vand.u32 %v3111, 4294901760
    %3113 = vmatpush1.msra.mxu0 %v3112
    %v3114 = vand.u32 %v2555, 4294901760
    %v3115 = vsub.f32 %v2555, %v3114
    %v3116 = vand.u32 %v3115, 4294901760
    %3117 = vmatprep.subr.mxu0 %v3116
    %v3118 = vand.u32 %v2554, 4294901760
    %v3119 = vsub.f32 %v2554, %v3118
    %v3120 = vand.u32 %v3119, 4294901760
    %3121 = vmatpush1.msra.mxu0 %v3120
    %3122 = vmatprep.subr.mxu0 0.0
    %3123 = vmatpush2.msra.mxu0 0.0
    %3124 = vmatprep.subr.mxu0 0.0
    %3125 = vmatpush2.msra.mxu0 0.0
    %3126 = vmatprep.subr.mxu0 0.0
    %3127 = vmatpush2.msra.mxu0 0.0
    %3128 = vmatprep.subr.mxu0 0.0
    %3129 = vmatpush2.msra.mxu0 0.0
    %3130 = vmatprep.subr.mxu0 0.0
    %3131 = vmatpush2.msra.mxu0 0.0
    %3132 = vmatprep.subr.mxu0 0.0
    %3133 = vmatpush2.msra.mxu0 0.0
    %3134 = vmatprep.subr.mxu0 0.0
    %3135 = vmatpush2.msra.mxu0 0.0
    %3136 = vmatprep.subr.mxu0 0.0
    %3137 = vmatpush2.msra.mxu0 0.0
    %3138 = vmatprep.subr.mxu0 0.0
    %3139 = vmatpush2.msra.mxu0 0.0
    %3140 = vmatprep.subr.mxu0 0.0
    %3141 = vmatpush2.msra.mxu0 0.0
    %3142 = vmatprep.subr.mxu0 0.0
    %3143 = vmatpush2.msra.mxu0 0.0
    %3144 = vmatprep.subr.mxu0 0.0
    %3145 = vmatpush2.msra.mxu0 0.0
    %3146 = vmatprep.subr.mxu0 0.0
    %3147 = vmatpush2.msra.mxu0 0.0
    %3148 = vmatprep.subr.mxu0 0.0
    %3149 = vmatpush2.msra.mxu0 0.0
    %3150 = vmatprep.subr.mxu0 0.0
    %3151 = vmatpush2.msra.mxu0 0.0
    %3152 = vmatprep.subr.mxu0 0.0
    %3153 = vmatpush2.msra.mxu0 0.0
    %3154 = vmatprep.mubr.f32.mxu0 0.0
    %v3155 = vand.u32 %v2586, 4294901760
    %3156 = vmatmul.mubr.f32.gmra.mxu0 %v3155
    %v3157 = vpop.f32.mrf.mxu0
    %v3158 = vadd.f32 %v3035, %v3157
    %v3159 = vpop.f32.mrf.mxu0
    %v3160 = vadd.f32 %v3037, %v3159
    %3161 = vmatprep.mubr.f32.mxu0 0.0
    %v3162 = vand.u32 %v2588, 4294901760
    %3163 = vmatmul.mubr.f32.gmra.mxu0 %v3162
    %v3164 = vpop.f32.mrf.mxu0
    %v3165 = vadd.f32 %v3044, %v3164
    %v3166 = vpop.f32.mrf.mxu0
    %v3167 = vadd.f32 %v3046, %v3166
    %3168 = vmatprep.mubr.f32.mxu0 0.0
    %v3169 = vand.u32 %v2590, 4294901760
    %3170 = vmatmul.mubr.f32.gmra.mxu0 %v3169
    %v3171 = vpop.f32.mrf.mxu0
    %v3172 = vadd.f32 %v3053, %v3171
    %v3173 = vpop.f32.mrf.mxu0
    %v3174 = vadd.f32 %v3055, %v3173
    %3175 = vmatprep.mubr.f32.mxu0 0.0
    %v3176 = vand.u32 %v2592, 4294901760
    %3177 = vmatmul.mubr.f32.gmra.mxu0 %v3176
    %v3178 = vpop.f32.mrf.mxu0
    %v3179 = vadd.f32 %v3062, %v3178
    %v3180 = vpop.f32.mrf.mxu0
    %v3181 = vadd.f32 %v3064, %v3180
    %3182 = vdwg.mxu0
    %3183 = vmatprep.subr.mxu0 0.0
    %3184 = vmatpush1.msra.mxu0 0.0
    %3185 = vmatprep.subr.mxu0 0.0
    %3186 = vmatpush1.msra.mxu0 0.0
    %3187 = vmatprep.subr.mxu0 0.0
    %3188 = vmatpush1.msra.mxu0 0.0
    %3189 = vmatprep.subr.mxu0 0.0
    %3190 = vmatpush1.msra.mxu0 0.0
    %3191 = vmatprep.subr.mxu0 0.0
    %3192 = vmatpush1.msra.mxu0 0.0
    %3193 = vmatprep.subr.mxu0 0.0
    %3194 = vmatpush1.msra.mxu0 0.0
    %3195 = vmatprep.subr.mxu0 0.0
    %3196 = vmatpush1.msra.mxu0 0.0
    %3197 = vmatprep.subr.mxu0 0.0
    %3198 = vmatpush1.msra.mxu0 0.0
    %3199 = vmatprep.subr.mxu0 0.0
    %3200 = vmatpush1.msra.mxu0 0.0
    %3201 = vmatprep.subr.mxu0 0.0
    %3202 = vmatpush1.msra.mxu0 0.0
    %3203 = vmatprep.subr.mxu0 0.0
    %3204 = vmatpush1.msra.mxu0 0.0
    %3205 = vmatprep.subr.mxu0 0.0
    %3206 = vmatpush1.msra.mxu0 0.0
    %v3207 = vand.u32 %v2561, 4294901760
    %3208 = vmatprep.subr.mxu0 %v3207
    %v3209 = vand.u32 %v2560, 4294901760
    %3210 = vmatpush1.msra.mxu0 %v3209
    %v3211 = vand.u32 %v2559, 4294901760
    %3212 = vmatprep.subr.mxu0 %v3211
    %v3213 = vand.u32 %v2558, 4294901760
    %3214 = vmatpush1.msra.mxu0 %v3213
    %v3215 = vand.u32 %v2557, 4294901760
    %3216 = vmatprep.subr.mxu0 %v3215
    %v3217 = vand.u32 %v2556, 4294901760
    %3218 = vmatpush1.msra.mxu0 %v3217
    %v3219 = vand.u32 %v2555, 4294901760
    %3220 = vmatprep.subr.mxu0 %v3219
    %v3221 = vand.u32 %v2554, 4294901760
    %3222 = vmatpush1.msra.mxu0 %v3221
    %3223 = vmatprep.subr.mxu0 0.0
    %3224 = vmatpush2.msra.mxu0 0.0
    %3225 = vmatprep.subr.mxu0 0.0
    %3226 = vmatpush2.msra.mxu0 0.0
    %3227 = vmatprep.subr.mxu0 0.0
    %3228 = vmatpush2.msra.mxu0 0.0
    %3229 = vmatprep.subr.mxu0 0.0
    %3230 = vmatpush2.msra.mxu0 0.0
    %3231 = vmatprep.subr.mxu0 0.0
    %3232 = vmatpush2.msra.mxu0 0.0
    %3233 = vmatprep.subr.mxu0 0.0
    %3234 = vmatpush2.msra.mxu0 0.0
    %3235 = vmatprep.subr.mxu0 0.0
    %3236 = vmatpush2.msra.mxu0 0.0
    %3237 = vmatprep.subr.mxu0 0.0
    %3238 = vmatpush2.msra.mxu0 0.0
    %3239 = vmatprep.subr.mxu0 0.0
    %3240 = vmatpush2.msra.mxu0 0.0
    %3241 = vmatprep.subr.mxu0 0.0
    %3242 = vmatpush2.msra.mxu0 0.0
    %3243 = vmatprep.subr.mxu0 0.0
    %3244 = vmatpush2.msra.mxu0 0.0
    %3245 = vmatprep.subr.mxu0 0.0
    %3246 = vmatpush2.msra.mxu0 0.0
    %3247 = vmatprep.subr.mxu0 0.0
    %3248 = vmatpush2.msra.mxu0 0.0
    %3249 = vmatprep.subr.mxu0 0.0
    %3250 = vmatpush2.msra.mxu0 0.0
    %3251 = vmatprep.subr.mxu0 0.0
    %3252 = vmatpush2.msra.mxu0 0.0
    %3253 = vmatprep.subr.mxu0 0.0
    %3254 = vmatpush2.msra.mxu0 0.0
    %3255 = vmatprep.mubr.f32.mxu0 0.0
    %v3256 = vand.u32 %v2586, 4294901760
    %3257 = vmatmul.mubr.f32.gmra.mxu0 %v3256
    %v3258 = vpop.f32.mrf.mxu0
    %v3259 = vadd.f32 %v3158, %v3258
    %v3260 = vpop.f32.mrf.mxu0
    %v3261 = vadd.f32 %v3160, %v3260
    %3262 = vmatprep.mubr.f32.mxu0 0.0
    %v3263 = vand.u32 %v2588, 4294901760
    %3264 = vmatmul.mubr.f32.gmra.mxu0 %v3263
    %v3265 = vpop.f32.mrf.mxu0
    %v3266 = vadd.f32 %v3165, %v3265
    %v3267 = vpop.f32.mrf.mxu0
    %v3268 = vadd.f32 %v3167, %v3267
    %3269 = vmatprep.mubr.f32.mxu0 0.0
    %v3270 = vand.u32 %v2590, 4294901760
    %3271 = vmatmul.mubr.f32.gmra.mxu0 %v3270
    %v3272 = vpop.f32.mrf.mxu0
    %v3273 = vadd.f32 %v3172, %v3272
    %v3274 = vpop.f32.mrf.mxu0
    %v3275 = vadd.f32 %v3174, %v3274
    %3276 = vmatprep.mubr.f32.mxu0 0.0
    %v3277 = vand.u32 %v2592, 4294901760
    %3278 = vmatmul.mubr.f32.gmra.mxu0 %v3277
    %v3279 = vpop.f32.mrf.mxu0
    %v3280 = vadd.f32 %v3179, %v3279
    %v3281 = vpop.f32.mrf.mxu0
    %v3282 = vadd.f32 %v3181, %v3281
    %3283 = vdwg.mxu0
    %v3284 = vtanh.pop %v3259
    %v3285 = vtanh.pop %v3261
    %v3286 = vtanh.pop %v3266
    %v3287 = vtanh.pop %v3268
    %v3288 = vtanh.pop %v3273
    %v3289 = vtanh.pop %v3275
    %v3290 = vtanh.pop %v3280
    %v3291 = vtanh.pop %v3282
    %v3292 = vadd.f32 %v3284, %v3285
    %3293 = vadd.xlane.f32.xlu0 %v3292
    %v3294 = vpop.xlane.xlu0 %3293
    %v3295 = vadd.f32 %v3286, %v3287
    %3296 = vadd.xlane.f32.xlu0 %v3295
    %v3297 = vpop.xlane.xlu0 %3296
    %v3298 = vadd.f32 %v3288, %v3289
    %3299 = vadd.xlane.f32.xlu0 %v3298
    %v3300 = vpop.xlane.xlu0 %3299
    %v3301 = vadd.f32 %v3290, %v3291
    %3302 = vadd.xlane.f32.xlu0 %v3301
    %v3303 = vpop.xlane.xlu0 %3302
    %v3304 = vmul.f32 %v3294, 0.00390625
    %v3305 = vmul.f32 %v3297, 0.00390625
    %v3306 = vmul.f32 %v3300, 0.00390625
    %v3307 = vmul.f32 %v3303, 0.00390625
    %v3308 = vsub.f32 %v3284, %v3304
    %v3309 = vsub.f32 %v3285, %v3304
    %v3310 = vsub.f32 %v3286, %v3305
    %v3311 = vsub.f32 %v3287, %v3305
    %v3312 = vsub.f32 %v3288, %v3306
    %v3313 = vsub.f32 %v3289, %v3306
    %v3314 = vsub.f32 %v3290, %v3307
    %v3315 = vsub.f32 %v3291, %v3307
    %v3316 = vmul.f32 %v3308, %v3308
    %v3317 = vmul.f32 %v3309, %v3309
    %v3318 = vmul.f32 %v3310, %v3310
    %v3319 = vmul.f32 %v3311, %v3311
    %v3320 = vmul.f32 %v3312, %v3312
    %v3321 = vmul.f32 %v3313, %v3313
    %v3322 = vmul.f32 %v3314, %v3314
    %v3323 = vmul.f32 %v3315, %v3315
    %v3324 = vadd.f32 %v3316, %v3317
    %3325 = vadd.xlane.f32.xlu0 %v3324
    %v3326 = vpop.xlane.xlu0 %3325
    %v3327 = vadd.f32 %v3318, %v3319
    %3328 = vadd.xlane.f32.xlu0 %v3327
    %v3329 = vpop.xlane.xlu0 %3328
    %v3330 = vadd.f32 %v3320, %v3321
    %3331 = vadd.xlane.f32.xlu0 %v3330
    %v3332 = vpop.xlane.xlu0 %3331
    %v3333 = vadd.f32 %v3322, %v3323
    %3334 = vadd.xlane.f32.xlu0 %v3333
    %v3335 = vpop.xlane.xlu0 %3334
    %v3336 = vmul.f32 %v3326, 0.00390625
    %v3337 = vmul.f32 %v3329, 0.00390625
    %v3338 = vmul.f32 %v3332, 0.00390625
    %v3339 = vmul.f32 %v3335, 0.00390625
    %3340 = vset.pattern.permute.xlu0 107
    %3341 = vperm.xlu0 %3340, %v90
    %v3342 = vpop.permute.xlu0 %3341
    %3344 = vset.pattern.permute.xlu0 107
    %3345 = vperm.xlu0 %3344, %v91
    %v3346 = vpop.permute.xlu0 %3345
    %3348 = vset.pattern.permute.xlu0 107
    %3349 = vperm.xlu0 %3348, %v92
    %v3350 = vpop.permute.xlu0 %3349
    %3352 = vset.pattern.permute.xlu0 107
    %3353 = vperm.xlu0 %3352, %v93
    %v3354 = vpop.permute.xlu0 %3353
    %v3356 = vmul.f32 %v3342, %v3308
    %v3357 = vmul.f32 %v3342, %v3309
    %v3358 = vmul.f32 %v3346, %v3310
    %v3359 = vmul.f32 %v3346, %v3311
    %v3360 = vmul.f32 %v3350, %v3312
    %v3361 = vmul.f32 %v3350, %v3313
    %v3362 = vmul.f32 %v3354, %v3314
    %v3363 = vmul.f32 %v3354, %v3315
    %v3364 = vadd.f32 %v3336, 1e-05
    %v3365 = vadd.f32 %v3337, 1e-05
    %v3366 = vadd.f32 %v3338, 1e-05
    %v3367 = vadd.f32 %v3339, 1e-05
    %v3368 = vrsqrt.pop %v3364
    %v3369 = vrsqrt.pop %v3365
    %v3370 = vrsqrt.pop %v3366
    %v3371 = vrsqrt.pop %v3367
    %v3372 = vmul.f32 %v3356, %v3368
    %v3373 = vmul.f32 %v3357, %v3368
    %v3374 = vmul.f32 %v3358, %v3369
    %v3375 = vmul.f32 %v3359, %v3369
    %v3376 = vmul.f32 %v3360, %v3370
    %v3377 = vmul.f32 %v3361, %v3370
    %v3378 = vmul.f32 %v3362, %v3371
    %v3379 = vmul.f32 %v3363, %v3371
    %3380 = vset.pattern.permute.xlu0 111
    %3381 = vperm.xlu0 %3380, %v90
    %v3382 = vpop.permute.xlu0 %3381
    %3384 = vset.pattern.permute.xlu0 111
    %3385 = vperm.xlu0 %3384, %v91
    %v3386 = vpop.permute.xlu0 %3385
    %3388 = vset.pattern.permute.xlu0 111
    %3389 = vperm.xlu0 %3388, %v92
    %v3390 = vpop.permute.xlu0 %3389
    %3392 = vset.pattern.permute.xlu0 111
    %3393 = vperm.xlu0 %3392, %v93
    %v3394 = vpop.permute.xlu0 %3393
    %v3396 = vadd.f32 %v3372, %v3382
    %v3397 = vadd.f32 %v3373, %v3382
    %v3398 = vadd.f32 %v3374, %v3386
    %v3399 = vadd.f32 %v3375, %v3386
    %v3400 = vadd.f32 %v3376, %v3390
    %v3401 = vadd.f32 %v3377, %v3390
    %v3402 = vadd.f32 %v3378, %v3394
    %v3403 = vadd.f32 %v3379, %v3394
    %v3404 = vadd.f32 %v3396, %v2554
    %v3405 = vadd.f32 %v3397, %v2555
    %v3406 = vadd.f32 %v3398, %v2556
    %v3407 = vadd.f32 %v3399, %v2557
    %v3408 = vadd.f32 %v3400, %v2558
    %v3409 = vadd.f32 %v3401, %v2559
    %v3410 = vadd.f32 %v3402, %v2560
    %v3411 = vadd.f32 %v3403, %v2561
    %v3412 = vld [vmem:[#allocation5] sm:$0x1]
    %3413 = vset.pattern.permute.xlu0 112
    %3414 = vperm.xlu0 %3413, %v90
    %v3415 = vpop.permute.xlu0 %3414
    %3417 = vset.pattern.permute.xlu0 112
    %3418 = vperm.xlu0 %3417, %v91
    %v3419 = vpop.permute.xlu0 %3418
    %3421 = vset.pattern.permute.xlu0 112
    %3422 = vperm.xlu0 %3421, %v92
    %v3423 = vpop.permute.xlu0 %3422
    %3425 = vset.pattern.permute.xlu0 112
    %3426 = vperm.xlu0 %3425, %v93
    %v3427 = vpop.permute.xlu0 %3426
    %v3429 = vmul.f32 %v3415, %v3404
    %v3430 = vmul.f32 %v3415, %v3405
    %v3431 = vmul.f32 %v3419, %v3406
    %v3432 = vmul.f32 %v3419, %v3407
    %v3433 = vmul.f32 %v3423, %v3408
    %v3434 = vmul.f32 %v3423, %v3409
    %v3435 = vmul.f32 %v3427, %v3410
    %v3436 = vmul.f32 %v3427, %v3411
    %v3437 = vadd.f32 %v3429, %v3431
    %v3438 = vadd.f32 %v3437, %v3433
    %v3439 = vadd.f32 %v3438, %v3435
    %v3440 = vrot.slane %v3439, 4
    %v3441 = vadd.f32 %v3439, %v3440
    %v3442 = vrot.slane %v3441, 2
    %v3443 = vadd.f32 %v3441, %v3442
    %v3444 = vrot.slane %v3443, 1
    %v3445 = vadd.f32 %v3443, %v3444
    %v3446 = vadd.f32 %v3430, %v3432
    %v3447 = vadd.f32 %v3446, %v3434
    %v3448 = vadd.f32 %v3447, %v3436
    %v3449 = vrot.slane %v3448, 4
    %v3450 = vadd.f32 %v3448, %v3449
    %v3451 = vrot.slane %v3450, 2
    %v3452 = vadd.f32 %v3450, %v3451
    %v3453 = vrot.slane %v3452, 1
    %v3454 = vadd.f32 %v3452, %v3453
    %3456 = vset.pattern.permute.xlu0 113
    %3457 = vperm.xlu0 %3456, %v3412
    %v3458 = vpop.permute.xlu0 %3457
    %v3460 = vadd.f32 %v3445, %v3458
    %v3461 = vadd.f32 %v3454, %v3458
    %v3464 = vcombine.low %v3460, %v3461
    %v3466 = vunpack.c.l.s4 1966171168
    %v3467 = vunpack.c.0.s8 %v3466
    %v3468 = vlaneseq
    %v3469 = vshrl.u32 %v3468, 7
    %v3470 = vsub.s32 %v3467, %v3469
    %v3471 = vrot.slane %v3464, %v3470
    %v3473 = vunpack.c.l.s4 1966171168
    %v3474 = vunpack.c.0.s8 %v3473
    %v3475 = vlaneseq
    %v3476 = vshrl.u32 %v3475, 7
    %v3477 = vsub.s32 %v3474, %v3476
    %v3478 = vrot.slane %v3471, %v3477
    %v3480 = vlaneseq
    %vm3481 = vcmp.ge.s32.totalorder %v3480, 0
    %vm3482 = vcmp.lt.s32.totalorder %v3480, 256
    %vm3483 = vmand %vm3481, %vm3482
    %3484 = vst.msk [vmem:[#allocation7] sm:$0x3] %vm3483, %v3478
    // Predicated region
    $region18: #{bsde_forward.1} parent=1 // pred_check
      _
    $region19: #{bsde_forward.1} parent=1 // pred_check_branch
      %3486 = sbr.rel (0) target = $region21
    $region20: #{bsde_forward.1} parent=1 // pred_region
      %s3488 = ssub.s32 32, 32
      %3489 = vsyncadd [#allocation4], %s3488
      %s3491 = sshll.u32 [#allocation7], 4
      %s3492 = int_to_ptr.vmem [resolvable:$true] %s3491
      %3494 = dma.vmem_to_hbm [thread:$0]  %s3492, 32, %s2, [#allocation4]
    $region21: #{bsde_forward.1} parent=1 // pred_fallthru
      _
    // Predicated region
    $region22: #{bsde_forward.1} parent=1 // pred_check
      _
    $region23: #{bsde_forward.1} parent=1 // pred_check_branch
      %3496 = sbr.rel (0) target = $region25
    $region24: #{bsde_forward.1} parent=1 // pred_region
      %3497 = dma.done [#allocation4], 32
    $region25: #{bsde_forward.1} parent=1 // pred_fallthru
      _
    %3498 = vsyncpa [#allocation3], 1
    %3499 = vsyncpa [#allocation6], 1
    %3500 = vsyncpa [#allocation4], 1

</llo_original>
